<compile_context>
chip_gen: v7x
topology: tpu7x:2x2x1
jax: 0.10.0
libtpu: 0.0.40
codegen_flags: <defaults>
</compile_context>

<pallas_src>
import functools
import math

import jax
import jax.numpy as jnp
from jax.experimental import pallas as pl
from jax.experimental.pallas import tpu as pltpu

F32 = jnp.float32
BF16 = jnp.bfloat16

# Safe on every generation (<= 64 MiB physical on v7x, above the scoped default on
# v5e/v6e). Per-generation tuning: v5e/v6e ~96-112 MiB, v7x <= ~56 MiB.
_VMEM_LIMIT = 48 * 1024 * 1024


# --------------------------------------------------------------------------------------
# Kernel 1: BN-folded GraphConv projection  xw = (x * s + t) @ W      (node-parallel)
# --------------------------------------------------------------------------------------
def _gcn_project_kernel(x_ref, s_ref, t_ref, w_ref, xw_ref):
    x = x_ref[...] * s_ref[...] + t_ref[...]          # folded eval-mode BatchNorm (FMA)
    xw_ref[...] = jnp.dot(x.astype(BF16), w_ref[...],
                          preferred_element_type=F32).astype(BF16)


def gcn_project(x, s, t, w_bf16, *, node_tile):
    N, D = x.shape
    Do = w_bf16.shape[1]
    return pl.pallas_call(
        _gcn_project_kernel,
        grid=(N // node_tile,),
        in_specs=[
            pl.BlockSpec((node_tile, D), lambda i: (i, 0)),
            pl.BlockSpec((1, D), lambda i: (0, 0)),
            pl.BlockSpec((1, D), lambda i: (0, 0)),
            pl.BlockSpec((D, Do), lambda i: (0, 0)),   # loop-invariant weight block
        ],
        out_specs=pl.BlockSpec((node_tile, Do), lambda i: (i, 0)),
        out_shape=jax.ShapeDtypeStruct((N, Do), BF16),
        compiler_params=pltpu.CompilerParams(
            dimension_semantics=("parallel",),
            vmem_limit_bytes=_VMEM_LIMIT,
        ),
    )(x, s, t, w_bf16)


# --------------------------------------------------------------------------------------
# Kernel 2: GraphConv aggregation + bias + ReLU + residual
#   h_out[i] = h_res[i] + relu( sum_j adj[i,j] @ xw[j] + b )
#   grid = (node row tiles [parallel], node col tiles [arbitrary contraction])
# --------------------------------------------------------------------------------------
def _gcn_aggregate_kernel(adj_ref, xw_ref, hres_ref, b_ref, out_ref, acc_ref):
    j = pl.program_id(1)

    @pl.when(j == 0)
    def _():
        acc_ref[...] = jnp.zeros_like(acc_ref)

    acc_ref[...] += jnp.dot(adj_ref[...], xw_ref[...], preferred_element_type=F32)

    @pl.when(j == pl.num_programs(1) - 1)
    def _():
        out_ref[...] = hres_ref[...] + jnp.maximum(acc_ref[...] + b_ref[...], 0.0)


def gcn_aggregate(adj_bf16, xw_bf16, h_res, bias, *, node_tile):
    N, D = h_res.shape
    nt = N // node_tile
    return pl.pallas_call(
        _gcn_aggregate_kernel,
        grid=(nt, nt),
        in_specs=[
            pl.BlockSpec((node_tile, node_tile), lambda i, j: (i, j)),  # adj block stream
            pl.BlockSpec((node_tile, D), lambda i, j: (j, 0)),
            pl.BlockSpec((node_tile, D), lambda i, j: (i, 0)),
            pl.BlockSpec((1, D), lambda i, j: (0, 0)),
        ],
        out_specs=pl.BlockSpec((node_tile, D), lambda i, j: (i, 0)),
        out_shape=jax.ShapeDtypeStruct((N, D), F32),
        scratch_shapes=[pltpu.VMEM((node_tile, D), F32)],
        compiler_params=pltpu.CompilerParams(
            dimension_semantics=("parallel", "arbitrary"),
            vmem_limit_bytes=_VMEM_LIMIT,
        ),
    )(adj_bf16, xw_bf16, h_res, bias)


# --------------------------------------------------------------------------------------
# Kernel 3: global node-axis statistics (online softmax max / sum-exp over ALL nodes
#           for every head, plus mean_nodes of the original h)
# --------------------------------------------------------------------------------------
def _att_stats_kernel(h_ref, h2_ref, u_ref, m_ref, l_ref, avg_ref, *, n_nodes):
    t = pl.program_id(0)
    head = m_ref.shape[1]

    @pl.when(t == 0)
    def _():
        m_ref[...] = jnp.full_like(m_ref, -jnp.inf)
        l_ref[...] = jnp.zeros_like(l_ref)
        avg_ref[...] = jnp.zeros_like(avg_ref)

    # Attention logits for all heads in one MXU matmul (u is lane-padded to 128).
    att = jnp.dot(h2_ref[...].astype(BF16), u_ref[...],
                  preferred_element_type=F32)[:, :head]          # [TN, head]

    m_old = m_ref[...]
    m_new = jnp.maximum(m_old, jnp.max(att, axis=0, keepdims=True))
    l_ref[...] = (l_ref[...] * jnp.exp(m_old - m_new)
                  + jnp.sum(jnp.exp(att - m_new), axis=0, keepdims=True))
    m_ref[...] = m_new

    # init_avg_h = dgl.mean_nodes(g, 'h') on the ORIGINAL node features.
    avg_ref[...] += jnp.sum(h_ref[...], axis=0, keepdims=True)

    @pl.when(t == pl.num_programs(0) - 1)
    def _():
        avg_ref[...] *= (1.0 / n_nodes)


def att_stats(h, h2, u_bf16, head, *, node_tile):
    N, D = h.shape
    head_pad = u_bf16.shape[1]
    kernel = functools.partial(_att_stats_kernel, n_nodes=float(N))
    return pl.pallas_call(
        kernel,
        grid=(N // node_tile,),
        in_specs=[
            pl.BlockSpec((node_tile, D), lambda i: (i, 0)),
            pl.BlockSpec((node_tile, D), lambda i: (i, 0)),
            pl.BlockSpec((D, head_pad), lambda i: (0, 0)),
        ],
        out_specs=(
            pl.BlockSpec((1, head), lambda i: (0, 0)),
            pl.BlockSpec((1, head), lambda i: (0, 0)),
            pl.BlockSpec((1, D), lambda i: (0, 0)),
        ),
        out_shape=(
            jax.ShapeDtypeStruct((1, head), F32),    # softmax running max   (per head)
            jax.ShapeDtypeStruct((1, head), F32),    # softmax sum-exp       (per head)
            jax.ShapeDtypeStruct((1, D), F32),       # init_avg_h
        ),
        compiler_params=pltpu.CompilerParams(
            dimension_semantics=("arbitrary",),
            vmem_limit_bytes=_VMEM_LIMIT,
        ),
    )(h, h2, u_bf16)


# --------------------------------------------------------------------------------------
# Kernel 4: transformer block + sum_nodes readout (accumulator output, node-tiled)
# --------------------------------------------------------------------------------------
def _readout_kernel(h2_ref, u_ref, m_ref, l_ref, wv_ref, wct_ref,
                    ff1w_ref, ff1b_ref, ff2w_ref, ff2b_ref,
                    lng_ref, lnb_ref, out_ref):
    t = pl.program_id(0)

    @pl.when(t == 0)
    def _():
        out_ref[...] = jnp.zeros_like(out_ref)

    h2 = h2_ref[...]                                   # residue_h tile [TN, D] f32
    h2b = h2.astype(BF16)
    D = h2.shape[1]
    head = m_ref.shape[1]

    # Attention logits (all heads, one MXU op) + globally-normalized softmax.
    att = jnp.dot(h2b, u_ref[...], preferred_element_type=F32)[:, :head]   # [TN, head]
    alpha = jnp.exp(att - m_ref[...]) * pl.reciprocal(l_ref[...], approx=True)

    # Batched V projection for all heads, per-head alpha weighting on 128-aligned
    # slices, then ONE concat_trans matmul with K = head*D.
    v_all = jnp.dot(h2b, wv_ref[...], preferred_element_type=F32)          # [TN, head*D]
    vw = jnp.concatenate(
        [v_all[:, i * D:(i + 1) * D] * alpha[:, i:i + 1] for i in range(head)],
        axis=1)
    multi = jnp.dot(vw.astype(BF16), wct_ref[...], preferred_element_type=F32)

    lng = lng_ref[...]
    lnb = lnb_ref[...]

    def layernorm(x):
        mu = jnp.mean(x, axis=1, keepdims=True)
        var = jnp.mean(jnp.square(x - mu), axis=1, keepdims=True)
        return (x - mu) * jax.lax.rsqrt(var + 1e-5) * lng + lnb

    multi = layernorm(multi + h2)
    ffh = jnp.maximum(jnp.dot(multi.astype(BF16), ff1w_ref[...],
                              preferred_element_type=F32) + ff1b_ref[...], 0.0)
    ffo = jnp.dot(ffh.astype(BF16), ff2w_ref[...],
                  preferred_element_type=F32) + ff2b_ref[...]
    multi = layernorm(ffo + multi)

    # readout = dgl.sum_nodes(g, 'output'): accumulate partial node sums per tile.
    out_ref[...] += jnp.sum(multi, axis=0, keepdims=True)


def transformer_readout(h2, u_bf16, m, l, wv_all, wct_bf, ff1_w, ff1_b,
                        ff2_w, ff2_b, ln_g, ln_b, *, node_tile):
    N, D = h2.shape

    def full(a):
        return pl.BlockSpec(a.shape, lambda i: (0, 0))

    return pl.pallas_call(
        _readout_kernel,
        grid=(N // node_tile,),
        in_specs=[
            pl.BlockSpec((node_tile, D), lambda i: (i, 0)),
            full(u_bf16), full(m), full(l), full(wv_all), full(wct_bf),
            full(ff1_w), full(ff1_b), full(ff2_w), full(ff2_b),
            full(ln_g), full(ln_b),
        ],
        out_specs=pl.BlockSpec((1, D), lambda i: (0, 0)),
        out_shape=jax.ShapeDtypeStruct((1, D), F32),
        compiler_params=pltpu.CompilerParams(
            dimension_semantics=("arbitrary",),   # reduction into the resident [1, D] block
            vmem_limit_bytes=_VMEM_LIMIT,
        ),
    )(h2, u_bf16, m, l, wv_all, wct_bf, ff1_w, ff1_b, ff2_w, ff2_b, ln_g, ln_b)


# --------------------------------------------------------------------------------------
# Full forward (JAX glue: parameter folding / packing + the pallas_call pipeline)
# --------------------------------------------------------------------------------------
def gcn2_forward(adj_norm, h, inter_f, params, *, node_tile=128):
    (bn1_g, bn1_b, bn1_m, bn1_v,
     bn2_g, bn2_b, bn2_m, bn2_v,
     c1_w, c1_b, c2_w, c2_b,
     wq, wk, wv, wct,
     ff1_w, ff1_b, ff2_w, ff2_b,
     ln_g, ln_b) = params

    N, D = h.shape
    head = wq.shape[0]
    assert N % node_tile == 0 and node_tile % 128 == 0 and D % 128 == 0

    # ---- eval-mode BatchNorm folded to scale/shift (one FMA in the kernel) ----
    s1 = bn1_g * jax.lax.rsqrt(bn1_v + 1e-5)
    t1 = bn1_b - bn1_m * s1
    s2 = bn2_g * jax.lax.rsqrt(bn2_v + 1e-5)
    t2 = bn2_b - bn2_m * s2

    # ---- graph-level attention projections hoisted out of the kernels ----
    # att_n = residue_n . u_i  with  u_i = scale * (inter_f @ Wk_i) @ Wq_i.
    # The reference hard-codes 1/sqrt(1280.0) regardless of D -- kept verbatim.
    scale = 1.0 / math.sqrt(1280.0)
    k_all = jnp.einsum("d,hdo->ho", inter_f[0], wk)            # [head, D]
    u_all = (scale * jnp.einsum("ho,hod->hd", k_all, wq)).T    # [D, head]
    head_pad = max(128, -(-head // 128) * 128)                 # lane-dense logits matmul
    u_pad = jnp.zeros((D, head_pad), F32).at[:, :head].set(u_all)
    u_bf = u_pad.astype(BF16)

    # ---- bf16 MXU operands; per-head V weights packed into one [D, head*D] matmul ----
    adj_bf = adj_norm.astype(BF16)
    c1_wb, c2_wb = c1_w.astype(BF16), c2_w.astype(BF16)
    wv_all = jnp.transpose(wv, (1, 0, 2)).reshape(D, head * D).astype(BF16)
    wct_bf = wct.astype(BF16)                                  # kept as [head*D, D]
    ff1_wb, ff2_wb = ff1_w.astype(BF16), ff2_w.astype(BF16)

    # ---- GCN layer 1:  h1 = h + relu(adj_norm @ (bn1(h) @ W1) + b1) ----
    xw1 = gcn_project(h, s1, t1, c1_wb, node_tile=node_tile)
    h1 = gcn_aggregate(adj_bf, xw1, h, c1_b, node_tile=node_tile)
    # ---- GCN layer 2 ----
    xw2 = gcn_project(h1, s2, t2, c2_wb, node_tile=node_tile)
    h2 = gcn_aggregate(adj_bf, xw2, h1, c2_b, node_tile=node_tile)
    # ---- global node-axis stats (softmax_nodes max / sum-exp, mean_nodes of h) ----
    m, l, init_avg_h = att_stats(h, h2, u_bf, head, node_tile=node_tile)
    # ---- transformer block + sum_nodes readout ----
    readout = transformer_readout(h2, u_bf, m, l, wv_all, wct_bf,
                                  ff1_wb, ff1_b, ff2_wb, ff2_b, ln_g, ln_b,
                                  node_tile=node_tile)
    return readout, init_avg_h


def make_params(key, dim, head):
    ks = jax.random.split(key, 22)
    s = 0.1

    def nrm(k, shape, scale=s):
        return scale * jax.random.normal(k, shape, dtype=jnp.float32)

    bn1_g = 1.0 + nrm(ks[0], (1, dim))
    bn1_b = nrm(ks[1], (1, dim))
    bn1_m = nrm(ks[2], (1, dim))
    bn1_v = 1.0 + jnp.abs(nrm(ks[3], (1, dim)))
    bn2_g = 1.0 + nrm(ks[4], (1, dim))
    bn2_b = nrm(ks[5], (1, dim))
    bn2_m = nrm(ks[6], (1, dim))
    bn2_v = 1.0 + jnp.abs(nrm(ks[7], (1, dim)))

    c1_w = nrm(ks[8], (dim, dim))          # [in, out]
    c1_b = nrm(ks[9], (1, dim))
    c2_w = nrm(ks[10], (dim, dim))         # [in, out]
    c2_b = nrm(ks[11], (1, dim))

    wq = nrm(ks[12], (head, dim, dim))     # PyTorch-native [out, in] per head
    wk = nrm(ks[13], (head, dim, dim))     # [in, out] per head
    wv = nrm(ks[14], (head, dim, dim))     # [in, out] per head
    wct = nrm(ks[15], (head * dim, dim))   # [head*hidden, hidden]  ([in, out])

    ff1_w = nrm(ks[16], (dim, 2 * dim))
    ff1_b = nrm(ks[17], (1, 2 * dim))
    ff2_w = nrm(ks[18], (2 * dim, dim))
    ff2_b = nrm(ks[19], (1, dim))

    ln_g = 1.0 + nrm(ks[20], (1, dim))
    ln_b = nrm(ks[21], (1, dim))

    return (
        bn1_g, bn1_b, bn1_m, bn1_v,
        bn2_g, bn2_b, bn2_m, bn2_v,
        c1_w, c1_b, c2_w, c2_b,
        wq, wk, wv, wct,
        ff1_w, ff1_b, ff2_w, ff2_b,
        ln_g, ln_b,
    )


if __name__ == "__main__":
    # Small correctness-only shapes (do NOT benchmark here): N a multiple of the 128-row
    # node tile so the tiled grids have >1 step; D = 128 (lane-dense f32 tiles).
    N, D, HEAD = 256, 128, 2
    NODE_TILE = 128

    key = jax.random.PRNGKey(0)
    k_adj, k_h, k_inter, k_params = jax.random.split(key, 4)

    # Deterministic random undirected graph with self-loops (no zero degree); GraphConv
    # norm='both' folded into a dense pre-normalized adjacency D^-1/2 A D^-1/2.
    A = (jax.random.uniform(k_adj, (N, N)) < 0.1).astype(jnp.float32)
    A = jnp.maximum(A, A.T)
    A = jnp.maximum(A, jnp.eye(N, dtype=jnp.float32))
    deg = jnp.sum(A, axis=1)
    adj_norm = A / jnp.sqrt(jnp.outer(deg, deg))

    h = jax.random.normal(k_h, (N, D), dtype=jnp.float32)
    inter_f = jax.random.normal(k_inter, (1, D), dtype=jnp.float32)   # per-graph feature
    params = make_params(k_params, D, HEAD)

    fwd = jax.jit(functools.partial(gcn2_forward, node_tile=NODE_TILE))
    readout, init_avg_h = fwd(adj_norm, h, inter_f, params)
    jax.block_until_ready((readout, init_avg_h))

    assert readout.shape == (1, D) and init_avg_h.shape == (1, D)
    assert bool(jnp.all(jnp.isfinite(readout))) and bool(jnp.all(jnp.isfinite(init_avg_h)))
    print("KERNEL_OK")
</pallas_src>

<mosaic_0001>
module attributes {stable_mosaic.version = 11 : i64} {
  func.func @_gcn_project_kernel(%arg0: i32, %arg1: memref<128x128xf32, #tpu.memory_space<vmem>>, %arg2: memref<1x128xf32, #tpu.memory_space<vmem>>, %arg3: memref<1x128xf32, #tpu.memory_space<vmem>>, %arg4: memref<128x128xbf16, #tpu.memory_space<vmem>>, %arg5: memref<128x128xbf16, #tpu.memory_space<vmem>>) attributes {dimension_semantics = [#tpu.dimension_semantics<parallel>], iteration_bounds = array<i64: 2>, scalar_prefetch = 0 : i64, scratch_operands = 0 : i64, tpu.core_type = #tpu.core_type<tc>, window_params = [{transform_indices = @transform_0, window_bounds = array<i64: 128, 128>}, {pipeline_mode = #tpu.pipeline_mode<synchronous>, transform_indices = @transform_1, window_bounds = array<i64: 1, 128>}, {pipeline_mode = #tpu.pipeline_mode<synchronous>, transform_indices = @transform_2, window_bounds = array<i64: 1, 128>}, {pipeline_mode = #tpu.pipeline_mode<synchronous>, transform_indices = @transform_3, window_bounds = array<i64: 128, 128>}, {transform_indices = @transform_4, window_bounds = array<i64: 128, 128>}]} {
    %c0 = arith.constant 0 : index
    %c0_0 = arith.constant 0 : index
    %0 = vector.load %arg1[%c0, %c0_0] : memref<128x128xf32, #tpu.memory_space<vmem>>, vector<128x128xf32>
    %c0_1 = arith.constant 0 : index
    %c0_2 = arith.constant 0 : index
    %1 = vector.load %arg2[%c0_1, %c0_2] : memref<1x128xf32, #tpu.memory_space<vmem>>, vector<1x128xf32>
    %2 = vector.broadcast %1 : vector<1x128xf32> to vector<128x128xf32>
    %3 = arith.mulf %0, %2 : vector<128x128xf32>
    %c0_3 = arith.constant 0 : index
    %c0_4 = arith.constant 0 : index
    %4 = vector.load %arg3[%c0_3, %c0_4] : memref<1x128xf32, #tpu.memory_space<vmem>>, vector<1x128xf32>
    %5 = vector.broadcast %4 : vector<1x128xf32> to vector<128x128xf32>
    %6 = arith.addf %3, %5 : vector<128x128xf32>
    %7 = arith.truncf %6 : vector<128x128xf32> to vector<128x128xbf16>
    %c0_5 = arith.constant 0 : index
    %c0_6 = arith.constant 0 : index
    %8 = vector.load %arg4[%c0_5, %c0_6] : memref<128x128xbf16, #tpu.memory_space<vmem>>, vector<128x128xbf16>
    %cst = arith.constant dense<0.000000e+00> : vector<128x128xf32>
    %9 = tpu.matmul %7, %8, %cst {dimension_numbers = #tpu.dot_dimension_numbers<[1], [0], [0], [1], [0, 0, 1, 1], [], []>} : vector<128x128xbf16>, vector<128x128xbf16>, vector<128x128xf32> -> vector<128x128xf32>
    %10 = arith.truncf %9 : vector<128x128xf32> to vector<128x128xbf16>
    %c0_7 = arith.constant 0 : index
    %c0_8 = arith.constant 0 : index
    %11 = vector.load %arg5[%c0_7, %c0_8] : memref<128x128xbf16, #tpu.memory_space<vmem>>, vector<128x128xbf16>
    tpu.vector_store %arg5[%c0_7, %c0_8], %10 {strides = array<i32>} : memref<128x128xbf16, #tpu.memory_space<vmem>>, vector<128x128xbf16>,
    return
  }
  func.func @transform_0(%arg0: i32) -> (i32, i32) {
    %c0_i32 = arith.constant 0 : i32
    %c0_i32_0 = arith.constant 0 : i32
    return %arg0, %c0_i32 : i32, i32
  }
  func.func @transform_1(%arg0: i32) -> (i32, i32) {
    %c0_i32 = arith.constant 0 : i32
    %c0_i32_0 = arith.constant 0 : i32
    %c0_i32_1 = arith.constant 0 : i32
    return %c0_i32, %c0_i32_0 : i32, i32
  }
  func.func @transform_2(%arg0: i32) -> (i32, i32) {
    %c0_i32 = arith.constant 0 : i32
    %c0_i32_0 = arith.constant 0 : i32
    %c0_i32_1 = arith.constant 0 : i32
    return %c0_i32, %c0_i32_0 : i32, i32
  }
  func.func @transform_3(%arg0: i32) -> (i32, i32) {
    %c0_i32 = arith.constant 0 : i32
    %c0_i32_0 = arith.constant 0 : i32
    %c0_i32_1 = arith.constant 0 : i32
    return %c0_i32, %c0_i32_0 : i32, i32
  }
  func.func @transform_4(%arg0: i32) -> (i32, i32) {
    %c0_i32 = arith.constant 0 : i32
    %c0_i32_0 = arith.constant 0 : i32
    return %arg0, %c0_i32 : i32, i32
  }
}

module attributes {stable_mosaic.version = 11 : i64} {
  func.func @_gcn_aggregate_kernel(%arg0: i32, %arg1: i32, %arg2: memref<128x128xbf16, #tpu.memory_space<vmem>>, %arg3: memref<128x128xbf16, #tpu.memory_space<vmem>>, %arg4: memref<128x128xf32, #tpu.memory_space<vmem>>, %arg5: memref<1x128xf32, #tpu.memory_space<vmem>>, %arg6: memref<128x128xf32, #tpu.memory_space<vmem>>, %arg7: memref<128x128xf32, #tpu.memory_space<vmem>>) attributes {dimension_semantics = [#tpu.dimension_semantics<parallel>, #tpu.dimension_semantics<arbitrary>], iteration_bounds = array<i64: 2, 2>, scalar_prefetch = 0 : i64, scratch_operands = 1 : i64, tpu.core_type = #tpu.core_type<tc>, window_params = [{transform_indices = @transform_0, window_bounds = array<i64: 128, 128>}, {transform_indices = @transform_1, window_bounds = array<i64: 128, 128>}, {transform_indices = @transform_2, window_bounds = array<i64: 128, 128>}, {pipeline_mode = #tpu.pipeline_mode<synchronous>, transform_indices = @transform_3, window_bounds = array<i64: 1, 128>}, {transform_indices = @transform_4, window_bounds = array<i64: 128, 128>}]} {
    %c0_i32 = arith.constant 0 : i32
    %0 = arith.cmpi eq, %arg1, %c0_i32 : i32
    %1 = arith.extui %0 : i1 to i32
    %c0_i32_0 = arith.constant 0 : i32
    %2 = arith.cmpi ne, %1, %c0_i32_0 : i32
    scf.if %2 {
      %cst_9 = arith.constant 0.000000e+00 : f32
      %12 = vector.broadcast %cst_9 : f32 to vector<128x128xf32>
      %c0_10 = arith.constant 0 : index
      %c0_11 = arith.constant 0 : index
      %13 = vector.load %arg7[%c0_10, %c0_11] : memref<128x128xf32, #tpu.memory_space<vmem>>, vector<128x128xf32>
      tpu.vector_store %arg7[%c0_10, %c0_11], %12 {strides = array<i32>} : memref<128x128xf32, #tpu.memory_space<vmem>>, vector<128x128xf32>,
    } else {
    }
    %c0 = arith.constant 0 : index
    %c0_1 = arith.constant 0 : index
    %3 = vector.load %arg7[%c0, %c0_1] : memref<128x128xf32, #tpu.memory_space<vmem>>, vector<128x128xf32>
    %c0_2 = arith.constant 0 : index
    %c0_3 = arith.constant 0 : index
    %4 = vector.load %arg2[%c0_2, %c0_3] : memref<128x128xbf16, #tpu.memory_space<vmem>>, vector<128x128xbf16>
    %c0_4 = arith.constant 0 : index
    %c0_5 = arith.constant 0 : index
    %5 = vector.load %arg3[%c0_4, %c0_5] : memref<128x128xbf16, #tpu.memory_space<vmem>>, vector<128x128xbf16>
    %cst = arith.constant dense<0.000000e+00> : vector<128x128xf32>
    %6 = tpu.matmul %4, %5, %cst {dimension_numbers = #tpu.dot_dimension_numbers<[1], [0], [0], [1], [0, 0, 1, 1], [], []>} : vector<128x128xbf16>, vector<128x128xbf16>, vector<128x128xf32> -> vector<128x128xf32>
    %7 = arith.addf %3, %6 : vector<128x128xf32>
    %c0_6 = arith.constant 0 : index
    %c0_7 = arith.constant 0 : index
    %8 = vector.load %arg7[%c0_6, %c0_7] : memref<128x128xf32, #tpu.memory_space<vmem>>, vector<128x128xf32>
    tpu.vector_store %arg7[%c0_6, %c0_7], %7 {strides = array<i32>} : memref<128x128xf32, #tpu.memory_space<vmem>>, vector<128x128xf32>,
    %c1_i32 = arith.constant 1 : i32
    %9 = arith.cmpi eq, %arg1, %c1_i32 : i32
    %10 = arith.extui %9 : i1 to i32
    %c0_i32_8 = arith.constant 0 : i32
    %11 = arith.cmpi ne, %10, %c0_i32_8 : i32
    scf.if %11 {
      %c0_9 = arith.constant 0 : index
      %c0_10 = arith.constant 0 : index
      %12 = vector.load %arg4[%c0_9, %c0_10] : memref<128x128xf32, #tpu.memory_space<vmem>>, vector<128x128xf32>
      %c0_11 = arith.constant 0 : index
      %c0_12 = arith.constant 0 : index
      %13 = vector.load %arg7[%c0_11, %c0_12] : memref<128x128xf32, #tpu.memory_space<vmem>>, vector<128x128xf32>
      %c0_13 = arith.constant 0 : index
      %c0_14 = arith.constant 0 : index
      %14 = vector.load %arg5[%c0_13, %c0_14] : memref<1x128xf32, #tpu.memory_space<vmem>>, vector<1x128xf32>
      %15 = vector.broadcast %14 : vector<1x128xf32> to vector<128x128xf32>
      %16 = arith.addf %13, %15 : vector<128x128xf32>
      %cst_15 = arith.constant 0.000000e+00 : f32
      %17 = vector.broadcast %cst_15 : f32 to vector<128x128xf32>
      %18 = arith.maximumf %16, %17 : vector<128x128xf32>
      %19 = arith.addf %12, %18 : vector<128x128xf32>
      %c0_16 = arith.constant 0 : index
      %c0_17 = arith.constant 0 : index
      %20 = vector.load %arg6[%c0_16, %c0_17] : memref<128x128xf32, #tpu.memory_space<vmem>>, vector<128x128xf32>
      tpu.vector_store %arg6[%c0_16, %c0_17], %19 {strides = array<i32>} : memref<128x128xf32, #tpu.memory_space<vmem>>, vector<128x128xf32>,
    } else {
    }
    return
  }
  func.func @transform_0(%arg0: i32, %arg1: i32) -> (i32, i32) {
    %c0_i32 = arith.constant 0 : i32
    return %arg0, %arg1 : i32, i32
  }
  func.func @transform_1(%arg0: i32, %arg1: i32) -> (i32, i32) {
    %c0_i32 = arith.constant 0 : i32
    %c0_i32_0 = arith.constant 0 : i32
    return %arg1, %c0_i32 : i32, i32
  }
  func.func @transform_2(%arg0: i32, %arg1: i32) -> (i32, i32) {
    %c0_i32 = arith.constant 0 : i32
    %c0_i32_0 = arith.constant 0 : i32
    return %arg0, %c0_i32 : i32, i32
  }
  func.func @transform_3(%arg0: i32, %arg1: i32) -> (i32, i32) {
    %c0_i32 = arith.constant 0 : i32
    %c0_i32_0 = arith.constant 0 : i32
    %c0_i32_1 = arith.constant 0 : i32
    return %c0_i32, %c0_i32_0 : i32, i32
  }
  func.func @transform_4(%arg0: i32, %arg1: i32) -> (i32, i32) {
    %c0_i32 = arith.constant 0 : i32
    %c0_i32_0 = arith.constant 0 : i32
    return %arg0, %c0_i32 : i32, i32
  }
}

module attributes {stable_mosaic.version = 11 : i64} {
  func.func @_att_stats_kernel(%arg0: i32, %arg1: memref<128x128xf32, #tpu.memory_space<vmem>>, %arg2: memref<128x128xf32, #tpu.memory_space<vmem>>, %arg3: memref<128x128xbf16, #tpu.memory_space<vmem>>, %arg4: memref<1x2xf32, #tpu.memory_space<vmem>>, %arg5: memref<1x2xf32, #tpu.memory_space<vmem>>, %arg6: memref<1x128xf32, #tpu.memory_space<vmem>>) attributes {dimension_semantics = [#tpu.dimension_semantics<arbitrary>], iteration_bounds = array<i64: 2>, scalar_prefetch = 0 : i64, scratch_operands = 0 : i64, tpu.core_type = #tpu.core_type<tc>, window_params = [{transform_indices = @transform_0, window_bounds = array<i64: 128, 128>}, {transform_indices = @transform_1, window_bounds = array<i64: 128, 128>}, {pipeline_mode = #tpu.pipeline_mode<synchronous>, transform_indices = @transform_2, window_bounds = array<i64: 128, 128>}, {pipeline_mode = #tpu.pipeline_mode<synchronous>, transform_indices = @transform_3, window_bounds = array<i64: 1, 2>}, {pipeline_mode = #tpu.pipeline_mode<synchronous>, transform_indices = @transform_4, window_bounds = array<i64: 1, 2>}, {pipeline_mode = #tpu.pipeline_mode<synchronous>, transform_indices = @transform_5, window_bounds = array<i64: 1, 128>}]} {
    %c0_i32 = arith.constant 0 : i32
    %0 = arith.cmpi eq, %arg0, %c0_i32 : i32
    %1 = arith.extui %0 : i1 to i32
    %c0_i32_0 = arith.constant 0 : i32
    %2 = arith.cmpi ne, %1, %c0_i32_0 : i32
    scf.if %2 {
      %cst_22 = arith.constant 0xFF800000 : f32
      %33 = vector.broadcast %cst_22 : f32 to vector<1x2xf32>
      %c0_23 = arith.constant 0 : index
      %c0_24 = arith.constant 0 : index
      %34 = vector.load %arg4[%c0_23, %c0_24] : memref<1x2xf32, #tpu.memory_space<vmem>>, vector<1x2xf32>
      tpu.vector_store %arg4[%c0_23, %c0_24], %33 {strides = array<i32>} : memref<1x2xf32, #tpu.memory_space<vmem>>, vector<1x2xf32>,
      %cst_25 = arith.constant 0.000000e+00 : f32
      %35 = vector.broadcast %cst_25 : f32 to vector<1x2xf32>
      %c0_26 = arith.constant 0 : index
      %c0_27 = arith.constant 0 : index
      %36 = vector.load %arg5[%c0_26, %c0_27] : memref<1x2xf32, #tpu.memory_space<vmem>>, vector<1x2xf32>
      tpu.vector_store %arg5[%c0_26, %c0_27], %35 {strides = array<i32>} : memref<1x2xf32, #tpu.memory_space<vmem>>, vector<1x2xf32>,
      %cst_28 = arith.constant 0.000000e+00 : f32
      %37 = vector.broadcast %cst_28 : f32 to vector<1x128xf32>
      %c0_29 = arith.constant 0 : index
      %c0_30 = arith.constant 0 : index
      %38 = vector.load %arg6[%c0_29, %c0_30] : memref<1x128xf32, #tpu.memory_space<vmem>>, vector<1x128xf32>
      tpu.vector_store %arg6[%c0_29, %c0_30], %37 {strides = array<i32>} : memref<1x128xf32, #tpu.memory_space<vmem>>, vector<1x128xf32>,
    } else {
    }
    %c0 = arith.constant 0 : index
    %c0_1 = arith.constant 0 : index
    %3 = vector.load %arg2[%c0, %c0_1] : memref<128x128xf32, #tpu.memory_space<vmem>>, vector<128x128xf32>
    %4 = arith.truncf %3 : vector<128x128xf32> to vector<128x128xbf16>
    %c0_2 = arith.constant 0 : index
    %c0_3 = arith.constant 0 : index
    %5 = vector.load %arg3[%c0_2, %c0_3] : memref<128x128xbf16, #tpu.memory_space<vmem>>, vector<128x128xbf16>
    %cst = arith.constant dense<0.000000e+00> : vector<128x128xf32>
    %6 = tpu.matmul %4, %5, %cst {dimension_numbers = #tpu.dot_dimension_numbers<[1], [0], [0], [1], [0, 0, 1, 1], [], []>} : vector<128x128xbf16>, vector<128x128xbf16>, vector<128x128xf32> -> vector<128x128xf32>
    %7 = vector.extract_strided_slice %6 {offsets = [0, 0], sizes = [128, 2], strides = [1, 1]} : vector<128x128xf32> to vector<128x2xf32>
    %c0_4 = arith.constant 0 : index
    %c0_5 = arith.constant 0 : index
    %8 = vector.load %arg4[%c0_4, %c0_5] : memref<1x2xf32, #tpu.memory_space<vmem>>, vector<1x2xf32>
    %cst_6 = arith.constant dense<0xFF800000> : vector<2xf32>
    %9 = vector.multi_reduction <maximumf>, %7, %cst_6 [0] : vector<128x2xf32> to vector<2xf32>
    %10 = vector.shape_cast %9 : vector<2xf32> to vector<1x2xf32>
    %11 = arith.maximumf %8, %10 : vector<1x2xf32>
    %c0_7 = arith.constant 0 : index
    %c0_8 = arith.constant 0 : index
    %12 = vector.load %arg5[%c0_7, %c0_8] : memref<1x2xf32, #tpu.memory_space<vmem>>, vector<1x2xf32>
    %13 = arith.subf %8, %11 : vector<1x2xf32>
    %14 = math.exp %13 : vector<1x2xf32>
    %15 = arith.mulf %12, %14 : vector<1x2xf32>
    %16 = vector.broadcast %11 : vector<1x2xf32> to vector<128x2xf32>
    %17 = arith.subf %7, %16 : vector<128x2xf32>
    %18 = math.exp %17 : vector<128x2xf32>
    %cst_9 = arith.constant dense<0.000000e+00> : vector<2xf32>
    %19 = vector.multi_reduction <add>, %18, %cst_9 [0] : vector<128x2xf32> to vector<2xf32>
    %20 = vector.shape_cast %19 : vector<2xf32> to vector<1x2xf32>
    %21 = arith.addf %15, %20 : vector<1x2xf32>
    %c0_10 = arith.constant 0 : index
    %c0_11 = arith.constant 0 : index
    %22 = vector.load %arg5[%c0_10, %c0_11] : memref<1x2xf32, #tpu.memory_space<vmem>>, vector<1x2xf32>
    tpu.vector_store %arg5[%c0_10, %c0_11], %21 {strides = array<i32>} : memref<1x2xf32, #tpu.memory_space<vmem>>, vector<1x2xf32>,
    %c0_12 = arith.constant 0 : index
    %c0_13 = arith.constant 0 : index
    %23 = vector.load %arg4[%c0_12, %c0_13] : memref<1x2xf32, #tpu.memory_space<vmem>>, vector<1x2xf32>
    tpu.vector_store %arg4[%c0_12, %c0_13], %11 {strides = array<i32>} : memref<1x2xf32, #tpu.memory_space<vmem>>, vector<1x2xf32>,
    %c0_14 = arith.constant 0 : index
    %c0_15 = arith.constant 0 : index
    %24 = vector.load %arg6[%c0_14, %c0_15] : memref<1x128xf32, #tpu.memory_space<vmem>>, vector<1x128xf32>
    %c0_16 = arith.constant 0 : index
    %c0_17 = arith.constant 0 : index
    %25 = vector.load %arg1[%c0_16, %c0_17] : memref<128x128xf32, #tpu.memory_space<vmem>>, vector<128x128xf32>
    %cst_18 = arith.constant dense<0.000000e+00> : vector<128xf32>
    %26 = vector.multi_reduction <add>, %25, %cst_18 [0] : vector<128x128xf32> to vector<128xf32>
    %27 = vector.shape_cast %26 : vector<128xf32> to vector<1x128xf32>
    %28 = arith.addf %24, %27 : vector<1x128xf32>
    %c0_19 = arith.constant 0 : index
    %c0_20 = arith.constant 0 : index
    %29 = vector.load %arg6[%c0_19, %c0_20] : memref<1x128xf32, #tpu.memory_space<vmem>>, vector<1x128xf32>
    tpu.vector_store %arg6[%c0_19, %c0_20], %28 {strides = array<i32>} : memref<1x128xf32, #tpu.memory_space<vmem>>, vector<1x128xf32>,
    %c1_i32 = arith.constant 1 : i32
    %30 = arith.cmpi eq, %arg0, %c1_i32 : i32
    %31 = arith.extui %30 : i1 to i32
    %c0_i32_21 = arith.constant 0 : i32
    %32 = arith.cmpi ne, %31, %c0_i32_21 : i32
    scf.if %32 {
      %c0_22 = arith.constant 0 : index
      %c0_23 = arith.constant 0 : index
      %33 = vector.load %arg6[%c0_22, %c0_23] : memref<1x128xf32, #tpu.memory_space<vmem>>, vector<1x128xf32>
      %cst_24 = arith.constant 3.906250e-03 : f32
      %34 = vector.broadcast %cst_24 : f32 to vector<1x128xf32>
      %35 = arith.mulf %33, %34 : vector<1x128xf32>
      %c0_25 = arith.constant 0 : index
      %c0_26 = arith.constant 0 : index
      %36 = vector.load %arg6[%c0_25, %c0_26] : memref<1x128xf32, #tpu.memory_space<vmem>>, vector<1x128xf32>
      tpu.vector_store %arg6[%c0_25, %c0_26], %35 {strides = array<i32>} : memref<1x128xf32, #tpu.memory_space<vmem>>, vector<1x128xf32>,
    } else {
    }
    return
  }
  func.func @transform_0(%arg0: i32) -> (i32, i32) {
    %c0_i32 = arith.constant 0 : i32
    %c0_i32_0 = arith.constant 0 : i32
    return %arg0, %c0_i32 : i32, i32
  }
  func.func @transform_1(%arg0: i32) -> (i32, i32) {
    %c0_i32 = arith.constant 0 : i32
    %c0_i32_0 = arith.constant 0 : i32
    return %arg0, %c0_i32 : i32, i32
  }
  func.func @transform_2(%arg0: i32) -> (i32, i32) {
    %c0_i32 = arith.constant 0 : i32
    %c0_i32_0 = arith.constant 0 : i32
    %c0_i32_1 = arith.constant 0 : i32
    return %c0_i32, %c0_i32_0 : i32, i32
  }
  func.func @transform_3(%arg0: i32) -> (i32, i32) {
    %c0_i32 = arith.constant 0 : i32
    %c0_i32_0 = arith.constant 0 : i32
    %c0_i32_1 = arith.constant 0 : i32
    return %c0_i32, %c0_i32_0 : i32, i32
  }
  func.func @transform_4(%arg0: i32) -> (i32, i32) {
    %c0_i32 = arith.constant 0 : i32
    %c0_i32_0 = arith.constant 0 : i32
    %c0_i32_1 = arith.constant 0 : i32
    return %c0_i32, %c0_i32_0 : i32, i32
  }
  func.func @transform_5(%arg0: i32) -> (i32, i32) {
    %c0_i32 = arith.constant 0 : i32
    %c0_i32_0 = arith.constant 0 : i32
    %c0_i32_1 = arith.constant 0 : i32
    return %c0_i32, %c0_i32_0 : i32, i32
  }
}

module attributes {stable_mosaic.version = 11 : i64} {
  func.func @_readout_kernel(%arg0: i32, %arg1: memref<128x128xf32, #tpu.memory_space<vmem>>, %arg2: memref<128x128xbf16, #tpu.memory_space<vmem>>, %arg3: memref<1x2xf32, #tpu.memory_space<vmem>>, %arg4: memref<1x2xf32, #tpu.memory_space<vmem>>, %arg5: memref<128x256xbf16, #tpu.memory_space<vmem>>, %arg6: memref<256x128xbf16, #tpu.memory_space<vmem>>, %arg7: memref<128x256xbf16, #tpu.memory_space<vmem>>, %arg8: memref<1x256xf32, #tpu.memory_space<vmem>>, %arg9: memref<256x128xbf16, #tpu.memory_space<vmem>>, %arg10: memref<1x128xf32, #tpu.memory_space<vmem>>, %arg11: memref<1x128xf32, #tpu.memory_space<vmem>>, %arg12: memref<1x128xf32, #tpu.memory_space<vmem>>, %arg13: memref<1x128xf32, #tpu.memory_space<vmem>>) attributes {dimension_semantics = [#tpu.dimension_semantics<arbitrary>], iteration_bounds = array<i64: 2>, scalar_prefetch = 0 : i64, scratch_operands = 0 : i64, tpu.core_type = #tpu.core_type<tc>, window_params = [{transform_indices = @transform_0, window_bounds = array<i64: 128, 128>}, {pipeline_mode = #tpu.pipeline_mode<synchronous>, transform_indices = @transform_1, window_bounds = array<i64: 128, 128>}, {pipeline_mode = #tpu.pipeline_mode<synchronous>, transform_indices = @transform_2, window_bounds = array<i64: 1, 2>}, {pipeline_mode = #tpu.pipeline_mode<synchronous>, transform_indices = @transform_3, window_bounds = array<i64: 1, 2>}, {pipeline_mode = #tpu.pipeline_mode<synchronous>, transform_indices = @transform_4, window_bounds = array<i64: 128, 256>}, {pipeline_mode = #tpu.pipeline_mode<synchronous>, transform_indices = @transform_5, window_bounds = array<i64: 256, 128>}, {pipeline_mode = #tpu.pipeline_mode<synchronous>, transform_indices = @transform_6, window_bounds = array<i64: 128, 256>}, {pipeline_mode = #tpu.pipeline_mode<synchronous>, transform_indices = @transform_7, window_bounds = array<i64: 1, 256>}, {pipeline_mode = #tpu.pipeline_mode<synchronous>, transform_indices = @transform_8, window_bounds = array<i64: 256, 128>}, {pipeline_mode = #tpu.pipeline_mode<synchronous>, transform_indices = @transform_9, window_bounds = array<i64: 1, 128>}, {pipeline_mode = #tpu.pipeline_mode<synchronous>, transform_indices = @transform_10, window_bounds = array<i64: 1, 128>}, {pipeline_mode = #tpu.pipeline_mode<synchronous>, transform_indices = @transform_11, window_bounds = array<i64: 1, 128>}, {pipeline_mode = #tpu.pipeline_mode<synchronous>, transform_indices = @transform_12, window_bounds = array<i64: 1, 128>}]} {
    %c0_i32 = arith.constant 0 : i32
    %0 = arith.cmpi eq, %arg0, %c0_i32 : i32
    %1 = arith.extui %0 : i1 to i32
    %c0_i32_0 = arith.constant 0 : i32
    %2 = arith.cmpi ne, %1, %c0_i32_0 : i32
    scf.if %2 {
      %cst_44 = arith.constant 0.000000e+00 : f32
      %97 = vector.broadcast %cst_44 : f32 to vector<1x128xf32>
      %c0_45 = arith.constant 0 : index
      %c0_46 = arith.constant 0 : index
      %98 = vector.load %arg13[%c0_45, %c0_46] : memref<1x128xf32, #tpu.memory_space<vmem>>, vector<1x128xf32>
      tpu.vector_store %arg13[%c0_45, %c0_46], %97 {strides = array<i32>} : memref<1x128xf32, #tpu.memory_space<vmem>>, vector<1x128xf32>,
    } else {
    }
    %c0 = arith.constant 0 : index
    %c0_1 = arith.constant 0 : index
    %3 = vector.load %arg1[%c0, %c0_1] : memref<128x128xf32, #tpu.memory_space<vmem>>, vector<128x128xf32>
    %4 = arith.truncf %3 : vector<128x128xf32> to vector<128x128xbf16>
    %c0_2 = arith.constant 0 : index
    %c0_3 = arith.constant 0 : index
    %5 = vector.load %arg2[%c0_2, %c0_3] : memref<128x128xbf16, #tpu.memory_space<vmem>>, vector<128x128xbf16>
    %cst = arith.constant dense<0.000000e+00> : vector<128x128xf32>
    %6 = tpu.matmul %4, %5, %cst {dimension_numbers = #tpu.dot_dimension_numbers<[1], [0], [0], [1], [0, 0, 1, 1], [], []>} : vector<128x128xbf16>, vector<128x128xbf16>, vector<128x128xf32> -> vector<128x128xf32>
    %7 = vector.extract_strided_slice %6 {offsets = [0, 0], sizes = [128, 2], strides = [1, 1]} : vector<128x128xf32> to vector<128x2xf32>
    %c0_4 = arith.constant 0 : index
    %c0_5 = arith.constant 0 : index
    %8 = vector.load %arg3[%c0_4, %c0_5] : memref<1x2xf32, #tpu.memory_space<vmem>>, vector<1x2xf32>
    %9 = vector.broadcast %8 : vector<1x2xf32> to vector<128x2xf32>
    %10 = arith.subf %7, %9 : vector<128x2xf32>
    %11 = math.exp %10 : vector<128x2xf32>
    %c0_6 = arith.constant 0 : index
    %c0_7 = arith.constant 0 : index
    %12 = vector.load %arg4[%c0_6, %c0_7] : memref<1x2xf32, #tpu.memory_space<vmem>>, vector<1x2xf32>
    %13 = tpu.reciprocal %12 {approx = true} : vector<1x2xf32> -> vector<1x2xf32>
    %14 = vector.broadcast %13 : vector<1x2xf32> to vector<128x2xf32>
    %15 = arith.mulf %11, %14 : vector<128x2xf32>
    %c0_8 = arith.constant 0 : index
    %c0_9 = arith.constant 0 : index
    %16 = vector.load %arg5[%c0_8, %c0_9] : memref<128x256xbf16, #tpu.memory_space<vmem>>, vector<128x256xbf16>
    %cst_10 = arith.constant dense<0.000000e+00> : vector<128x256xf32>
    %17 = tpu.matmul %4, %16, %cst_10 {dimension_numbers = #tpu.dot_dimension_numbers<[1], [0], [0], [1], [0, 0, 1, 1], [], []>} : vector<128x128xbf16>, vector<128x256xbf16>, vector<128x256xf32> -> vector<128x256xf32>
    %18 = vector.extract_strided_slice %17 {offsets = [0, 0], sizes = [128, 128], strides = [1, 1]} : vector<128x256xf32> to vector<128x128xf32>
    %19 = vector.extract_strided_slice %15 {offsets = [0, 0], sizes = [128, 1], strides = [1, 1]} : vector<128x2xf32> to vector<128x1xf32>
    %20 = vector.broadcast %19 : vector<128x1xf32> to vector<128x128xf32>
    %21 = arith.mulf %18, %20 : vector<128x128xf32>
    %22 = vector.extract_strided_slice %17 {offsets = [0, 128], sizes = [128, 128], strides = [1, 1]} : vector<128x256xf32> to vector<128x128xf32>
    %23 = vector.extract_strided_slice %15 {offsets = [0, 1], sizes = [128, 1], strides = [1, 1]} : vector<128x2xf32> to vector<128x1xf32>
    %24 = vector.broadcast %23 : vector<128x1xf32> to vector<128x128xf32>
    %25 = arith.mulf %22, %24 : vector<128x128xf32>
    %26 = tpu.concatenate %21, %25 in 1 : vector<128x128xf32>, vector<128x128xf32> -> vector<128x256xf32>
    %27 = arith.truncf %26 : vector<128x256xf32> to vector<128x256xbf16>
    %c0_11 = arith.constant 0 : index
    %c0_12 = arith.constant 0 : index
    %28 = vector.load %arg6[%c0_11, %c0_12] : memref<256x128xbf16, #tpu.memory_space<vmem>>, vector<256x128xbf16>
    %cst_13 = arith.constant dense<0.000000e+00> : vector<128x128xf32>
    %29 = tpu.matmul %27, %28, %cst_13 {dimension_numbers = #tpu.dot_dimension_numbers<[1], [0], [0], [1], [0, 0, 1, 1], [], []>} : vector<128x256xbf16>, vector<256x128xbf16>, vector<128x128xf32> -> vector<128x128xf32>
    %c0_14 = arith.constant 0 : index
    %c0_15 = arith.constant 0 : index
    %30 = vector.load %arg11[%c0_14, %c0_15] : memref<1x128xf32, #tpu.memory_space<vmem>>, vector<1x128xf32>
    %c0_16 = arith.constant 0 : index
    %c0_17 = arith.constant 0 : index
    %31 = vector.load %arg12[%c0_16, %c0_17] : memref<1x128xf32, #tpu.memory_space<vmem>>, vector<1x128xf32>
    %32 = arith.addf %29, %3 : vector<128x128xf32>
    %cst_18 = arith.constant dense<0.000000e+00> : vector<128xf32>
    %33 = vector.multi_reduction <add>, %32, %cst_18 [1] : vector<128x128xf32> to vector<128xf32>
    %34 = vector.shape_cast %33 : vector<128xf32> to vector<128x1xf32>
    %cst_19 = arith.constant 1.280000e+02 : f32
    %35 = vector.broadcast %cst_19 : f32 to vector<128x1xf32>
    %36 = arith.divf %34, %35 : vector<128x1xf32>
    %37 = vector.broadcast %36 : vector<128x1xf32> to vector<128x128xf32>
    %38 = arith.subf %32, %37 : vector<128x128xf32>
    %39 = arith.mulf %38, %38 : vector<128x128xf32>
    %cst_20 = arith.constant dense<0.000000e+00> : vector<128xf32>
    %40 = vector.multi_reduction <add>, %39, %cst_20 [1] : vector<128x128xf32> to vector<128xf32>
    %41 = vector.shape_cast %40 : vector<128xf32> to vector<128x1xf32>
    %cst_21 = arith.constant 1.280000e+02 : f32
    %42 = vector.broadcast %cst_21 : f32 to vector<128x1xf32>
    %43 = arith.divf %41, %42 : vector<128x1xf32>
    %44 = vector.broadcast %36 : vector<128x1xf32> to vector<128x128xf32>
    %45 = arith.subf %32, %44 : vector<128x128xf32>
    %cst_22 = arith.constant 9.99999974E-6 : f32
    %46 = vector.broadcast %cst_22 : f32 to vector<128x1xf32>
    %47 = arith.addf %43, %46 : vector<128x1xf32>
    %48 = math.rsqrt %47 : vector<128x1xf32>
    %49 = vector.broadcast %48 : vector<128x1xf32> to vector<128x128xf32>
    %50 = arith.mulf %45, %49 : vector<128x128xf32>
    %51 = vector.broadcast %30 : vector<1x128xf32> to vector<128x128xf32>
    %52 = arith.mulf %50, %51 : vector<128x128xf32>
    %53 = vector.broadcast %31 : vector<1x128xf32> to vector<128x128xf32>
    %54 = arith.addf %52, %53 : vector<128x128xf32>
    %55 = arith.truncf %54 : vector<128x128xf32> to vector<128x128xbf16>
    %c0_23 = arith.constant 0 : index
    %c0_24 = arith.constant 0 : index
    %56 = vector.load %arg7[%c0_23, %c0_24] : memref<128x256xbf16, #tpu.memory_space<vmem>>, vector<128x256xbf16>
    %cst_25 = arith.constant dense<0.000000e+00> : vector<128x256xf32>
    %57 = tpu.matmul %55, %56, %cst_25 {dimension_numbers = #tpu.dot_dimension_numbers<[1], [0], [0], [1], [0, 0, 1, 1], [], []>} : vector<128x128xbf16>, vector<128x256xbf16>, vector<128x256xf32> -> vector<128x256xf32>
    %c0_26 = arith.constant 0 : index
    %c0_27 = arith.constant 0 : index
    %58 = vector.load %arg8[%c0_26, %c0_27] : memref<1x256xf32, #tpu.memory_space<vmem>>, vector<1x256xf32>
    %59 = vector.broadcast %58 : vector<1x256xf32> to vector<128x256xf32>
    %60 = arith.addf %57, %59 : vector<128x256xf32>
    %cst_28 = arith.constant 0.000000e+00 : f32
    %61 = vector.broadcast %cst_28 : f32 to vector<128x256xf32>
    %62 = arith.maximumf %60, %61 : vector<128x256xf32>
    %63 = arith.truncf %62 : vector<128x256xf32> to vector<128x256xbf16>
    %c0_29 = arith.constant 0 : index
    %c0_30 = arith.constant 0 : index
    %64 = vector.load %arg9[%c0_29, %c0_30] : memref<256x128xbf16, #tpu.memory_space<vmem>>, vector<256x128xbf16>
    %cst_31 = arith.constant dense<0.000000e+00> : vector<128x128xf32>
    %65 = tpu.matmul %63, %64, %cst_31 {dimension_numbers = #tpu.dot_dimension_numbers<[1], [0], [0], [1], [0, 0, 1, 1], [], []>} : vector<128x256xbf16>, vector<256x128xbf16>, vector<128x128xf32> -> vector<128x128xf32>
    %c0_32 = arith.constant 0 : index
    %c0_33 = arith.constant 0 : index
    %66 = vector.load %arg10[%c0_32, %c0_33] : memref<1x128xf32, #tpu.memory_space<vmem>>, vector<1x128xf32>
    %67 = vector.broadcast %66 : vector<1x128xf32> to vector<128x128xf32>
    %68 = arith.addf %65, %67 : vector<128x128xf32>
    %69 = arith.addf %68, %54 : vector<128x128xf32>
    %cst_34 = arith.constant dense<0.000000e+00> : vector<128xf32>
    %70 = vector.multi_reduction <add>, %69, %cst_34 [1] : vector<128x128xf32> to vector<128xf32>
    %71 = vector.shape_cast %70 : vector<128xf32> to vector<128x1xf32>
    %cst_35 = arith.constant 1.280000e+02 : f32
    %72 = vector.broadcast %cst_35 : f32 to vector<128x1xf32>
    %73 = arith.divf %71, %72 : vector<128x1xf32>
    %74 = vector.broadcast %73 : vector<128x1xf32> to vector<128x128xf32>
    %75 = arith.subf %69, %74 : vector<128x128xf32>
    %76 = arith.mulf %75, %75 : vector<128x128xf32>
    %cst_36 = arith.constant dense<0.000000e+00> : vector<128xf32>
    %77 = vector.multi_reduction <add>, %76, %cst_36 [1] : vector<128x128xf32> to vector<128xf32>
    %78 = vector.shape_cast %77 : vector<128xf32> to vector<128x1xf32>
    %cst_37 = arith.constant 1.280000e+02 : f32
    %79 = vector.broadcast %cst_37 : f32 to vector<128x1xf32>
    %80 = arith.divf %78, %79 : vector<128x1xf32>
    %81 = vector.broadcast %73 : vector<128x1xf32> to vector<128x128xf32>
    %82 = arith.subf %69, %81 : vector<128x128xf32>
    %cst_38 = arith.constant 9.99999974E-6 : f32
    %83 = vector.broadcast %cst_38 : f32 to vector<128x1xf32>
    %84 = arith.addf %80, %83 : vector<128x1xf32>
    %85 = math.rsqrt %84 : vector<128x1xf32>
    %86 = vector.broadcast %85 : vector<128x1xf32> to vector<128x128xf32>
    %87 = arith.mulf %82, %86 : vector<128x128xf32>
    %88 = vector.broadcast %30 : vector<1x128xf32> to vector<128x128xf32>
    %89 = arith.mulf %87, %88 : vector<128x128xf32>
    %90 = vector.broadcast %31 : vector<1x128xf32> to vector<128x128xf32>
    %91 = arith.addf %89, %90 : vector<128x128xf32>
    %c0_39 = arith.constant 0 : index
    %c0_40 = arith.constant 0 : index
    %92 = vector.load %arg13[%c0_39, %c0_40] : memref<1x128xf32, #tpu.memory_space<vmem>>, vector<1x128xf32>
    %cst_41 = arith.constant dense<0.000000e+00> : vector<128xf32>
    %93 = vector.multi_reduction <add>, %91, %cst_41 [0] : vector<128x128xf32> to vector<128xf32>
    %94 = vector.shape_cast %93 : vector<128xf32> to vector<1x128xf32>
    %95 = arith.addf %92, %94 : vector<1x128xf32>
    %c0_42 = arith.constant 0 : index
    %c0_43 = arith.constant 0 : index
    %96 = vector.load %arg13[%c0_42, %c0_43] : memref<1x128xf32, #tpu.memory_space<vmem>>, vector<1x128xf32>
    tpu.vector_store %arg13[%c0_42, %c0_43], %95 {strides = array<i32>} : memref<1x128xf32, #tpu.memory_space<vmem>>, vector<1x128xf32>,
    return
  }
  func.func @transform_0(%arg0: i32) -> (i32, i32) {
    %c0_i32 = arith.constant 0 : i32
    %c0_i32_0 = arith.constant 0 : i32
    return %arg0, %c0_i32 : i32, i32
  }
  func.func @transform_1(%arg0: i32) -> (i32, i32) {
    %c0_i32 = arith.constant 0 : i32
    %c0_i32_0 = arith.constant 0 : i32
    %c0_i32_1 = arith.constant 0 : i32
    return %c0_i32, %c0_i32_0 : i32, i32
  }
  func.func @transform_2(%arg0: i32) -> (i32, i32) {
    %c0_i32 = arith.constant 0 : i32
    %c0_i32_0 = arith.constant 0 : i32
    %c0_i32_1 = arith.constant 0 : i32
    return %c0_i32, %c0_i32_0 : i32, i32
  }
  func.func @transform_3(%arg0: i32) -> (i32, i32) {
    %c0_i32 = arith.constant 0 : i32
    %c0_i32_0 = arith.constant 0 : i32
    %c0_i32_1 = arith.constant 0 : i32
    return %c0_i32, %c0_i32_0 : i32, i32
  }
  func.func @transform_4(%arg0: i32) -> (i32, i32) {
    %c0_i32 = arith.constant 0 : i32
    %c0_i32_0 = arith.constant 0 : i32
    %c0_i32_1 = arith.constant 0 : i32
    return %c0_i32, %c0_i32_0 : i32, i32
  }
  func.func @transform_5(%arg0: i32) -> (i32, i32) {
    %c0_i32 = arith.constant 0 : i32
    %c0_i32_0 = arith.constant 0 : i32
    %c0_i32_1 = arith.constant 0 : i32
    return %c0_i32, %c0_i32_0 : i32, i32
  }
  func.func @transform_6(%arg0: i32) -> (i32, i32) {
    %c0_i32 = arith.constant 0 : i32
    %c0_i32_0 = arith.constant 0 : i32
    %c0_i32_1 = arith.constant 0 : i32
    return %c0_i32, %c0_i32_0 : i32, i32
  }
  func.func @transform_7(%arg0: i32) -> (i32, i32) {
    %c0_i32 = arith.constant 0 : i32
    %c0_i32_0 = arith.constant 0 : i32
    %c0_i32_1 = arith.constant 0 : i32
    return %c0_i32, %c0_i32_0 : i32, i32
  }
  func.func @transform_8(%arg0: i32) -> (i32, i32) {
    %c0_i32 = arith.constant 0 : i32
    %c0_i32_0 = arith.constant 0 : i32
    %c0_i32_1 = arith.constant 0 : i32
    return %c0_i32, %c0_i32_0 : i32, i32
  }
  func.func @transform_9(%arg0: i32) -> (i32, i32) {
    %c0_i32 = arith.constant 0 : i32
    %c0_i32_0 = arith.constant 0 : i32
    %c0_i32_1 = arith.constant 0 : i32
    return %c0_i32, %c0_i32_0 : i32, i32
  }
  func.func @transform_10(%arg0: i32) -> (i32, i32) {
    %c0_i32 = arith.constant 0 : i32
    %c0_i32_0 = arith.constant 0 : i32
    %c0_i32_1 = arith.constant 0 : i32
    return %c0_i32, %c0_i32_0 : i32, i32
  }
  func.func @transform_11(%arg0: i32) -> (i32, i32) {
    %c0_i32 = arith.constant 0 : i32
    %c0_i32_0 = arith.constant 0 : i32
    %c0_i32_1 = arith.constant 0 : i32
    return %c0_i32, %c0_i32_0 : i32, i32
  }
  func.func @transform_12(%arg0: i32) -> (i32, i32) {
    %c0_i32 = arith.constant 0 : i32
    %c0_i32_0 = arith.constant 0 : i32
    %c0_i32_1 = arith.constant 0 : i32
    return %c0_i32, %c0_i32_0 : i32, i32
  }
}

</mosaic_0001>

<llo_original>
// kernel: gcn2_forward.6
$region0: #{gcn2_forward.6}
  #allocation0 [shape = 'u32[]', space=smem, size = 0x4, offset = 0x4, fixed_abs, tag = 'smem constant byte address 0x4 - core index']
  #allocation1 [shape = 'u32[144,128]{1,0:T(1,128)}', space=vmem, size = 0x12000, scoped, tag = 'internal scratch']
  %s0 = inlined_call_operand.vmem [shape: f32[256,128], index: 0, kind: input, shape index: {}]
  %s1 = inlined_call_operand.vmem [shape: f32[1,128], index: 1, kind: input, shape index: {}]
  %s2 = inlined_call_operand.vmem [shape: f32[1,128], index: 2, kind: input, shape index: {}]
  %s3 = inlined_call_operand.vmem [shape: bf16[128,128], index: 3, kind: input, shape index: {}]
  %s4 = inlined_call_operand.vmem [shape: bf16[256,128], index: 4, kind: output, shape index: {}]
  %s5 = sld [smem:[#allocation0]]
  $region49: #{gcn2_forward.6} parent=0
    _
  %s7 = ssub.s32 1, %s5
  %s8 = scalar_select 0, %s7, %s5
  loop: start=0, step=1, limit=4
  $region2: #{gcn2_forward.6} parent=0 // loop_pre_header
    _
  $region3: #{gcn2_forward.6} parent=0 // loop_header
    %s10 = sphi 0, %s14
    %p11 = scmp.ge.s32.totalorder %s10, 4
    %s20 = sphi 0, %s22
    %s23 = sphi 0, %s20
    %s24 = sphi 0, %s23
    %s40 = sphi 0, %s24
    %s44 = sphi 0, %s44
    %s46 = sphi 0, %s44
    %s47 = sphi 0, %s46
    %s61 = sphi 0, %s47
    %s65 = sphi 0, %s65
    %s67 = sphi 0, %s65
    %s68 = sphi 0, %s67
    %s82 = sphi 0, %s68
    %s86 = sphi 0, %s86
    %s88 = sphi 0, %s86
    %s89 = sphi 0, %s88
    %s103 = sphi 0, %s89
    %s109 = sphi 0, %s111
    %s112 = sphi 0, %s109
    %s113 = sphi 0, %s112
    %s129 = sphi 0, %s113
  $region4: #{gcn2_forward.6} parent=0 // loop_header_branch
    %13 = sbr.rel (%p11) target = $region8
  $region5: #{gcn2_forward.6} parent=0 // loop_body
    %s15 = ssub.s32 %s10, 1
    %s16 = ssub.s32 %s10, 2
    %s17 = sadd.s32 %s10, 1
    %s18 = ssub.s32 %s10, %s17
    %p19 = scmp.eq.s32.totalorder %s18, 0
    %s21 = sadd.s32 %s20, 1
    %s22 = scalar_select %p19, %s20, %s21
    %p25 = pneg %p19
    %p26 = scmp.eq.s32.totalorder %s10, 1
    %p27 = por %p25, %p26
    %p28 = scmp.ne.s32.totalorder %s20, %s23
    %p29 = scmp.eq.s32.totalorder %s10, 0
    %p30 = por %p28, %p29
    %p31 = scmp.ne.s32.totalorder %s20, %s23
    %p32 = scmp.eq.s32.totalorder %s15, 1
    %p33 = por %p31, %p32
    %p34 = scmp.ne.s32.totalorder %s23, %s24
    %p35 = scmp.eq.s32.totalorder %s15, 0
    %p36 = por %p34, %p35
    %p37 = scmp.ne.s32.totalorder %s23, %s24
    %p38 = scmp.eq.s32.totalorder %s16, 1
    %p39 = por %p37, %p38
    %p41 = scmp.ne.s32.totalorder %s24, %s40
    %p42 = scmp.eq.s32.totalorder %s16, 0
    %p43 = por %p41, %p42
    %s45 = sadd.s32 %s44, 1
    %p48 = scmp.eq.s32.totalorder %s10, 1
    %p49 = scmp.ne.s32.totalorder %s44, %s46
    %p50 = scmp.eq.s32.totalorder %s10, 0
    %p51 = por %p49, %p50
    %p52 = scmp.ne.s32.totalorder %s44, %s46
    %p53 = scmp.eq.s32.totalorder %s15, 1
    %p54 = por %p52, %p53
    %p55 = scmp.ne.s32.totalorder %s46, %s47
    %p56 = scmp.eq.s32.totalorder %s15, 0
    %p57 = por %p55, %p56
    %p58 = scmp.ne.s32.totalorder %s46, %s47
    %p59 = scmp.eq.s32.totalorder %s16, 1
    %p60 = por %p58, %p59
    %p62 = scmp.ne.s32.totalorder %s47, %s61
    %p63 = scmp.eq.s32.totalorder %s16, 0
    %p64 = por %p62, %p63
    %s66 = sadd.s32 %s65, 1
    %p69 = scmp.eq.s32.totalorder %s10, 1
    %p70 = scmp.ne.s32.totalorder %s65, %s67
    %p71 = scmp.eq.s32.totalorder %s10, 0
    %p72 = por %p70, %p71
    %p73 = scmp.ne.s32.totalorder %s65, %s67
    %p74 = scmp.eq.s32.totalorder %s15, 1
    %p75 = por %p73, %p74
    %p76 = scmp.ne.s32.totalorder %s67, %s68
    %p77 = scmp.eq.s32.totalorder %s15, 0
    %p78 = por %p76, %p77
    %p79 = scmp.ne.s32.totalorder %s67, %s68
    %p80 = scmp.eq.s32.totalorder %s16, 1
    %p81 = por %p79, %p80
    %p83 = scmp.ne.s32.totalorder %s68, %s82
    %p84 = scmp.eq.s32.totalorder %s16, 0
    %p85 = por %p83, %p84
    %s87 = sadd.s32 %s86, 1
    %p90 = scmp.eq.s32.totalorder %s10, 1
    %p91 = scmp.ne.s32.totalorder %s86, %s88
    %p92 = scmp.eq.s32.totalorder %s10, 0
    %p93 = por %p91, %p92
    %p94 = scmp.ne.s32.totalorder %s86, %s88
    %p95 = scmp.eq.s32.totalorder %s15, 1
    %p96 = por %p94, %p95
    %p97 = scmp.ne.s32.totalorder %s88, %s89
    %p98 = scmp.eq.s32.totalorder %s15, 0
    %p99 = por %p97, %p98
    %p100 = scmp.ne.s32.totalorder %s88, %s89
    %p101 = scmp.eq.s32.totalorder %s16, 1
    %p102 = por %p100, %p101
    %p104 = scmp.ne.s32.totalorder %s89, %s103
    %p105 = scmp.eq.s32.totalorder %s16, 0
    %p106 = por %p104, %p105
    %s107 = ssub.s32 %s10, %s17
    %p108 = scmp.eq.s32.totalorder %s107, 0
    %s110 = sadd.s32 %s109, 1
    %s111 = scalar_select %p108, %s109, %s110
    %p114 = pneg %p108
    %p115 = scmp.eq.s32.totalorder %s10, 1
    %p116 = por %p114, %p115
    %p117 = scmp.ne.s32.totalorder %s109, %s112
    %p118 = scmp.eq.s32.totalorder %s10, 0
    %p119 = por %p117, %p118
    %p120 = scmp.ne.s32.totalorder %s109, %s112
    %p121 = scmp.eq.s32.totalorder %s15, 1
    %p122 = por %p120, %p121
    %p123 = scmp.ne.s32.totalorder %s112, %s113
    %p124 = scmp.eq.s32.totalorder %s15, 0
    %p125 = por %p123, %p124
    %p126 = scmp.ne.s32.totalorder %s112, %s113
    %p127 = scmp.eq.s32.totalorder %s16, 1
    %p128 = por %p126, %p127
    %p130 = scmp.ne.s32.totalorder %s113, %s129
    %p131 = scmp.eq.s32.totalorder %s16, 0
    %p132 = por %p130, %p131
    %p133 = scmp.le.s32.totalorder 1, %s10
    %p134 = scmp.lt.s32.totalorder %s10, 3
    %p135 = pnand %p133, %p134
    %p136 = pneg %p135
    // Predicated region
    $region9: #{gcn2_forward.6} parent=5 // pred_check
      _
    $region10: #{gcn2_forward.6} parent=5 // pred_check_branch
      %138 = sbr.rel (%p135) target = $region12
    $region11: #{gcn2_forward.6} parent=5 // pred_region
      %s139 = ssub.s32 %s10, 1
      // Predicated region
      $region13: #{gcn2_forward.6} parent=11 // pred_check
        %p140 = pneg %p57
      $region14: #{gcn2_forward.6} parent=11 // pred_check_branch
        %142 = sbr.rel (%p140) target = $region16
      $region15: #{gcn2_forward.6} parent=11 // pred_region
        _
      $region16: #{gcn2_forward.6} parent=11 // pred_fallthru
        _
      // Predicated region
      $region17: #{gcn2_forward.6} parent=11 // pred_check
        %p143 = pneg %p78
      $region18: #{gcn2_forward.6} parent=11 // pred_check_branch
        %145 = sbr.rel (%p143) target = $region20
      $region19: #{gcn2_forward.6} parent=11 // pred_region
        _
      $region20: #{gcn2_forward.6} parent=11 // pred_fallthru
        _
      // Predicated region
      $region21: #{gcn2_forward.6} parent=11 // pred_check
        %p146 = pneg %p99
      $region22: #{gcn2_forward.6} parent=11 // pred_check_branch
        %148 = sbr.rel (%p146) target = $region24
      $region23: #{gcn2_forward.6} parent=11 // pred_region
        _
      $region24: #{gcn2_forward.6} parent=11 // pred_fallthru
        _
    $region12: #{gcn2_forward.6} parent=5 // pred_fallthru
      _
    %p149 = scmp.lt.s32.totalorder %s10, 2
    // Predicated region
    $region25: #{gcn2_forward.6} parent=5 // pred_check
      %p150 = pneg %p149
    $region26: #{gcn2_forward.6} parent=5 // pred_check_branch
      %152 = sbr.rel (%p150) target = $region28
    $region27: #{gcn2_forward.6} parent=5 // pred_region
      // Predicated region
      $region29: #{gcn2_forward.6} parent=27 // pred_check
        %p153 = pneg %p30
      $region30: #{gcn2_forward.6} parent=27 // pred_check_branch
        %155 = sbr.rel (%p153) target = $region32
      $region31: #{gcn2_forward.6} parent=27 // pred_region
        %s156 = smul.u32 16, %s10
        %p157 = scmp.lt.s32.totalorder %s156, 31
        %s158 = scalar_select %p157, %s156, 31
        %s159 = smul.addr %s158, 8
        %s160 = scalar_lea.vmem %s0, %s159
        %s161 = smul.u32 16, %s10
      $region32: #{gcn2_forward.6} parent=27 // pred_fallthru
        _
    $region28: #{gcn2_forward.6} parent=5 // pred_fallthru
      _
    %p162 = scmp.le.s32.totalorder 1, %s10
    %p163 = scmp.lt.s32.totalorder %s10, 3
    %p164 = pnand %p162, %p163
    %p165 = pneg %p164
    // Predicated region
    $region33: #{gcn2_forward.6} parent=5 // pred_check
      _
    $region34: #{gcn2_forward.6} parent=5 // pred_check_branch
      %167 = sbr.rel (%p164) target = $region36
    $region35: #{gcn2_forward.6} parent=5 // pred_region
      %s168 = ssub.s32 %s10, 1
      %s169 = smul.u32 16, %s15
      %p170 = scmp.lt.s32.totalorder %s169, 31
      %s171 = scalar_select %p170, %s169, 31
      %s172 = smul.addr %s171, 8
      %s173 = scalar_lea.vmem %s0, %s172
      %p174 = pneg %p36
      %p175 = pneg %p33
      %p176 = pneg %p57
      %p177 = pneg %p54
      %p178 = pneg %p78
      %p179 = pneg %p75
      %p180 = pneg %p99
      %p181 = pneg %p96
      %p182 = pneg %p125
      %p183 = pneg %p122
      %s184 = smul.u32 16, %s15
      %p185 = scmp.lt.s32.totalorder %s184, 31
      %s186 = scalar_select %p185, %s184, 31
      %s187 = smul.addr %s186, 4
      %s188 = scalar_lea.vmem %s4, %s187
      %s189 = smul.u32 16, %s15
      %p190 = scmp.lt.s32.totalorder %s189, 31
      %s191 = scalar_select %p190, %s189, 31
      %s192 = smul.addr %s191, 8
      %s193 = scalar_lea.vmem %s0, %s192
      %s194 = smul.u32 16, %s15
      %s195 = smul.u32 16, %s15
      %p196 = scmp.lt.s32.totalorder %s195, 31
      %s197 = scalar_select %p196, %s195, 31
      %s198 = smul.addr %s197, 4
      %s199 = scalar_lea.vmem %s4, %s198
      %s200 = smul.u32 16, %s15
      %v202 = vld [vmem:[%s193] sm:$0xff]
      %v203 = vld [vmem:[%s193 + $0x8] sm:$0xff]
      %v204 = vld [vmem:[%s193 + $0x10] sm:$0xff]
      %v205 = vld [vmem:[%s193 + $0x18] sm:$0xff]
      %v206 = vld [vmem:[%s193 + $0x20] sm:$0xff]
      %v207 = vld [vmem:[%s193 + $0x28] sm:$0xff]
      %v208 = vld [vmem:[%s193 + $0x30] sm:$0xff]
      %v209 = vld [vmem:[%s193 + $0x38] sm:$0xff]
      %v210 = vld [vmem:[%s193 + $0x40] sm:$0xff]
      %v211 = vld [vmem:[%s193 + $0x48] sm:$0xff]
      %v212 = vld [vmem:[%s193 + $0x50] sm:$0xff]
      %v213 = vld [vmem:[%s193 + $0x58] sm:$0xff]
      %v214 = vld [vmem:[%s193 + $0x60] sm:$0xff]
      %v215 = vld [vmem:[%s193 + $0x68] sm:$0xff]
      %v216 = vld [vmem:[%s193 + $0x70] sm:$0xff]
      %v217 = vld [vmem:[%s193 + $0x78] sm:$0xff]
      %v218 = vld [vmem:[%s1] sm:$0x1]
      %v220 = vlaneseq
      %v221 = vshrl.u32 %v220, 7
      %v222 = vsub.s32 0, %v221
      %v223 = vrot.slane %v218, %v222
      %v225 = vmul.f32 %v202, %v223
      %v226 = vmul.f32 %v203, %v223
      %v227 = vmul.f32 %v204, %v223
      %v228 = vmul.f32 %v205, %v223
      %v229 = vmul.f32 %v206, %v223
      %v230 = vmul.f32 %v207, %v223
      %v231 = vmul.f32 %v208, %v223
      %v232 = vmul.f32 %v209, %v223
      %v233 = vmul.f32 %v210, %v223
      %v234 = vmul.f32 %v211, %v223
      %v235 = vmul.f32 %v212, %v223
      %v236 = vmul.f32 %v213, %v223
      %v237 = vmul.f32 %v214, %v223
      %v238 = vmul.f32 %v215, %v223
      %v239 = vmul.f32 %v216, %v223
      %v240 = vmul.f32 %v217, %v223
      %v241 = vld [vmem:[%s2] sm:$0x1]
      %v243 = vlaneseq
      %v244 = vshrl.u32 %v243, 7
      %v245 = vsub.s32 0, %v244
      %v246 = vrot.slane %v241, %v245
      %v248 = vadd.f32 %v225, %v246
      %v249 = vadd.f32 %v226, %v246
      %v250 = vadd.f32 %v227, %v246
      %v251 = vadd.f32 %v228, %v246
      %v252 = vadd.f32 %v229, %v246
      %v253 = vadd.f32 %v230, %v246
      %v254 = vadd.f32 %v231, %v246
      %v255 = vadd.f32 %v232, %v246
      %v256 = vadd.f32 %v233, %v246
      %v257 = vadd.f32 %v234, %v246
      %v258 = vadd.f32 %v235, %v246
      %v259 = vadd.f32 %v236, %v246
      %v260 = vadd.f32 %v237, %v246
      %v261 = vadd.f32 %v238, %v246
      %v262 = vadd.f32 %v239, %v246
      %v263 = vadd.f32 %v240, %v246
      %v264 = vpack.c.bf16 %v249, %v248
      %v265 = vpack.c.bf16 %v251, %v250
      %v266 = vpack.c.bf16 %v253, %v252
      %v267 = vpack.c.bf16 %v255, %v254
      %v268 = vpack.c.bf16 %v257, %v256
      %v269 = vpack.c.bf16 %v259, %v258
      %v270 = vpack.c.bf16 %v261, %v260
      %v271 = vpack.c.bf16 %v263, %v262
      %v272 = vld [vmem:[%s3] sm:$0xf]
      %v273 = vld [vmem:[%s3 + $0x4] sm:$0xf]
      %v274 = vld [vmem:[%s3 + $0x8] sm:$0xf]
      %v275 = vld [vmem:[%s3 + $0xc] sm:$0xf]
      %v276 = vld [vmem:[%s3 + $0x10] sm:$0xf]
      %v277 = vld [vmem:[%s3 + $0x14] sm:$0xf]
      %v278 = vld [vmem:[%s3 + $0x18] sm:$0xf]
      %v279 = vld [vmem:[%s3 + $0x1c] sm:$0xf]
      %v280 = vld [vmem:[%s3 + $0x20] sm:$0xf]
      %v281 = vld [vmem:[%s3 + $0x24] sm:$0xf]
      %v282 = vld [vmem:[%s3 + $0x28] sm:$0xf]
      %v283 = vld [vmem:[%s3 + $0x2c] sm:$0xf]
      %v284 = vld [vmem:[%s3 + $0x30] sm:$0xf]
      %v285 = vld [vmem:[%s3 + $0x34] sm:$0xf]
      %v286 = vld [vmem:[%s3 + $0x38] sm:$0xf]
      %v287 = vld [vmem:[%s3 + $0x3c] sm:$0xf]
      %v304 = vunpack.c.l.b16 %v272
      %v305 = vunpack.c.l.b16 %v273
      %v306 = vunpack.c.l.b16 %v274
      %v307 = vunpack.c.l.b16 %v275
      %v308 = vunpack.c.l.b16 %v276
      %v309 = vunpack.c.l.b16 %v277
      %v310 = vunpack.c.l.b16 %v278
      %v311 = vunpack.c.l.b16 %v279
      %v312 = vunpack.c.l.b16 %v280
      %v313 = vunpack.c.l.b16 %v281
      %v314 = vunpack.c.l.b16 %v282
      %v315 = vunpack.c.l.b16 %v283
      %v316 = vunpack.c.l.b16 %v284
      %v317 = vunpack.c.l.b16 %v285
      %v318 = vunpack.c.l.b16 %v286
      %v319 = vunpack.c.l.b16 %v287
      %v320 = vpack.c.b16 %v305, %v304
      %v321 = vpack.c.b16 %v307, %v306
      %v322 = vpack.c.b16 %v309, %v308
      %v323 = vpack.c.b16 %v311, %v310
      %v324 = vpack.c.b16 %v313, %v312
      %v325 = vpack.c.b16 %v315, %v314
      %v326 = vpack.c.b16 %v317, %v316
      %v327 = vpack.c.b16 %v319, %v318
      %336 = vmatprep.subr.bf16.mxu0 0
      %337 = vmatpush1.bf16.msra.mxu0 %v320
      %338 = vmatprep.subr.bf16.mxu0 0
      %339 = vmatpush1.bf16.msra.mxu0 %v321
      %340 = vmatprep.subr.bf16.mxu0 0
      %341 = vmatpush1.bf16.msra.mxu0 %v322
      %342 = vmatprep.subr.bf16.mxu0 0
      %343 = vmatpush1.bf16.msra.mxu0 %v323
      %344 = vmatprep.subr.bf16.mxu0 0
      %345 = vmatpush1.bf16.msra.mxu0 %v324
      %346 = vmatprep.subr.bf16.mxu0 0
      %347 = vmatpush1.bf16.msra.mxu0 %v325
      %348 = vmatprep.subr.bf16.mxu0 0
      %349 = vmatpush1.bf16.msra.mxu0 %v326
      %350 = vmatprep.subr.bf16.mxu0 0
      %351 = vmatpush1.bf16.msra.mxu0 %v327
      %352 = vmatprep.subr.bf16.mxu0 0
      %353 = vmatpush1.bf16.msra.mxu0 0
      %354 = vmatprep.subr.bf16.mxu0 0
      %355 = vmatpush1.bf16.msra.mxu0 0
      %356 = vmatprep.subr.bf16.mxu0 0
      %357 = vmatpush1.bf16.msra.mxu0 0
      %358 = vmatprep.subr.bf16.mxu0 0
      %359 = vmatpush1.bf16.msra.mxu0 0
      %360 = vmatprep.subr.bf16.mxu0 0
      %361 = vmatpush1.bf16.msra.mxu0 0
      %362 = vmatprep.subr.bf16.mxu0 0
      %363 = vmatpush1.bf16.msra.mxu0 0
      %364 = vmatprep.subr.bf16.mxu0 0
      %365 = vmatpush1.bf16.msra.mxu0 0
      %366 = vmatprep.subr.bf16.mxu0 0
      %367 = vmatpush1.bf16.msra.mxu0 0
      %368 = vmatprep.mubr.bf16.mxu0 0
      %369 = vmatmul.mubr.bf16.gmra.mrb[0].mxu0 %v264
      %v370 = vpop.f32.mrb[0].mxu0
      %v371 = vadd.f32 0.0, %v370
      %v372 = vpop.f32.mrb[0].mxu0
      %v373 = vpop.f32.mrb[0].mxu0
      %v374 = vadd.f32 0.0, %v373
      %v375 = vpop.f32.mrb[0].mxu0
      %376 = vmatprep.mubr.bf16.mxu0 0
      %377 = vmatmul.mubr.bf16.gmra.mrb[0].mxu0 %v265
      %v378 = vpop.f32.mrb[0].mxu0
      %v379 = vadd.f32 0.0, %v378
      %v380 = vpop.f32.mrb[0].mxu0
      %v381 = vpop.f32.mrb[0].mxu0
      %v382 = vadd.f32 0.0, %v381
      %v383 = vpop.f32.mrb[0].mxu0
      %384 = vmatprep.mubr.bf16.mxu0 0
      %385 = vmatmul.mubr.bf16.gmra.mrb[0].mxu0 %v266
      %v386 = vpop.f32.mrb[0].mxu0
      %v387 = vadd.f32 0.0, %v386
      %v388 = vpop.f32.mrb[0].mxu0
      %v389 = vpop.f32.mrb[0].mxu0
      %v390 = vadd.f32 0.0, %v389
      %v391 = vpop.f32.mrb[0].mxu0
      %392 = vmatprep.mubr.bf16.mxu0 0
      %393 = vmatmul.mubr.bf16.gmra.mrb[0].mxu0 %v267
      %v394 = vpop.f32.mrb[0].mxu0
      %v395 = vadd.f32 0.0, %v394
      %v396 = vpop.f32.mrb[0].mxu0
      %v397 = vpop.f32.mrb[0].mxu0
      %v398 = vadd.f32 0.0, %v397
      %v399 = vpop.f32.mrb[0].mxu0
      %400 = vmatprep.mubr.bf16.mxu0 0
      %401 = vmatmul.mubr.bf16.gmra.mrb[0].mxu0 %v268
      %v402 = vpop.f32.mrb[0].mxu0
      %v403 = vadd.f32 0.0, %v402
      %v404 = vpop.f32.mrb[0].mxu0
      %v405 = vpop.f32.mrb[0].mxu0
      %v406 = vadd.f32 0.0, %v405
      %v407 = vpop.f32.mrb[0].mxu0
      %408 = vmatprep.mubr.bf16.mxu0 0
      %409 = vmatmul.mubr.bf16.gmra.mrb[0].mxu0 %v269
      %v410 = vpop.f32.mrb[0].mxu0
      %v411 = vadd.f32 0.0, %v410
      %v412 = vpop.f32.mrb[0].mxu0
      %v413 = vpop.f32.mrb[0].mxu0
      %v414 = vadd.f32 0.0, %v413
      %v415 = vpop.f32.mrb[0].mxu0
      %416 = vmatprep.mubr.bf16.mxu0 0
      %417 = vmatmul.mubr.bf16.gmra.mrb[0].mxu0 %v270
      %v418 = vpop.f32.mrb[0].mxu0
      %v419 = vadd.f32 0.0, %v418
      %v420 = vpop.f32.mrb[0].mxu0
      %v421 = vpop.f32.mrb[0].mxu0
      %v422 = vadd.f32 0.0, %v421
      %v423 = vpop.f32.mrb[0].mxu0
      %424 = vmatprep.mubr.bf16.mxu0 0
      %425 = vmatmul.mubr.bf16.gmra.mrb[0].mxu0 %v271
      %v426 = vpop.f32.mrb[0].mxu0
      %v427 = vadd.f32 0.0, %v426
      %v428 = vpop.f32.mrb[0].mxu0
      %v429 = vpop.f32.mrb[0].mxu0
      %v430 = vadd.f32 0.0, %v429
      %v431 = vpop.f32.mrb[0].mxu0
      %432 = vdwg.mxu0
      %v433 = vpack.c.bf16 %v374, %v371
      %v434 = vpack.c.bf16 %v382, %v379
      %v435 = vpack.c.bf16 %v390, %v387
      %v436 = vpack.c.bf16 %v398, %v395
      %v437 = vpack.c.bf16 %v406, %v403
      %v438 = vpack.c.bf16 %v414, %v411
      %v439 = vpack.c.bf16 %v422, %v419
      %v440 = vpack.c.bf16 %v430, %v427
      %v449 = vunpack.c.l.b16 %v433
      %v450 = vunpack.c.h.b16 %v433
      %v451 = vunpack.c.l.b16 %v434
      %v452 = vunpack.c.h.b16 %v434
      %v453 = vunpack.c.l.b16 %v435
      %v454 = vunpack.c.h.b16 %v435
      %v455 = vunpack.c.l.b16 %v436
      %v456 = vunpack.c.h.b16 %v436
      %v457 = vunpack.c.l.b16 %v437
      %v458 = vunpack.c.h.b16 %v437
      %v459 = vunpack.c.l.b16 %v438
      %v460 = vunpack.c.h.b16 %v438
      %v461 = vunpack.c.l.b16 %v439
      %v462 = vunpack.c.h.b16 %v439
      %v463 = vunpack.c.l.b16 %v440
      %v464 = vunpack.c.h.b16 %v440
      %v465 = vpack.c.b16 %v449, %v449
      %v466 = vpack.c.b16 %v450, %v450
      %v467 = vpack.c.b16 %v451, %v451
      %v468 = vpack.c.b16 %v452, %v452
      %v469 = vpack.c.b16 %v453, %v453
      %v470 = vpack.c.b16 %v454, %v454
      %v471 = vpack.c.b16 %v455, %v455
      %v472 = vpack.c.b16 %v456, %v456
      %v473 = vpack.c.b16 %v457, %v457
      %v474 = vpack.c.b16 %v458, %v458
      %v475 = vpack.c.b16 %v459, %v459
      %v476 = vpack.c.b16 %v460, %v460
      %v477 = vpack.c.b16 %v461, %v461
      %v478 = vpack.c.b16 %v462, %v462
      %v479 = vpack.c.b16 %v463, %v463
      %v480 = vpack.c.b16 %v464, %v464
      %497 = vst [vmem:[%s199] sm:$0xf] %v465
      %498 = vst [vmem:[%s199 + $0x4] sm:$0xf] %v466
      %499 = vst [vmem:[%s199 + $0x8] sm:$0xf] %v467
      %500 = vst [vmem:[%s199 + $0xc] sm:$0xf] %v468
      %501 = vst [vmem:[%s199 + $0x10] sm:$0xf] %v469
      %502 = vst [vmem:[%s199 + $0x14] sm:$0xf] %v470
      %503 = vst [vmem:[%s199 + $0x18] sm:$0xf] %v471
      %504 = vst [vmem:[%s199 + $0x1c] sm:$0xf] %v472
      %505 = vst [vmem:[%s199 + $0x20] sm:$0xf] %v473
      %506 = vst [vmem:[%s199 + $0x24] sm:$0xf] %v474
      %507 = vst [vmem:[%s199 + $0x28] sm:$0xf] %v475
      %508 = vst [vmem:[%s199 + $0x2c] sm:$0xf] %v476
      %509 = vst [vmem:[%s199 + $0x30] sm:$0xf] %v477
      %510 = vst [vmem:[%s199 + $0x34] sm:$0xf] %v478
      %511 = vst [vmem:[%s199 + $0x38] sm:$0xf] %v479
      %512 = vst [vmem:[%s199 + $0x3c] sm:$0xf] %v480
      %s513 = smul.u32 16, %s15
      %p514 = scmp.lt.s32.totalorder %s513, 31
      %s515 = scalar_select %p514, %s513, 31
      %s516 = smul.addr %s515, 4
      %s517 = scalar_lea.vmem %s4, %s516
      // Predicated region
      $region37: #{gcn2_forward.6} parent=35 // pred_check
        %p518 = pneg %p122
      $region38: #{gcn2_forward.6} parent=35 // pred_check_branch
        %520 = sbr.rel (%p518) target = $region40
      $region39: #{gcn2_forward.6} parent=35 // pred_region
        %s521 = smul.u32 16, %s15
      $region40: #{gcn2_forward.6} parent=35 // pred_fallthru
        _
    $region36: #{gcn2_forward.6} parent=5 // pred_fallthru
      _
    %p522 = scmp.le.s32.totalorder 2, %s10
    // Predicated region
    $region41: #{gcn2_forward.6} parent=5 // pred_check
      %p523 = pneg %p522
    $region42: #{gcn2_forward.6} parent=5 // pred_check_branch
      %525 = sbr.rel (%p523) target = $region44
    $region43: #{gcn2_forward.6} parent=5 // pred_region
      %s526 = ssub.s32 %s10, 2
      // Predicated region
      $region45: #{gcn2_forward.6} parent=43 // pred_check
        %p527 = pneg %p128
      $region46: #{gcn2_forward.6} parent=43 // pred_check_branch
        %529 = sbr.rel (%p527) target = $region48
      $region47: #{gcn2_forward.6} parent=43 // pred_region
        %s530 = smul.u32 16, %s16
        %p531 = scmp.lt.s32.totalorder %s530, 31
        %s532 = scalar_select %p531, %s530, 31
        %s533 = smul.addr %s532, 4
        %s534 = scalar_lea.vmem %s4, %s533
      $region48: #{gcn2_forward.6} parent=43 // pred_fallthru
        _
    $region44: #{gcn2_forward.6} parent=5 // pred_fallthru
      _
  $region6: #{gcn2_forward.6} parent=0 // loop_footer
    %s14 = sadd.s32 1, %s10
  $region7: #{gcn2_forward.6} parent=0 // loop_footer_branch
    %9 = sbr.rel target = $region3
  $region8: #{gcn2_forward.6} parent=0 // loop_exit
    _

// kernel: gcn2_forward.7
$region0: #{gcn2_forward.7}
  #allocation0 [shape = 'u32[]', space=smem, size = 0x4, offset = 0x4, fixed_abs, tag = 'smem constant byte address 0x4 - core index']
  #allocation1 [shape = 'u32[144,128]{1,0:T(1,128)}', space=vmem, size = 0x12000, scoped, tag = 'internal scratch']
  #allocation2 [shape = 'f32[128,128]{1,0:T(8,128)}', space=vmem, size = 0x10000, scoped, tag = 'scratch operand']
  %s0 = inlined_call_operand.vmem [shape: bf16[256,256], index: 0, kind: input, shape index: {}]
  %s1 = inlined_call_operand.vmem [shape: bf16[256,128], index: 1, kind: input, shape index: {}]
  %s2 = inlined_call_operand.vmem [shape: f32[256,128], index: 2, kind: input, shape index: {}]
  %s3 = inlined_call_operand.vmem [shape: f32[1,128], index: 3, kind: input, shape index: {}]
  %s4 = inlined_call_operand.vmem [shape: f32[256,128], index: 4, kind: output, shape index: {}]
  %s5 = sld [smem:[#allocation0]]
  $region98: #{gcn2_forward.7} parent=0
    _
  %s7 = ssub.s32 1, %s5
  %s8 = scalar_select 0, %s7, %s5
  $region1: #{gcn2_forward.7} parent=0
    #allocation3 [shape = 'u8[65536]{0}', space=vmem, size = 0x10000, scoped, tag = 'input window, operand 0']
    loop: start=0, step=1, limit=6
    $region2: #{gcn2_forward.7} parent=1 // loop_pre_header
      _
    $region3: #{gcn2_forward.7} parent=1 // loop_header
      %s10 = sphi 0, %s14
      %p11 = scmp.ge.s32.totalorder %s10, 6
      %s17 = sphi 0, %s29
      %s18 = sphi 0, %s25
      %s19 = sphi 0, %s17
      %s20 = sphi 0, %s18
      %s21 = sphi 0, %s19
      %s22 = sphi 0, %s20
      %s34 = sphi 0, %s36
      %s37 = sphi 0, %s34
      %s38 = sphi 0, %s37
      %s54 = sphi 0, %s38
      %s60 = sphi 0, %s62
      %s63 = sphi 0, %s60
      %s64 = sphi 0, %s63
      %s80 = sphi 0, %s64
      %s86 = sphi 0, %s88
      %s89 = sphi 0, %s86
      %s90 = sphi 0, %s89
      %s106 = sphi 0, %s90
      %s110 = sphi 0, %s110
      %s112 = sphi 0, %s110
      %s113 = sphi 0, %s112
      %s127 = sphi 0, %s113
      %s133 = sphi 0, %s135
      %s136 = sphi 0, %s133
      %s137 = sphi 0, %s136
      %s153 = sphi 0, %s137
    $region4: #{gcn2_forward.7} parent=1 // loop_header_branch
      %13 = sbr.rel (%p11) target = $region8
    $region5: #{gcn2_forward.7} parent=1 // loop_body
      %s15 = ssub.s32 %s10, 1
      %s16 = ssub.s32 %s10, 2
      %s23 = sadd.s32 1, %s18
      %p24 = scmp.ge.s32.totalorder %s23, 2
      %s25 = scalar_select %p24, 0, %s23
      %s26 = sadd.s32 1, %s17
      %s27 = scalar_select %p24, %s26, %s17
      %p28 = scmp.ge.s32.totalorder %s27, 2
      %s29 = scalar_select %p28, 0, %s27
      %s30 = ssub.s32 %s17, %s29
      %s31 = ssub.s32 %s18, %s25
      %s32 = sor.u32 %s30, %s31
      %p33 = scmp.eq.s32.totalorder %s32, 0
      %s35 = sadd.s32 %s34, 1
      %s36 = scalar_select %p33, %s34, %s35
      %p39 = pneg %p33
      %p40 = scmp.eq.s32.totalorder %s10, 3
      %p41 = por %p39, %p40
      %p42 = scmp.ne.s32.totalorder %s34, %s37
      %p43 = scmp.eq.s32.totalorder %s10, 0
      %p44 = por %p42, %p43
      %p45 = scmp.ne.s32.totalorder %s34, %s37
      %p46 = scmp.eq.s32.totalorder %s15, 3
      %p47 = por %p45, %p46
      %p48 = scmp.ne.s32.totalorder %s37, %s38
      %p49 = scmp.eq.s32.totalorder %s15, 0
      %p50 = por %p48, %p49
      %p51 = scmp.ne.s32.totalorder %s37, %s38
      %p52 = scmp.eq.s32.totalorder %s16, 3
      %p53 = por %p51, %p52
      %p55 = scmp.ne.s32.totalorder %s38, %s54
      %p56 = scmp.eq.s32.totalorder %s16, 0
      %p57 = por %p55, %p56
      %s58 = ssub.s32 %s18, %s25
      %p59 = scmp.eq.s32.totalorder %s58, 0
      %s61 = sadd.s32 %s60, 1
      %s62 = scalar_select %p59, %s60, %s61
      %p65 = pneg %p59
      %p66 = scmp.eq.s32.totalorder %s10, 3
      %p67 = por %p65, %p66
      %p68 = scmp.ne.s32.totalorder %s60, %s63
      %p69 = scmp.eq.s32.totalorder %s10, 0
      %p70 = por %p68, %p69
      %p71 = scmp.ne.s32.totalorder %s60, %s63
      %p72 = scmp.eq.s32.totalorder %s15, 3
      %p73 = por %p71, %p72
      %p74 = scmp.ne.s32.totalorder %s63, %s64
      %p75 = scmp.eq.s32.totalorder %s15, 0
      %p76 = por %p74, %p75
      %p77 = scmp.ne.s32.totalorder %s63, %s64
      %p78 = scmp.eq.s32.totalorder %s16, 3
      %p79 = por %p77, %p78
      %p81 = scmp.ne.s32.totalorder %s64, %s80
      %p82 = scmp.eq.s32.totalorder %s16, 0
      %p83 = por %p81, %p82
      %s84 = ssub.s32 %s17, %s29
      %p85 = scmp.eq.s32.totalorder %s84, 0
      %s87 = sadd.s32 %s86, 1
      %s88 = scalar_select %p85, %s86, %s87
      %p91 = pneg %p85
      %p92 = scmp.eq.s32.totalorder %s10, 3
      %p93 = por %p91, %p92
      %p94 = scmp.ne.s32.totalorder %s86, %s89
      %p95 = scmp.eq.s32.totalorder %s10, 0
      %p96 = por %p94, %p95
      %p97 = scmp.ne.s32.totalorder %s86, %s89
      %p98 = scmp.eq.s32.totalorder %s15, 3
      %p99 = por %p97, %p98
      %p100 = scmp.ne.s32.totalorder %s89, %s90
      %p101 = scmp.eq.s32.totalorder %s15, 0
      %p102 = por %p100, %p101
      %p103 = scmp.ne.s32.totalorder %s89, %s90
      %p104 = scmp.eq.s32.totalorder %s16, 3
      %p105 = por %p103, %p104
      %p107 = scmp.ne.s32.totalorder %s90, %s106
      %p108 = scmp.eq.s32.totalorder %s16, 0
      %p109 = por %p107, %p108
      %s111 = sadd.s32 %s110, 1
      %p114 = scmp.eq.s32.totalorder %s10, 3
      %p115 = scmp.ne.s32.totalorder %s110, %s112
      %p116 = scmp.eq.s32.totalorder %s10, 0
      %p117 = por %p115, %p116
      %p118 = scmp.ne.s32.totalorder %s110, %s112
      %p119 = scmp.eq.s32.totalorder %s15, 3
      %p120 = por %p118, %p119
      %p121 = scmp.ne.s32.totalorder %s112, %s113
      %p122 = scmp.eq.s32.totalorder %s15, 0
      %p123 = por %p121, %p122
      %p124 = scmp.ne.s32.totalorder %s112, %s113
      %p125 = scmp.eq.s32.totalorder %s16, 3
      %p126 = por %p124, %p125
      %p128 = scmp.ne.s32.totalorder %s113, %s127
      %p129 = scmp.eq.s32.totalorder %s16, 0
      %p130 = por %p128, %p129
      %s131 = ssub.s32 %s17, %s29
      %p132 = scmp.eq.s32.totalorder %s131, 0
      %s134 = sadd.s32 %s133, 1
      %s135 = scalar_select %p132, %s133, %s134
      %p138 = pneg %p132
      %p139 = scmp.eq.s32.totalorder %s10, 3
      %p140 = por %p138, %p139
      %p141 = scmp.ne.s32.totalorder %s133, %s136
      %p142 = scmp.eq.s32.totalorder %s10, 0
      %p143 = por %p141, %p142
      %p144 = scmp.ne.s32.totalorder %s133, %s136
      %p145 = scmp.eq.s32.totalorder %s15, 3
      %p146 = por %p144, %p145
      %p147 = scmp.ne.s32.totalorder %s136, %s137
      %p148 = scmp.eq.s32.totalorder %s15, 0
      %p149 = por %p147, %p148
      %p150 = scmp.ne.s32.totalorder %s136, %s137
      %p151 = scmp.eq.s32.totalorder %s16, 3
      %p152 = por %p150, %p151
      %p154 = scmp.ne.s32.totalorder %s137, %s153
      %p155 = scmp.eq.s32.totalorder %s16, 0
      %p156 = por %p154, %p155
      %p157 = scmp.le.s32.totalorder 1, %s10
      %p158 = scmp.lt.s32.totalorder %s10, 5
      %p159 = pnand %p157, %p158
      %p160 = pneg %p159
      // Predicated region
      $region9: #{gcn2_forward.7} parent=5 // pred_check
        _
      $region10: #{gcn2_forward.7} parent=5 // pred_check_branch
        %162 = sbr.rel (%p159) target = $region12
      $region11: #{gcn2_forward.7} parent=5 // pred_region
        %s163 = ssub.s32 %s10, 1
        // Predicated region
        $region13: #{gcn2_forward.7} parent=11 // pred_check
          %p164 = pneg %p123
        $region14: #{gcn2_forward.7} parent=11 // pred_check_branch
          %166 = sbr.rel (%p164) target = $region16
        $region15: #{gcn2_forward.7} parent=11 // pred_region
          _
        $region16: #{gcn2_forward.7} parent=11 // pred_fallthru
          _
      $region12: #{gcn2_forward.7} parent=5 // pred_fallthru
        _
      %p167 = scmp.lt.s32.totalorder %s10, 4
      // Predicated region
      $region17: #{gcn2_forward.7} parent=5 // pred_check
        %p168 = pneg %p167
      $region18: #{gcn2_forward.7} parent=5 // pred_check_branch
        %170 = sbr.rel (%p168) target = $region20
      $region19: #{gcn2_forward.7} parent=5 // pred_region
        // Predicated region
        $region21: #{gcn2_forward.7} parent=19 // pred_check
          %p171 = pneg %p44
        $region22: #{gcn2_forward.7} parent=19 // pred_check_branch
          %173 = sbr.rel (%p171) target = $region24
        $region23: #{gcn2_forward.7} parent=19 // pred_region
          %s174 = sand.u32 %s34, 1
          %s175 = sand.u32 %s34, 1
          %s176 = smul.addr %s175, 64
          %s177 = scalar_lea.vmem [#allocation3], %s176
          %s178 = smul.u32 16, %s17
          %s179 = smul.addr %s178, 2
          %s180 = sadd.s32 %s18, %s179
          %s181 = smul.addr %s180, 4
          %s182 = scalar_lea.vmem %s0, %s181
          // Predicated region
          $region25: #{gcn2_forward.7} parent=23 // pred_check
            _
          $region26: #{gcn2_forward.7} parent=23 // pred_check_branch
            %184 = sbr.rel (0) target = $region28
          $region27: #{gcn2_forward.7} parent=23 // pred_region
            // Predicated region
            $region29: #{gcn2_forward.7} parent=27 // pred_check
              _
            $region30: #{gcn2_forward.7} parent=27 // pred_check_branch
              %186 = sbr.rel target = $region32
            $region31: #{gcn2_forward.7} parent=27 // pred_region
              // Predicated region
              $region44: #{gcn2_forward.7} parent=31 // pred_check
                _
              $region45: #{gcn2_forward.7} parent=31 // pred_check_branch
                %231 = sbr.rel (0) target = $region47
              $region46: #{gcn2_forward.7} parent=31 // pred_region
                loop: start=0, step=1, limit=1
                $region48: #{gcn2_forward.7} parent=46 // loop_pre_header
                  _
                $region49: #{gcn2_forward.7} parent=46 // loop_header
                  %s233 = sphi 0, %s237
                  %p234 = scmp.ge.s32.totalorder %s233, 1
                  %s238 = sphi %s182, %s182
                  %s239 = sphi %s177, %s177
                $region50: #{gcn2_forward.7} parent=46 // loop_header_branch
                  %236 = sbr.rel (%p234) target = $region54
                $region51: #{gcn2_forward.7} parent=46 // loop_body
                  _
                $region52: #{gcn2_forward.7} parent=46 // loop_footer
                  %s237 = sadd.s32 1, %s233
                $region53: #{gcn2_forward.7} parent=46 // loop_footer_branch
                  %232 = sbr.rel target = $region49
                $region54: #{gcn2_forward.7} parent=46 // loop_exit
                  _
                loop: start=0, step=1, limit=1
                $region55: #{gcn2_forward.7} parent=46 // loop_pre_header
                  _
                $region56: #{gcn2_forward.7} parent=46 // loop_header
                  %s242 = sphi 0, %s246
                  %p243 = scmp.ge.s32.totalorder %s242, 1
                  %s247 = sphi %s182, %s182
                  %s248 = sphi %s177, %s177
                $region57: #{gcn2_forward.7} parent=46 // loop_header_branch
                  %245 = sbr.rel (%p243) target = $region61
                $region58: #{gcn2_forward.7} parent=46 // loop_body
                  %v249 = vld [vmem:[%s247] sm:$0xf]
                  %250 = vst [vmem:[%s248] sm:$0xf] %v249
                  %v251 = vld [vmem:[%s247 + $0x8] sm:$0xf]
                  %252 = vst [vmem:[%s248 + $0x4] sm:$0xf] %v251
                  %v253 = vld [vmem:[%s247 + $0x10] sm:$0xf]
                  %254 = vst [vmem:[%s248 + $0x8] sm:$0xf] %v253
                  %v255 = vld [vmem:[%s247 + $0x18] sm:$0xf]
                  %256 = vst [vmem:[%s248 + $0xc] sm:$0xf] %v255
                  %v257 = vld [vmem:[%s247 + $0x20] sm:$0xf]
                  %258 = vst [vmem:[%s248 + $0x10] sm:$0xf] %v257
                  %v259 = vld [vmem:[%s247 + $0x28] sm:$0xf]
                  %260 = vst [vmem:[%s248 + $0x14] sm:$0xf] %v259
                  %v261 = vld [vmem:[%s247 + $0x30] sm:$0xf]
                  %262 = vst [vmem:[%s248 + $0x18] sm:$0xf] %v261
                  %v263 = vld [vmem:[%s247 + $0x38] sm:$0xf]
                  %264 = vst [vmem:[%s248 + $0x1c] sm:$0xf] %v263
                  %v265 = vld [vmem:[%s247 + $0x40] sm:$0xf]
                  %266 = vst [vmem:[%s248 + $0x20] sm:$0xf] %v265
                  %v267 = vld [vmem:[%s247 + $0x48] sm:$0xf]
                  %268 = vst [vmem:[%s248 + $0x24] sm:$0xf] %v267
                  %v269 = vld [vmem:[%s247 + $0x50] sm:$0xf]
                  %270 = vst [vmem:[%s248 + $0x28] sm:$0xf] %v269
                  %v271 = vld [vmem:[%s247 + $0x58] sm:$0xf]
                  %272 = vst [vmem:[%s248 + $0x2c] sm:$0xf] %v271
                  %v273 = vld [vmem:[%s247 + $0x60] sm:$0xf]
                  %274 = vst [vmem:[%s248 + $0x30] sm:$0xf] %v273
                  %v275 = vld [vmem:[%s247 + $0x68] sm:$0xf]
                  %276 = vst [vmem:[%s248 + $0x34] sm:$0xf] %v275
                  %v277 = vld [vmem:[%s247 + $0x70] sm:$0xf]
                  %278 = vst [vmem:[%s248 + $0x38] sm:$0xf] %v277
                  %v279 = vld [vmem:[%s247 + $0x78] sm:$0xf]
                  %280 = vst [vmem:[%s248 + $0x3c] sm:$0xf] %v279
                $region59: #{gcn2_forward.7} parent=46 // loop_footer
                  %s246 = sadd.s32 1, %s242
                $region60: #{gcn2_forward.7} parent=46 // loop_footer_branch
                  %241 = sbr.rel target = $region56
                $region61: #{gcn2_forward.7} parent=46 // loop_exit
                  _
              $region47: #{gcn2_forward.7} parent=31 // pred_fallthru
                _
            $region32: #{gcn2_forward.7} parent=27 // pred_fallthru
              _
            // Predicated region
            $region33: #{gcn2_forward.7} parent=27 // pred_check
              _
            $region34: #{gcn2_forward.7} parent=27 // pred_check_branch
              %188 = sbr.rel (0) target = $region36
            $region35: #{gcn2_forward.7} parent=27 // pred_region
              loop: start=0, step=1, limit=1
              $region37: #{gcn2_forward.7} parent=35 // loop_pre_header
                _
              $region38: #{gcn2_forward.7} parent=35 // loop_header
                %s191 = sphi 0, %s195
                %p192 = scmp.ge.s32.totalorder %s191, 1
                %s196 = sphi %s182, %s182
                %s197 = sphi %s177, %s177
              $region39: #{gcn2_forward.7} parent=35 // loop_header_branch
                %194 = sbr.rel (%p192) target = $region43
              $region40: #{gcn2_forward.7} parent=35 // loop_body
                %v198 = vld [vmem:[%s196] sm:$0xf]
                %199 = vst [vmem:[%s197] sm:$0xf] %v198
                %v200 = vld [vmem:[%s196 + $0x8] sm:$0xf]
                %201 = vst [vmem:[%s197 + $0x4] sm:$0xf] %v200
                %v202 = vld [vmem:[%s196 + $0x10] sm:$0xf]
                %203 = vst [vmem:[%s197 + $0x8] sm:$0xf] %v202
                %v204 = vld [vmem:[%s196 + $0x18] sm:$0xf]
                %205 = vst [vmem:[%s197 + $0xc] sm:$0xf] %v204
                %v206 = vld [vmem:[%s196 + $0x20] sm:$0xf]
                %207 = vst [vmem:[%s197 + $0x10] sm:$0xf] %v206
                %v208 = vld [vmem:[%s196 + $0x28] sm:$0xf]
                %209 = vst [vmem:[%s197 + $0x14] sm:$0xf] %v208
                %v210 = vld [vmem:[%s196 + $0x30] sm:$0xf]
                %211 = vst [vmem:[%s197 + $0x18] sm:$0xf] %v210
                %v212 = vld [vmem:[%s196 + $0x38] sm:$0xf]
                %213 = vst [vmem:[%s197 + $0x1c] sm:$0xf] %v212
                %v214 = vld [vmem:[%s196 + $0x40] sm:$0xf]
                %215 = vst [vmem:[%s197 + $0x20] sm:$0xf] %v214
                %v216 = vld [vmem:[%s196 + $0x48] sm:$0xf]
                %217 = vst [vmem:[%s197 + $0x24] sm:$0xf] %v216
                %v218 = vld [vmem:[%s196 + $0x50] sm:$0xf]
                %219 = vst [vmem:[%s197 + $0x28] sm:$0xf] %v218
                %v220 = vld [vmem:[%s196 + $0x58] sm:$0xf]
                %221 = vst [vmem:[%s197 + $0x2c] sm:$0xf] %v220
                %v222 = vld [vmem:[%s196 + $0x60] sm:$0xf]
                %223 = vst [vmem:[%s197 + $0x30] sm:$0xf] %v222
                %v224 = vld [vmem:[%s196 + $0x68] sm:$0xf]
                %225 = vst [vmem:[%s197 + $0x34] sm:$0xf] %v224
                %v226 = vld [vmem:[%s196 + $0x70] sm:$0xf]
                %227 = vst [vmem:[%s197 + $0x38] sm:$0xf] %v226
                %v228 = vld [vmem:[%s196 + $0x78] sm:$0xf]
                %229 = vst [vmem:[%s197 + $0x3c] sm:$0xf] %v228
              $region41: #{gcn2_forward.7} parent=35 // loop_footer
                %s195 = sadd.s32 1, %s191
              $region42: #{gcn2_forward.7} parent=35 // loop_footer_branch
                %190 = sbr.rel target = $region38
              $region43: #{gcn2_forward.7} parent=35 // loop_exit
                _
            $region36: #{gcn2_forward.7} parent=27 // pred_fallthru
              _
          $region28: #{gcn2_forward.7} parent=23 // pred_fallthru
            _
          %281 = vnop
        $region24: #{gcn2_forward.7} parent=19 // pred_fallthru
          _
        // Predicated region
        $region62: #{gcn2_forward.7} parent=19 // pred_check
          %p282 = pneg %p70
        $region63: #{gcn2_forward.7} parent=19 // pred_check_branch
          %284 = sbr.rel (%p282) target = $region65
        $region64: #{gcn2_forward.7} parent=19 // pred_region
          %s285 = smul.u32 16, %s18
          %p286 = scmp.lt.s32.totalorder %s285, 31
          %s287 = scalar_select %p286, %s285, 31
          %s288 = smul.addr %s287, 4
          %s289 = scalar_lea.vmem %s1, %s288
          %s290 = smul.u32 16, %s18
        $region65: #{gcn2_forward.7} parent=19 // pred_fallthru
          _
        // Predicated region
        $region66: #{gcn2_forward.7} parent=19 // pred_check
          %p291 = pneg %p96
        $region67: #{gcn2_forward.7} parent=19 // pred_check_branch
          %293 = sbr.rel (%p291) target = $region69
        $region68: #{gcn2_forward.7} parent=19 // pred_region
          %s294 = smul.u32 16, %s17
          %p295 = scmp.lt.s32.totalorder %s294, 31
          %s296 = scalar_select %p295, %s294, 31
          %s297 = smul.addr %s296, 8
          %s298 = scalar_lea.vmem %s2, %s297
          %s299 = smul.u32 16, %s17
        $region69: #{gcn2_forward.7} parent=19 // pred_fallthru
          _
      $region20: #{gcn2_forward.7} parent=5 // pred_fallthru
        _
      %p300 = scmp.le.s32.totalorder 1, %s10
      %p301 = scmp.lt.s32.totalorder %s10, 5
      %p302 = pnand %p300, %p301
      %p303 = pneg %p302
      // Predicated region
      $region70: #{gcn2_forward.7} parent=5 // pred_check
        _
      $region71: #{gcn2_forward.7} parent=5 // pred_check_branch
        %305 = sbr.rel (%p302) target = $region73
      $region72: #{gcn2_forward.7} parent=5 // pred_region
        %s306 = ssub.s32 %s10, 1
        %s307 = sand.u32 %s37, 1
        %s308 = sand.u32 %s37, 1
        %s309 = smul.addr %s308, 64
        %s310 = scalar_lea.vmem [#allocation3], %s309
        // Predicated region
        $region74: #{gcn2_forward.7} parent=72 // pred_check
          %p311 = pneg %p50
        $region75: #{gcn2_forward.7} parent=72 // pred_check_branch
          %313 = sbr.rel (%p311) target = $region77
        $region76: #{gcn2_forward.7} parent=72 // pred_region
          _
        $region77: #{gcn2_forward.7} parent=72 // pred_fallthru
          _
        %s314 = sand.u32 %s37, 1
        %s315 = sand.u32 %s37, 1
        %s316 = smul.addr %s315, 64
        %s317 = scalar_lea.vmem [#allocation3], %s316
        %p318 = pneg %p50
        %p319 = pneg %p47
        %s320 = smul.u32 16, %s20
        %p321 = scmp.lt.s32.totalorder %s320, 31
        %s322 = scalar_select %p321, %s320, 31
        %s323 = smul.addr %s322, 4
        %s324 = scalar_lea.vmem %s1, %s323
        %p325 = pneg %p76
        %p326 = pneg %p73
        %s327 = smul.u32 16, %s19
        %p328 = scmp.lt.s32.totalorder %s327, 31
        %s329 = scalar_select %p328, %s327, 31
        %s330 = smul.addr %s329, 8
        %s331 = scalar_lea.vmem %s2, %s330
        %p332 = pneg %p102
        %p333 = pneg %p99
        %p334 = pneg %p123
        %p335 = pneg %p120
        %p336 = pneg %p149
        %p337 = pneg %p146
        %s338 = smul.u32 16, %s19
        %p339 = scmp.lt.s32.totalorder %s338, 31
        %s340 = scalar_select %p339, %s338, 31
        %s341 = smul.addr %s340, 8
        %s342 = scalar_lea.vmem %s4, %s341
        %s343 = smul.u32 16, %s19
        %s344 = smul.u32 16, %s20
        %p345 = scmp.lt.s32.totalorder %s344, 31
        %s346 = scalar_select %p345, %s344, 31
        %s347 = smul.addr %s346, 4
        %s348 = scalar_lea.vmem %s1, %s347
        %s349 = smul.u32 16, %s20
        %s350 = smul.u32 16, %s19
        %p351 = scmp.lt.s32.totalorder %s350, 31
        %s352 = scalar_select %p351, %s350, 31
        %s353 = smul.addr %s352, 8
        %s354 = scalar_lea.vmem %s2, %s353
        %s355 = smul.u32 16, %s19
        %s356 = smul.u32 16, %s19
        %p357 = scmp.lt.s32.totalorder %s356, 31
        %s358 = scalar_select %p357, %s356, 31
        %s359 = smul.addr %s358, 8
        %s360 = scalar_lea.vmem %s4, %s359
        %s361 = smul.u32 16, %s19
        %p363 = scmp.eq.s32.totalorder %s20, 0
        // Predicated region
        $region78: #{gcn2_forward.7} parent=72 // pred_check
          %p364 = pneg %p363
        $region79: #{gcn2_forward.7} parent=72 // pred_check_branch
          %366 = sbr.rel (%p364) target = $region81
        $region80: #{gcn2_forward.7} parent=72 // pred_region
          %367 = vst [vmem:[#allocation2] sm:$0xff] 0.0
          %368 = vst [vmem:[#allocation2 + $0x8] sm:$0xff] 0.0
          %369 = vst [vmem:[#allocation2 + $0x10] sm:$0xff] 0.0
          %370 = vst [vmem:[#allocation2 + $0x18] sm:$0xff] 0.0
          %371 = vst [vmem:[#allocation2 + $0x20] sm:$0xff] 0.0
          %372 = vst [vmem:[#allocation2 + $0x28] sm:$0xff] 0.0
          %373 = vst [vmem:[#allocation2 + $0x30] sm:$0xff] 0.0
          %374 = vst [vmem:[#allocation2 + $0x38] sm:$0xff] 0.0
          %375 = vst [vmem:[#allocation2 + $0x40] sm:$0xff] 0.0
          %376 = vst [vmem:[#allocation2 + $0x48] sm:$0xff] 0.0
          %377 = vst [vmem:[#allocation2 + $0x50] sm:$0xff] 0.0
          %378 = vst [vmem:[#allocation2 + $0x58] sm:$0xff] 0.0
          %379 = vst [vmem:[#allocation2 + $0x60] sm:$0xff] 0.0
          %380 = vst [vmem:[#allocation2 + $0x68] sm:$0xff] 0.0
          %381 = vst [vmem:[#allocation2 + $0x70] sm:$0xff] 0.0
          %382 = vst [vmem:[#allocation2 + $0x78] sm:$0xff] 0.0
        $region81: #{gcn2_forward.7} parent=72 // pred_fallthru
          _
        %v383 = vld [vmem:[#allocation2] sm:$0xff]
        %v384 = vld [vmem:[#allocation2 + $0x8] sm:$0xff]
        %v385 = vld [vmem:[#allocation2 + $0x10] sm:$0xff]
        %v386 = vld [vmem:[#allocation2 + $0x18] sm:$0xff]
        %v387 = vld [vmem:[#allocation2 + $0x20] sm:$0xff]
        %v388 = vld [vmem:[#allocation2 + $0x28] sm:$0xff]
        %v389 = vld [vmem:[#allocation2 + $0x30] sm:$0xff]
        %v390 = vld [vmem:[#allocation2 + $0x38] sm:$0xff]
        %v391 = vld [vmem:[#allocation2 + $0x40] sm:$0xff]
        %v392 = vld [vmem:[#allocation2 + $0x48] sm:$0xff]
        %v393 = vld [vmem:[#allocation2 + $0x50] sm:$0xff]
        %v394 = vld [vmem:[#allocation2 + $0x58] sm:$0xff]
        %v395 = vld [vmem:[#allocation2 + $0x60] sm:$0xff]
        %v396 = vld [vmem:[#allocation2 + $0x68] sm:$0xff]
        %v397 = vld [vmem:[#allocation2 + $0x70] sm:$0xff]
        %v398 = vld [vmem:[#allocation2 + $0x78] sm:$0xff]
        %v399 = vld [vmem:[%s310] sm:$0xf]
        %v400 = vld [vmem:[%s310 + $0x4] sm:$0xf]
        %v401 = vld [vmem:[%s310 + $0x8] sm:$0xf]
        %v402 = vld [vmem:[%s310 + $0xc] sm:$0xf]
        %v403 = vld [vmem:[%s310 + $0x10] sm:$0xf]
        %v404 = vld [vmem:[%s310 + $0x14] sm:$0xf]
        %v405 = vld [vmem:[%s310 + $0x18] sm:$0xf]
        %v406 = vld [vmem:[%s310 + $0x1c] sm:$0xf]
        %v407 = vld [vmem:[%s310 + $0x20] sm:$0xf]
        %v408 = vld [vmem:[%s310 + $0x24] sm:$0xf]
        %v409 = vld [vmem:[%s310 + $0x28] sm:$0xf]
        %v410 = vld [vmem:[%s310 + $0x2c] sm:$0xf]
        %v411 = vld [vmem:[%s310 + $0x30] sm:$0xf]
        %v412 = vld [vmem:[%s310 + $0x34] sm:$0xf]
        %v413 = vld [vmem:[%s310 + $0x38] sm:$0xf]
        %v414 = vld [vmem:[%s310 + $0x3c] sm:$0xf]
        %v415 = vld [vmem:[%s348] sm:$0xf]
        %v416 = vld [vmem:[%s348 + $0x4] sm:$0xf]
        %v417 = vld [vmem:[%s348 + $0x8] sm:$0xf]
        %v418 = vld [vmem:[%s348 + $0xc] sm:$0xf]
        %v419 = vld [vmem:[%s348 + $0x10] sm:$0xf]
        %v420 = vld [vmem:[%s348 + $0x14] sm:$0xf]
        %v421 = vld [vmem:[%s348 + $0x18] sm:$0xf]
        %v422 = vld [vmem:[%s348 + $0x1c] sm:$0xf]
        %v423 = vld [vmem:[%s348 + $0x20] sm:$0xf]
        %v424 = vld [vmem:[%s348 + $0x24] sm:$0xf]
        %v425 = vld [vmem:[%s348 + $0x28] sm:$0xf]
        %v426 = vld [vmem:[%s348 + $0x2c] sm:$0xf]
        %v427 = vld [vmem:[%s348 + $0x30] sm:$0xf]
        %v428 = vld [vmem:[%s348 + $0x34] sm:$0xf]
        %v429 = vld [vmem:[%s348 + $0x38] sm:$0xf]
        %v430 = vld [vmem:[%s348 + $0x3c] sm:$0xf]
        %v447 = vunpack.c.l.b16 %v399
        %v448 = vunpack.c.l.b16 %v400
        %v449 = vunpack.c.l.b16 %v401
        %v450 = vunpack.c.l.b16 %v402
        %v451 = vunpack.c.l.b16 %v403
        %v452 = vunpack.c.l.b16 %v404
        %v453 = vunpack.c.l.b16 %v405
        %v454 = vunpack.c.l.b16 %v406
        %v455 = vunpack.c.l.b16 %v407
        %v456 = vunpack.c.l.b16 %v408
        %v457 = vunpack.c.l.b16 %v409
        %v458 = vunpack.c.l.b16 %v410
        %v459 = vunpack.c.l.b16 %v411
        %v460 = vunpack.c.l.b16 %v412
        %v461 = vunpack.c.l.b16 %v413
        %v462 = vunpack.c.l.b16 %v414
        %v463 = vpack.c.b16 %v448, %v447
        %v464 = vpack.c.b16 %v450, %v449
        %v465 = vpack.c.b16 %v452, %v451
        %v466 = vpack.c.b16 %v454, %v453
        %v467 = vpack.c.b16 %v456, %v455
        %v468 = vpack.c.b16 %v458, %v457
        %v469 = vpack.c.b16 %v460, %v459
        %v470 = vpack.c.b16 %v462, %v461
        %v495 = vunpack.c.l.b16 %v415
        %v496 = vunpack.c.l.b16 %v416
        %v497 = vunpack.c.l.b16 %v417
        %v498 = vunpack.c.l.b16 %v418
        %v499 = vunpack.c.l.b16 %v419
        %v500 = vunpack.c.l.b16 %v420
        %v501 = vunpack.c.l.b16 %v421
        %v502 = vunpack.c.l.b16 %v422
        %v503 = vunpack.c.l.b16 %v423
        %v504 = vunpack.c.l.b16 %v424
        %v505 = vunpack.c.l.b16 %v425
        %v506 = vunpack.c.l.b16 %v426
        %v507 = vunpack.c.l.b16 %v427
        %v508 = vunpack.c.l.b16 %v428
        %v509 = vunpack.c.l.b16 %v429
        %v510 = vunpack.c.l.b16 %v430
        %v511 = vpack.c.b16 %v496, %v495
        %v512 = vpack.c.b16 %v498, %v497
        %v513 = vpack.c.b16 %v500, %v499
        %v514 = vpack.c.b16 %v502, %v501
        %v515 = vpack.c.b16 %v504, %v503
        %v516 = vpack.c.b16 %v506, %v505
        %v517 = vpack.c.b16 %v508, %v507
        %v518 = vpack.c.b16 %v510, %v509
        %527 = vmatprep.subr.bf16.mxu0 0
        %528 = vmatpush1.bf16.msra.mxu0 %v511
        %529 = vmatprep.subr.bf16.mxu0 0
        %530 = vmatpush1.bf16.msra.mxu0 %v512
        %531 = vmatprep.subr.bf16.mxu0 0
        %532 = vmatpush1.bf16.msra.mxu0 %v513
        %533 = vmatprep.subr.bf16.mxu0 0
        %534 = vmatpush1.bf16.msra.mxu0 %v514
        %535 = vmatprep.subr.bf16.mxu0 0
        %536 = vmatpush1.bf16.msra.mxu0 %v515
        %537 = vmatprep.subr.bf16.mxu0 0
        %538 = vmatpush1.bf16.msra.mxu0 %v516
        %539 = vmatprep.subr.bf16.mxu0 0
        %540 = vmatpush1.bf16.msra.mxu0 %v517
        %541 = vmatprep.subr.bf16.mxu0 0
        %542 = vmatpush1.bf16.msra.mxu0 %v518
        %543 = vmatprep.subr.bf16.mxu0 0
        %544 = vmatpush1.bf16.msra.mxu0 0
        %545 = vmatprep.subr.bf16.mxu0 0
        %546 = vmatpush1.bf16.msra.mxu0 0
        %547 = vmatprep.subr.bf16.mxu0 0
        %548 = vmatpush1.bf16.msra.mxu0 0
        %549 = vmatprep.subr.bf16.mxu0 0
        %550 = vmatpush1.bf16.msra.mxu0 0
        %551 = vmatprep.subr.bf16.mxu0 0
        %552 = vmatpush1.bf16.msra.mxu0 0
        %553 = vmatprep.subr.bf16.mxu0 0
        %554 = vmatpush1.bf16.msra.mxu0 0
        %555 = vmatprep.subr.bf16.mxu0 0
        %556 = vmatpush1.bf16.msra.mxu0 0
        %557 = vmatprep.subr.bf16.mxu0 0
        %558 = vmatpush1.bf16.msra.mxu0 0
        %559 = vmatprep.mubr.bf16.mxu0 0
        %560 = vmatmul.mubr.bf16.gmra.mrb[0].mxu0 %v463
        %v561 = vpop.f32.mrb[0].mxu0
        %v562 = vadd.f32 0.0, %v561
        %v563 = vpop.f32.mrb[0].mxu0
        %v564 = vpop.f32.mrb[0].mxu0
        %v565 = vadd.f32 0.0, %v564
        %v566 = vpop.f32.mrb[0].mxu0
        %567 = vmatprep.mubr.bf16.mxu0 0
        %568 = vmatmul.mubr.bf16.gmra.mrb[0].mxu0 %v464
        %v569 = vpop.f32.mrb[0].mxu0
        %v570 = vadd.f32 0.0, %v569
        %v571 = vpop.f32.mrb[0].mxu0
        %v572 = vpop.f32.mrb[0].mxu0
        %v573 = vadd.f32 0.0, %v572
        %v574 = vpop.f32.mrb[0].mxu0
        %575 = vmatprep.mubr.bf16.mxu0 0
        %576 = vmatmul.mubr.bf16.gmra.mrb[0].mxu0 %v465
        %v577 = vpop.f32.mrb[0].mxu0
        %v578 = vadd.f32 0.0, %v577
        %v579 = vpop.f32.mrb[0].mxu0
        %v580 = vpop.f32.mrb[0].mxu0
        %v581 = vadd.f32 0.0, %v580
        %v582 = vpop.f32.mrb[0].mxu0
        %583 = vmatprep.mubr.bf16.mxu0 0
        %584 = vmatmul.mubr.bf16.gmra.mrb[0].mxu0 %v466
        %v585 = vpop.f32.mrb[0].mxu0
        %v586 = vadd.f32 0.0, %v585
        %v587 = vpop.f32.mrb[0].mxu0
        %v588 = vpop.f32.mrb[0].mxu0
        %v589 = vadd.f32 0.0, %v588
        %v590 = vpop.f32.mrb[0].mxu0
        %591 = vmatprep.mubr.bf16.mxu0 0
        %592 = vmatmul.mubr.bf16.gmra.mrb[0].mxu0 %v467
        %v593 = vpop.f32.mrb[0].mxu0
        %v594 = vadd.f32 0.0, %v593
        %v595 = vpop.f32.mrb[0].mxu0
        %v596 = vpop.f32.mrb[0].mxu0
        %v597 = vadd.f32 0.0, %v596
        %v598 = vpop.f32.mrb[0].mxu0
        %599 = vmatprep.mubr.bf16.mxu0 0
        %600 = vmatmul.mubr.bf16.gmra.mrb[0].mxu0 %v468
        %v601 = vpop.f32.mrb[0].mxu0
        %v602 = vadd.f32 0.0, %v601
        %v603 = vpop.f32.mrb[0].mxu0
        %v604 = vpop.f32.mrb[0].mxu0
        %v605 = vadd.f32 0.0, %v604
        %v606 = vpop.f32.mrb[0].mxu0
        %607 = vmatprep.mubr.bf16.mxu0 0
        %608 = vmatmul.mubr.bf16.gmra.mrb[0].mxu0 %v469
        %v609 = vpop.f32.mrb[0].mxu0
        %v610 = vadd.f32 0.0, %v609
        %v611 = vpop.f32.mrb[0].mxu0
        %v612 = vpop.f32.mrb[0].mxu0
        %v613 = vadd.f32 0.0, %v612
        %v614 = vpop.f32.mrb[0].mxu0
        %615 = vmatprep.mubr.bf16.mxu0 0
        %616 = vmatmul.mubr.bf16.gmra.mrb[0].mxu0 %v470
        %v617 = vpop.f32.mrb[0].mxu0
        %v618 = vadd.f32 0.0, %v617
        %v619 = vpop.f32.mrb[0].mxu0
        %v620 = vpop.f32.mrb[0].mxu0
        %v621 = vadd.f32 0.0, %v620
        %v622 = vpop.f32.mrb[0].mxu0
        %623 = vdwg.mxu0
        %v624 = vadd.f32 %v383, %v562
        %v625 = vadd.f32 %v384, %v565
        %v626 = vadd.f32 %v385, %v570
        %v627 = vadd.f32 %v386, %v573
        %v628 = vadd.f32 %v387, %v578
        %v629 = vadd.f32 %v388, %v581
        %v630 = vadd.f32 %v389, %v586
        %v631 = vadd.f32 %v390, %v589
        %v632 = vadd.f32 %v391, %v594
        %v633 = vadd.f32 %v392, %v597
        %v634 = vadd.f32 %v393, %v602
        %v635 = vadd.f32 %v394, %v605
        %v636 = vadd.f32 %v395, %v610
        %v637 = vadd.f32 %v396, %v613
        %v638 = vadd.f32 %v397, %v618
        %v639 = vadd.f32 %v398, %v621
        %640 = vst [vmem:[#allocation2] sm:$0xff] %v624
        %641 = vst [vmem:[#allocation2 + $0x8] sm:$0xff] %v625
        %642 = vst [vmem:[#allocation2 + $0x10] sm:$0xff] %v626
        %643 = vst [vmem:[#allocation2 + $0x18] sm:$0xff] %v627
        %644 = vst [vmem:[#allocation2 + $0x20] sm:$0xff] %v628
        %645 = vst [vmem:[#allocation2 + $0x28] sm:$0xff] %v629
        %646 = vst [vmem:[#allocation2 + $0x30] sm:$0xff] %v630
        %647 = vst [vmem:[#allocation2 + $0x38] sm:$0xff] %v631
        %648 = vst [vmem:[#allocation2 + $0x40] sm:$0xff] %v632
        %649 = vst [vmem:[#allocation2 + $0x48] sm:$0xff] %v633
        %650 = vst [vmem:[#allocation2 + $0x50] sm:$0xff] %v634
        %651 = vst [vmem:[#allocation2 + $0x58] sm:$0xff] %v635
        %652 = vst [vmem:[#allocation2 + $0x60] sm:$0xff] %v636
        %653 = vst [vmem:[#allocation2 + $0x68] sm:$0xff] %v637
        %654 = vst [vmem:[#allocation2 + $0x70] sm:$0xff] %v638
        %655 = vst [vmem:[#allocation2 + $0x78] sm:$0xff] %v639
        %p656 = scmp.eq.s32.totalorder %s20, 1
        // Predicated region
        $region82: #{gcn2_forward.7} parent=72 // pred_check
          %p657 = pneg %p656
        $region83: #{gcn2_forward.7} parent=72 // pred_check_branch
          %659 = sbr.rel (%p657) target = $region85
        $region84: #{gcn2_forward.7} parent=72 // pred_region
          %v660 = vld [vmem:[%s354] sm:$0xff]
          %v661 = vld [vmem:[%s354 + $0x8] sm:$0xff]
          %v662 = vld [vmem:[%s354 + $0x10] sm:$0xff]
          %v663 = vld [vmem:[%s354 + $0x18] sm:$0xff]
          %v664 = vld [vmem:[%s354 + $0x20] sm:$0xff]
          %v665 = vld [vmem:[%s354 + $0x28] sm:$0xff]
          %v666 = vld [vmem:[%s354 + $0x30] sm:$0xff]
          %v667 = vld [vmem:[%s354 + $0x38] sm:$0xff]
          %v668 = vld [vmem:[%s354 + $0x40] sm:$0xff]
          %v669 = vld [vmem:[%s354 + $0x48] sm:$0xff]
          %v670 = vld [vmem:[%s354 + $0x50] sm:$0xff]
          %v671 = vld [vmem:[%s354 + $0x58] sm:$0xff]
          %v672 = vld [vmem:[%s354 + $0x60] sm:$0xff]
          %v673 = vld [vmem:[%s354 + $0x68] sm:$0xff]
          %v674 = vld [vmem:[%s354 + $0x70] sm:$0xff]
          %v675 = vld [vmem:[%s354 + $0x78] sm:$0xff]
          %v676 = vld [vmem:[#allocation2] sm:$0xff]
          %v677 = vld [vmem:[#allocation2 + $0x8] sm:$0xff]
          %v678 = vld [vmem:[#allocation2 + $0x10] sm:$0xff]
          %v679 = vld [vmem:[#allocation2 + $0x18] sm:$0xff]
          %v680 = vld [vmem:[#allocation2 + $0x20] sm:$0xff]
          %v681 = vld [vmem:[#allocation2 + $0x28] sm:$0xff]
          %v682 = vld [vmem:[#allocation2 + $0x30] sm:$0xff]
          %v683 = vld [vmem:[#allocation2 + $0x38] sm:$0xff]
          %v684 = vld [vmem:[#allocation2 + $0x40] sm:$0xff]
          %v685 = vld [vmem:[#allocation2 + $0x48] sm:$0xff]
          %v686 = vld [vmem:[#allocation2 + $0x50] sm:$0xff]
          %v687 = vld [vmem:[#allocation2 + $0x58] sm:$0xff]
          %v688 = vld [vmem:[#allocation2 + $0x60] sm:$0xff]
          %v689 = vld [vmem:[#allocation2 + $0x68] sm:$0xff]
          %v690 = vld [vmem:[#allocation2 + $0x70] sm:$0xff]
          %v691 = vld [vmem:[#allocation2 + $0x78] sm:$0xff]
          %v692 = vld [vmem:[%s3] sm:$0x1]
          %v694 = vlaneseq
          %v695 = vshrl.u32 %v694, 7
          %v696 = vsub.s32 0, %v695
          %v697 = vrot.slane %v692, %v696
          %v699 = vadd.f32 %v676, %v697
          %v700 = vadd.f32 %v677, %v697
          %v701 = vadd.f32 %v678, %v697
          %v702 = vadd.f32 %v679, %v697
          %v703 = vadd.f32 %v680, %v697
          %v704 = vadd.f32 %v681, %v697
          %v705 = vadd.f32 %v682, %v697
          %v706 = vadd.f32 %v683, %v697
          %v707 = vadd.f32 %v684, %v697
          %v708 = vadd.f32 %v685, %v697
          %v709 = vadd.f32 %v686, %v697
          %v710 = vadd.f32 %v687, %v697
          %v711 = vadd.f32 %v688, %v697
          %v712 = vadd.f32 %v689, %v697
          %v713 = vadd.f32 %v690, %v697
          %v714 = vadd.f32 %v691, %v697
          %v715 = vmax.f32 %v699, 0.0
          %v716 = vmax.f32 %v700, 0.0
          %v717 = vmax.f32 %v701, 0.0
          %v718 = vmax.f32 %v702, 0.0
          %v719 = vmax.f32 %v703, 0.0
          %v720 = vmax.f32 %v704, 0.0
          %v721 = vmax.f32 %v705, 0.0
          %v722 = vmax.f32 %v706, 0.0
          %v723 = vmax.f32 %v707, 0.0
          %v724 = vmax.f32 %v708, 0.0
          %v725 = vmax.f32 %v709, 0.0
          %v726 = vmax.f32 %v710, 0.0
          %v727 = vmax.f32 %v711, 0.0
          %v728 = vmax.f32 %v712, 0.0
          %v729 = vmax.f32 %v713, 0.0
          %v730 = vmax.f32 %v714, 0.0
          %v731 = vadd.f32 %v660, %v715
          %v732 = vadd.f32 %v661, %v716
          %v733 = vadd.f32 %v662, %v717
          %v734 = vadd.f32 %v663, %v718
          %v735 = vadd.f32 %v664, %v719
          %v736 = vadd.f32 %v665, %v720
          %v737 = vadd.f32 %v666, %v721
          %v738 = vadd.f32 %v667, %v722
          %v739 = vadd.f32 %v668, %v723
          %v740 = vadd.f32 %v669, %v724
          %v741 = vadd.f32 %v670, %v725
          %v742 = vadd.f32 %v671, %v726
          %v743 = vadd.f32 %v672, %v727
          %v744 = vadd.f32 %v673, %v728
          %v745 = vadd.f32 %v674, %v729
          %v746 = vadd.f32 %v675, %v730
          %747 = vst [vmem:[%s360] sm:$0xff] %v731
          %748 = vst [vmem:[%s360 + $0x8] sm:$0xff] %v732
          %749 = vst [vmem:[%s360 + $0x10] sm:$0xff] %v733
          %750 = vst [vmem:[%s360 + $0x18] sm:$0xff] %v734
          %751 = vst [vmem:[%s360 + $0x20] sm:$0xff] %v735
          %752 = vst [vmem:[%s360 + $0x28] sm:$0xff] %v736
          %753 = vst [vmem:[%s360 + $0x30] sm:$0xff] %v737
          %754 = vst [vmem:[%s360 + $0x38] sm:$0xff] %v738
          %755 = vst [vmem:[%s360 + $0x40] sm:$0xff] %v739
          %756 = vst [vmem:[%s360 + $0x48] sm:$0xff] %v740
          %757 = vst [vmem:[%s360 + $0x50] sm:$0xff] %v741
          %758 = vst [vmem:[%s360 + $0x58] sm:$0xff] %v742
          %759 = vst [vmem:[%s360 + $0x60] sm:$0xff] %v743
          %760 = vst [vmem:[%s360 + $0x68] sm:$0xff] %v744
          %761 = vst [vmem:[%s360 + $0x70] sm:$0xff] %v745
          %762 = vst [vmem:[%s360 + $0x78] sm:$0xff] %v746
        $region85: #{gcn2_forward.7} parent=72 // pred_fallthru
          _
        %s763 = smul.u32 16, %s19
        %p764 = scmp.lt.s32.totalorder %s763, 31
        %s765 = scalar_select %p764, %s763, 31
        %s766 = smul.addr %s765, 8
        %s767 = scalar_lea.vmem %s4, %s766
        // Predicated region
        $region86: #{gcn2_forward.7} parent=72 // pred_check
          %p768 = pneg %p146
        $region87: #{gcn2_forward.7} parent=72 // pred_check_branch
          %770 = sbr.rel (%p768) target = $region89
        $region88: #{gcn2_forward.7} parent=72 // pred_region
          %s771 = smul.u32 16, %s19
        $region89: #{gcn2_forward.7} parent=72 // pred_fallthru
          _
      $region73: #{gcn2_forward.7} parent=5 // pred_fallthru
        _
      %p772 = scmp.le.s32.totalorder 2, %s10
      // Predicated region
      $region90: #{gcn2_forward.7} parent=5 // pred_check
        %p773 = pneg %p772
      $region91: #{gcn2_forward.7} parent=5 // pred_check_branch
        %775 = sbr.rel (%p773) target = $region93
      $region92: #{gcn2_forward.7} parent=5 // pred_region
        %s776 = ssub.s32 %s10, 2
        // Predicated region
        $region94: #{gcn2_forward.7} parent=92 // pred_check
          %p777 = pneg %p152
        $region95: #{gcn2_forward.7} parent=92 // pred_check_branch
          %779 = sbr.rel (%p777) target = $region97
        $region96: #{gcn2_forward.7} parent=92 // pred_region
          %s780 = smul.u32 16, %s21
          %p781 = scmp.lt.s32.totalorder %s780, 31
          %s782 = scalar_select %p781, %s780, 31
          %s783 = smul.addr %s782, 8
          %s784 = scalar_lea.vmem %s4, %s783
        $region97: #{gcn2_forward.7} parent=92 // pred_fallthru
          _
      $region93: #{gcn2_forward.7} parent=5 // pred_fallthru
        _
    $region6: #{gcn2_forward.7} parent=1 // loop_footer
      %s14 = sadd.s32 1, %s10
    $region7: #{gcn2_forward.7} parent=1 // loop_footer_branch
      %9 = sbr.rel target = $region3
    $region8: #{gcn2_forward.7} parent=1 // loop_exit
      _

// kernel: gcn2_forward.10
$region0: #{gcn2_forward.10}
  #allocation0 [shape = 'u32[]', space=smem, size = 0x4, offset = 0x4, fixed_abs, tag = 'smem constant byte address 0x4 - core index']
  #allocation1 [shape = 'u32[144,128]{1,0:T(1,128)}', space=vmem, size = 0x12000, scoped, tag = 'internal scratch']
  %s0 = inlined_call_operand.vmem [shape: f32[256,128], index: 0, kind: input, shape index: {}]
  %s1 = inlined_call_operand.vmem [shape: f32[256,128], index: 1, kind: input, shape index: {}]
  %s2 = inlined_call_operand.vmem [shape: bf16[128,128], index: 2, kind: input, shape index: {}]
  %s3 = inlined_call_operand.vmem [shape: f32[1,2], index: 3, kind: output, shape index: {0}]
  %s4 = inlined_call_operand.vmem [shape: f32[1,2], index: 4, kind: output, shape index: {1}]
  %s5 = inlined_call_operand.hbm [shape: f32[1,128], index: 5, kind: output, shape index: {2}]
  %6 = xla_tuple %s3, %s4, %s5
  %s7 = sld [smem:[#allocation0]]
  $region69: #{gcn2_forward.10} parent=0
    _
  %s9 = ssub.s32 1, %s7
  %s10 = scalar_select 0, %s9, %s7
  $region1: #{gcn2_forward.10} parent=0
    #allocation2 [shape = 'u8[512]{0}', space=vmem, size = 0x400, scoped, tag = 'output window, operand 2, single buffered']
    #allocation3 [shape = 's32[2]{0}', space=sflag, size = 0x8, scoped, tag = 'scoped memory for gcn2_forward.10']
    %11 = vsyncpa [#allocation3], 0
    loop: start=0, step=1, limit=4
    $region2: #{gcn2_forward.10} parent=1 // loop_pre_header
      _
    $region3: #{gcn2_forward.10} parent=1 // loop_header
      %s13 = sphi 0, %s17
      %p14 = scmp.ge.s32.totalorder %s13, 4
      %s23 = sphi 0, %s25
      %s26 = sphi 0, %s23
      %s27 = sphi 0, %s26
      %s43 = sphi 0, %s27
      %s49 = sphi 0, %s51
      %s52 = sphi 0, %s49
      %s53 = sphi 0, %s52
      %s69 = sphi 0, %s53
      %s73 = sphi 0, %s73
      %s75 = sphi 0, %s73
      %s76 = sphi 0, %s75
      %s90 = sphi 0, %s76
      %s94 = sphi 0, %s94
      %s96 = sphi 0, %s94
      %s97 = sphi 0, %s96
      %s111 = sphi 0, %s97
      %s115 = sphi 0, %s115
      %s117 = sphi 0, %s115
      %s118 = sphi 0, %s117
      %s132 = sphi 0, %s118
      %s136 = sphi 0, %s136
      %s138 = sphi 0, %s136
      %s139 = sphi 0, %s138
      %s153 = sphi 0, %s139
    $region4: #{gcn2_forward.10} parent=1 // loop_header_branch
      %16 = sbr.rel (%p14) target = $region8
    $region5: #{gcn2_forward.10} parent=1 // loop_body
      %s18 = ssub.s32 %s13, 1
      %s19 = ssub.s32 %s13, 2
      %s20 = sadd.s32 %s13, 1
      %s21 = ssub.s32 %s13, %s20
      %p22 = scmp.eq.s32.totalorder %s21, 0
      %s24 = sadd.s32 %s23, 1
      %s25 = scalar_select %p22, %s23, %s24
      %p28 = pneg %p22
      %p29 = scmp.eq.s32.totalorder %s13, 1
      %p30 = por %p28, %p29
      %p31 = scmp.ne.s32.totalorder %s23, %s26
      %p32 = scmp.eq.s32.totalorder %s13, 0
      %p33 = por %p31, %p32
      %p34 = scmp.ne.s32.totalorder %s23, %s26
      %p35 = scmp.eq.s32.totalorder %s18, 1
      %p36 = por %p34, %p35
      %p37 = scmp.ne.s32.totalorder %s26, %s27
      %p38 = scmp.eq.s32.totalorder %s18, 0
      %p39 = por %p37, %p38
      %p40 = scmp.ne.s32.totalorder %s26, %s27
      %p41 = scmp.eq.s32.totalorder %s19, 1
      %p42 = por %p40, %p41
      %p44 = scmp.ne.s32.totalorder %s27, %s43
      %p45 = scmp.eq.s32.totalorder %s19, 0
      %p46 = por %p44, %p45
      %s47 = ssub.s32 %s13, %s20
      %p48 = scmp.eq.s32.totalorder %s47, 0
      %s50 = sadd.s32 %s49, 1
      %s51 = scalar_select %p48, %s49, %s50
      %p54 = pneg %p48
      %p55 = scmp.eq.s32.totalorder %s13, 1
      %p56 = por %p54, %p55
      %p57 = scmp.ne.s32.totalorder %s49, %s52
      %p58 = scmp.eq.s32.totalorder %s13, 0
      %p59 = por %p57, %p58
      %p60 = scmp.ne.s32.totalorder %s49, %s52
      %p61 = scmp.eq.s32.totalorder %s18, 1
      %p62 = por %p60, %p61
      %p63 = scmp.ne.s32.totalorder %s52, %s53
      %p64 = scmp.eq.s32.totalorder %s18, 0
      %p65 = por %p63, %p64
      %p66 = scmp.ne.s32.totalorder %s52, %s53
      %p67 = scmp.eq.s32.totalorder %s19, 1
      %p68 = por %p66, %p67
      %p70 = scmp.ne.s32.totalorder %s53, %s69
      %p71 = scmp.eq.s32.totalorder %s19, 0
      %p72 = por %p70, %p71
      %s74 = sadd.s32 %s73, 1
      %p77 = scmp.eq.s32.totalorder %s13, 1
      %p78 = scmp.ne.s32.totalorder %s73, %s75
      %p79 = scmp.eq.s32.totalorder %s13, 0
      %p80 = por %p78, %p79
      %p81 = scmp.ne.s32.totalorder %s73, %s75
      %p82 = scmp.eq.s32.totalorder %s18, 1
      %p83 = por %p81, %p82
      %p84 = scmp.ne.s32.totalorder %s75, %s76
      %p85 = scmp.eq.s32.totalorder %s18, 0
      %p86 = por %p84, %p85
      %p87 = scmp.ne.s32.totalorder %s75, %s76
      %p88 = scmp.eq.s32.totalorder %s19, 1
      %p89 = por %p87, %p88
      %p91 = scmp.ne.s32.totalorder %s76, %s90
      %p92 = scmp.eq.s32.totalorder %s19, 0
      %p93 = por %p91, %p92
      %s95 = sadd.s32 %s94, 1
      %p98 = scmp.eq.s32.totalorder %s13, 1
      %p99 = scmp.ne.s32.totalorder %s94, %s96
      %p100 = scmp.eq.s32.totalorder %s13, 0
      %p101 = por %p99, %p100
      %p102 = scmp.ne.s32.totalorder %s94, %s96
      %p103 = scmp.eq.s32.totalorder %s18, 1
      %p104 = por %p102, %p103
      %p105 = scmp.ne.s32.totalorder %s96, %s97
      %p106 = scmp.eq.s32.totalorder %s18, 0
      %p107 = por %p105, %p106
      %p108 = scmp.ne.s32.totalorder %s96, %s97
      %p109 = scmp.eq.s32.totalorder %s19, 1
      %p110 = por %p108, %p109
      %p112 = scmp.ne.s32.totalorder %s97, %s111
      %p113 = scmp.eq.s32.totalorder %s19, 0
      %p114 = por %p112, %p113
      %s116 = sadd.s32 %s115, 1
      %p119 = scmp.eq.s32.totalorder %s13, 1
      %p120 = scmp.ne.s32.totalorder %s115, %s117
      %p121 = scmp.eq.s32.totalorder %s13, 0
      %p122 = por %p120, %p121
      %p123 = scmp.ne.s32.totalorder %s115, %s117
      %p124 = scmp.eq.s32.totalorder %s18, 1
      %p125 = por %p123, %p124
      %p126 = scmp.ne.s32.totalorder %s117, %s118
      %p127 = scmp.eq.s32.totalorder %s18, 0
      %p128 = por %p126, %p127
      %p129 = scmp.ne.s32.totalorder %s117, %s118
      %p130 = scmp.eq.s32.totalorder %s19, 1
      %p131 = por %p129, %p130
      %p133 = scmp.ne.s32.totalorder %s118, %s132
      %p134 = scmp.eq.s32.totalorder %s19, 0
      %p135 = por %p133, %p134
      %s137 = sadd.s32 %s136, 1
      %p140 = scmp.eq.s32.totalorder %s13, 1
      %p141 = scmp.ne.s32.totalorder %s136, %s138
      %p142 = scmp.eq.s32.totalorder %s13, 0
      %p143 = por %p141, %p142
      %p144 = scmp.ne.s32.totalorder %s136, %s138
      %p145 = scmp.eq.s32.totalorder %s18, 1
      %p146 = por %p144, %p145
      %p147 = scmp.ne.s32.totalorder %s138, %s139
      %p148 = scmp.eq.s32.totalorder %s18, 0
      %p149 = por %p147, %p148
      %p150 = scmp.ne.s32.totalorder %s138, %s139
      %p151 = scmp.eq.s32.totalorder %s19, 1
      %p152 = por %p150, %p151
      %p154 = scmp.ne.s32.totalorder %s139, %s153
      %p155 = scmp.eq.s32.totalorder %s19, 0
      %p156 = por %p154, %p155
      %p157 = scmp.le.s32.totalorder 1, %s13
      %p158 = scmp.lt.s32.totalorder %s13, 3
      %p159 = pnand %p157, %p158
      %p160 = pneg %p159
      // Predicated region
      $region9: #{gcn2_forward.10} parent=5 // pred_check
        _
      $region10: #{gcn2_forward.10} parent=5 // pred_check_branch
        %162 = sbr.rel (%p159) target = $region12
      $region11: #{gcn2_forward.10} parent=5 // pred_region
        %s163 = ssub.s32 %s13, 1
        // Predicated region
        $region13: #{gcn2_forward.10} parent=11 // pred_check
          %p164 = pneg %p86
        $region14: #{gcn2_forward.10} parent=11 // pred_check_branch
          %166 = sbr.rel (%p164) target = $region16
        $region15: #{gcn2_forward.10} parent=11 // pred_region
          _
        $region16: #{gcn2_forward.10} parent=11 // pred_fallthru
          _
      $region12: #{gcn2_forward.10} parent=5 // pred_fallthru
        _
      %p167 = scmp.lt.s32.totalorder %s13, 2
      // Predicated region
      $region17: #{gcn2_forward.10} parent=5 // pred_check
        %p168 = pneg %p167
      $region18: #{gcn2_forward.10} parent=5 // pred_check_branch
        %170 = sbr.rel (%p168) target = $region20
      $region19: #{gcn2_forward.10} parent=5 // pred_region
        // Predicated region
        $region21: #{gcn2_forward.10} parent=19 // pred_check
          %p171 = pneg %p33
        $region22: #{gcn2_forward.10} parent=19 // pred_check_branch
          %173 = sbr.rel (%p171) target = $region24
        $region23: #{gcn2_forward.10} parent=19 // pred_region
          %s174 = smul.u32 16, %s13
          %p175 = scmp.lt.s32.totalorder %s174, 31
          %s176 = scalar_select %p175, %s174, 31
          %s177 = smul.addr %s176, 8
          %s178 = scalar_lea.vmem %s0, %s177
          %s179 = smul.u32 16, %s13
        $region24: #{gcn2_forward.10} parent=19 // pred_fallthru
          _
        // Predicated region
        $region25: #{gcn2_forward.10} parent=19 // pred_check
          %p180 = pneg %p59
        $region26: #{gcn2_forward.10} parent=19 // pred_check_branch
          %182 = sbr.rel (%p180) target = $region28
        $region27: #{gcn2_forward.10} parent=19 // pred_region
          %s183 = smul.u32 16, %s13
          %p184 = scmp.lt.s32.totalorder %s183, 31
          %s185 = scalar_select %p184, %s183, 31
          %s186 = smul.addr %s185, 8
          %s187 = scalar_lea.vmem %s1, %s186
          %s188 = smul.u32 16, %s13
        $region28: #{gcn2_forward.10} parent=19 // pred_fallthru
          _
      $region20: #{gcn2_forward.10} parent=5 // pred_fallthru
        _
      %p189 = scmp.le.s32.totalorder 1, %s13
      %p190 = scmp.lt.s32.totalorder %s13, 3
      %p191 = pnand %p189, %p190
      %p192 = pneg %p191
      // Predicated region
      $region29: #{gcn2_forward.10} parent=5 // pred_check
        _
      $region30: #{gcn2_forward.10} parent=5 // pred_check_branch
        %194 = sbr.rel (%p191) target = $region32
      $region31: #{gcn2_forward.10} parent=5 // pred_region
        %s195 = ssub.s32 %s13, 1
        %s196 = smul.u32 16, %s18
        %p197 = scmp.lt.s32.totalorder %s196, 31
        %s198 = scalar_select %p197, %s196, 31
        %s199 = smul.addr %s198, 8
        %s200 = scalar_lea.vmem %s0, %s199
        %p201 = pneg %p39
        %p202 = pneg %p36
        %s203 = smul.u32 16, %s18
        %p204 = scmp.lt.s32.totalorder %s203, 31
        %s205 = scalar_select %p204, %s203, 31
        %s206 = smul.addr %s205, 8
        %s207 = scalar_lea.vmem %s1, %s206
        %p208 = pneg %p65
        %p209 = pneg %p62
        %p210 = pneg %p86
        %p211 = pneg %p83
        %p212 = pneg %p107
        %p213 = pneg %p104
        %p214 = pneg %p128
        %p215 = pneg %p125
        %p216 = pneg %p149
        %p217 = pneg %p146
        %s218 = smul.u32 16, %s18
        %p219 = scmp.lt.s32.totalorder %s218, 31
        %s220 = scalar_select %p219, %s218, 31
        %s221 = smul.addr %s220, 8
        %s222 = scalar_lea.vmem %s0, %s221
        %s223 = smul.u32 16, %s18
        %s224 = smul.u32 16, %s18
        %p225 = scmp.lt.s32.totalorder %s224, 31
        %s226 = scalar_select %p225, %s224, 31
        %s227 = smul.addr %s226, 8
        %s228 = scalar_lea.vmem %s1, %s227
        %s229 = smul.u32 16, %s18
        %p231 = scmp.eq.s32.totalorder %s18, 0
        // Predicated region
        $region33: #{gcn2_forward.10} parent=31 // pred_check
          %p232 = pneg %p231
        $region34: #{gcn2_forward.10} parent=31 // pred_check_branch
          %234 = sbr.rel (%p232) target = $region36
        $region35: #{gcn2_forward.10} parent=31 // pred_region
          %vm235 = vcmask 8192
          %236 = vst.msk [vmem:[%s3] sm:$0x1] %vm235, -inf
          %237 = vst.msk [vmem:[%s4] sm:$0x1] %vm235, 0.0
          %238 = vst [vmem:[#allocation2] sm:$0x1] 0.0
        $region36: #{gcn2_forward.10} parent=31 // pred_fallthru
          _
        %v239 = vld [vmem:[%s228] sm:$0xff]
        %v240 = vld [vmem:[%s228 + $0x8] sm:$0xff]
        %v241 = vld [vmem:[%s228 + $0x10] sm:$0xff]
        %v242 = vld [vmem:[%s228 + $0x18] sm:$0xff]
        %v243 = vld [vmem:[%s228 + $0x20] sm:$0xff]
        %v244 = vld [vmem:[%s228 + $0x28] sm:$0xff]
        %v245 = vld [vmem:[%s228 + $0x30] sm:$0xff]
        %v246 = vld [vmem:[%s228 + $0x38] sm:$0xff]
        %v247 = vld [vmem:[%s228 + $0x40] sm:$0xff]
        %v248 = vld [vmem:[%s228 + $0x48] sm:$0xff]
        %v249 = vld [vmem:[%s228 + $0x50] sm:$0xff]
        %v250 = vld [vmem:[%s228 + $0x58] sm:$0xff]
        %v251 = vld [vmem:[%s228 + $0x60] sm:$0xff]
        %v252 = vld [vmem:[%s228 + $0x68] sm:$0xff]
        %v253 = vld [vmem:[%s228 + $0x70] sm:$0xff]
        %v254 = vld [vmem:[%s228 + $0x78] sm:$0xff]
        %v255 = vpack.c.bf16 %v240, %v239
        %v256 = vpack.c.bf16 %v242, %v241
        %v257 = vpack.c.bf16 %v244, %v243
        %v258 = vpack.c.bf16 %v246, %v245
        %v259 = vpack.c.bf16 %v248, %v247
        %v260 = vpack.c.bf16 %v250, %v249
        %v261 = vpack.c.bf16 %v252, %v251
        %v262 = vpack.c.bf16 %v254, %v253
        %v263 = vld [vmem:[%s2] sm:$0xf]
        %v264 = vld [vmem:[%s2 + $0x4] sm:$0xf]
        %v265 = vld [vmem:[%s2 + $0x8] sm:$0xf]
        %v266 = vld [vmem:[%s2 + $0xc] sm:$0xf]
        %v267 = vld [vmem:[%s2 + $0x10] sm:$0xf]
        %v268 = vld [vmem:[%s2 + $0x14] sm:$0xf]
        %v269 = vld [vmem:[%s2 + $0x18] sm:$0xf]
        %v270 = vld [vmem:[%s2 + $0x1c] sm:$0xf]
        %v271 = vld [vmem:[%s2 + $0x20] sm:$0xf]
        %v272 = vld [vmem:[%s2 + $0x24] sm:$0xf]
        %v273 = vld [vmem:[%s2 + $0x28] sm:$0xf]
        %v274 = vld [vmem:[%s2 + $0x2c] sm:$0xf]
        %v275 = vld [vmem:[%s2 + $0x30] sm:$0xf]
        %v276 = vld [vmem:[%s2 + $0x34] sm:$0xf]
        %v277 = vld [vmem:[%s2 + $0x38] sm:$0xf]
        %v278 = vld [vmem:[%s2 + $0x3c] sm:$0xf]
        %v295 = vunpack.c.l.b16 %v263
        %v296 = vunpack.c.l.b16 %v264
        %v297 = vunpack.c.l.b16 %v265
        %v298 = vunpack.c.l.b16 %v266
        %v299 = vunpack.c.l.b16 %v267
        %v300 = vunpack.c.l.b16 %v268
        %v301 = vunpack.c.l.b16 %v269
        %v302 = vunpack.c.l.b16 %v270
        %v303 = vunpack.c.l.b16 %v271
        %v304 = vunpack.c.l.b16 %v272
        %v305 = vunpack.c.l.b16 %v273
        %v306 = vunpack.c.l.b16 %v274
        %v307 = vunpack.c.l.b16 %v275
        %v308 = vunpack.c.l.b16 %v276
        %v309 = vunpack.c.l.b16 %v277
        %v310 = vunpack.c.l.b16 %v278
        %v311 = vpack.c.b16 %v296, %v295
        %v312 = vpack.c.b16 %v298, %v297
        %v313 = vpack.c.b16 %v300, %v299
        %v314 = vpack.c.b16 %v302, %v301
        %v315 = vpack.c.b16 %v304, %v303
        %v316 = vpack.c.b16 %v306, %v305
        %v317 = vpack.c.b16 %v308, %v307
        %v318 = vpack.c.b16 %v310, %v309
        %327 = vmatprep.subr.bf16.mxu0 0
        %328 = vmatpush1.bf16.msra.mxu0 %v311
        %329 = vmatprep.subr.bf16.mxu0 0
        %330 = vmatpush1.bf16.msra.mxu0 %v312
        %331 = vmatprep.subr.bf16.mxu0 0
        %332 = vmatpush1.bf16.msra.mxu0 %v313
        %333 = vmatprep.subr.bf16.mxu0 0
        %334 = vmatpush1.bf16.msra.mxu0 %v314
        %335 = vmatprep.subr.bf16.mxu0 0
        %336 = vmatpush1.bf16.msra.mxu0 %v315
        %337 = vmatprep.subr.bf16.mxu0 0
        %338 = vmatpush1.bf16.msra.mxu0 %v316
        %339 = vmatprep.subr.bf16.mxu0 0
        %340 = vmatpush1.bf16.msra.mxu0 %v317
        %341 = vmatprep.subr.bf16.mxu0 0
        %342 = vmatpush1.bf16.msra.mxu0 %v318
        %343 = vmatprep.subr.bf16.mxu0 0
        %344 = vmatpush1.bf16.msra.mxu0 0
        %345 = vmatprep.subr.bf16.mxu0 0
        %346 = vmatpush1.bf16.msra.mxu0 0
        %347 = vmatprep.subr.bf16.mxu0 0
        %348 = vmatpush1.bf16.msra.mxu0 0
        %349 = vmatprep.subr.bf16.mxu0 0
        %350 = vmatpush1.bf16.msra.mxu0 0
        %351 = vmatprep.subr.bf16.mxu0 0
        %352 = vmatpush1.bf16.msra.mxu0 0
        %353 = vmatprep.subr.bf16.mxu0 0
        %354 = vmatpush1.bf16.msra.mxu0 0
        %355 = vmatprep.subr.bf16.mxu0 0
        %356 = vmatpush1.bf16.msra.mxu0 0
        %357 = vmatprep.subr.bf16.mxu0 0
        %358 = vmatpush1.bf16.msra.mxu0 0
        %359 = vmatprep.mubr.bf16.mxu0 0
        %360 = vmatmul.mubr.bf16.gmra.mrb[0].mxu0 %v255
        %v361 = vpop.f32.mrb[0].mxu0
        %v362 = vadd.f32 0.0, %v361
        %v363 = vpop.f32.mrb[0].mxu0
        %v364 = vpop.f32.mrb[0].mxu0
        %v365 = vadd.f32 0.0, %v364
        %v366 = vpop.f32.mrb[0].mxu0
        %367 = vmatprep.mubr.bf16.mxu0 0
        %368 = vmatmul.mubr.bf16.gmra.mrb[0].mxu0 %v256
        %v369 = vpop.f32.mrb[0].mxu0
        %v370 = vadd.f32 0.0, %v369
        %v371 = vpop.f32.mrb[0].mxu0
        %v372 = vpop.f32.mrb[0].mxu0
        %v373 = vadd.f32 0.0, %v372
        %v374 = vpop.f32.mrb[0].mxu0
        %375 = vmatprep.mubr.bf16.mxu0 0
        %376 = vmatmul.mubr.bf16.gmra.mrb[0].mxu0 %v257
        %v377 = vpop.f32.mrb[0].mxu0
        %v378 = vadd.f32 0.0, %v377
        %v379 = vpop.f32.mrb[0].mxu0
        %v380 = vpop.f32.mrb[0].mxu0
        %v381 = vadd.f32 0.0, %v380
        %v382 = vpop.f32.mrb[0].mxu0
        %383 = vmatprep.mubr.bf16.mxu0 0
        %384 = vmatmul.mubr.bf16.gmra.mrb[0].mxu0 %v258
        %v385 = vpop.f32.mrb[0].mxu0
        %v386 = vadd.f32 0.0, %v385
        %v387 = vpop.f32.mrb[0].mxu0
        %v388 = vpop.f32.mrb[0].mxu0
        %v389 = vadd.f32 0.0, %v388
        %v390 = vpop.f32.mrb[0].mxu0
        %391 = vmatprep.mubr.bf16.mxu0 0
        %392 = vmatmul.mubr.bf16.gmra.mrb[0].mxu0 %v259
        %v393 = vpop.f32.mrb[0].mxu0
        %v394 = vadd.f32 0.0, %v393
        %v395 = vpop.f32.mrb[0].mxu0
        %v396 = vpop.f32.mrb[0].mxu0
        %v397 = vadd.f32 0.0, %v396
        %v398 = vpop.f32.mrb[0].mxu0
        %399 = vmatprep.mubr.bf16.mxu0 0
        %400 = vmatmul.mubr.bf16.gmra.mrb[0].mxu0 %v260
        %v401 = vpop.f32.mrb[0].mxu0
        %v402 = vadd.f32 0.0, %v401
        %v403 = vpop.f32.mrb[0].mxu0
        %v404 = vpop.f32.mrb[0].mxu0
        %v405 = vadd.f32 0.0, %v404
        %v406 = vpop.f32.mrb[0].mxu0
        %407 = vmatprep.mubr.bf16.mxu0 0
        %408 = vmatmul.mubr.bf16.gmra.mrb[0].mxu0 %v261
        %v409 = vpop.f32.mrb[0].mxu0
        %v410 = vadd.f32 0.0, %v409
        %v411 = vpop.f32.mrb[0].mxu0
        %v412 = vpop.f32.mrb[0].mxu0
        %v413 = vadd.f32 0.0, %v412
        %v414 = vpop.f32.mrb[0].mxu0
        %415 = vmatprep.mubr.bf16.mxu0 0
        %416 = vmatmul.mubr.bf16.gmra.mrb[0].mxu0 %v262
        %v417 = vpop.f32.mrb[0].mxu0
        %v418 = vadd.f32 0.0, %v417
        %v419 = vpop.f32.mrb[0].mxu0
        %v420 = vpop.f32.mrb[0].mxu0
        %v421 = vadd.f32 0.0, %v420
        %v422 = vpop.f32.mrb[0].mxu0
        %423 = vdwg.mxu0
        %v424 = vld [vmem:[%s3] sm:$0x1]
        %vm425 = vcmask 15360
        %v426 = vsel %vm425, %v362, -inf
        %v427 = vsel %vm425, %v365, -inf
        %v428 = vsel %vm425, %v370, -inf
        %v429 = vsel %vm425, %v373, -inf
        %v430 = vsel %vm425, %v378, -inf
        %v431 = vmax.f32 %v426, %v430
        %v432 = vsel %vm425, %v381, -inf
        %v433 = vmax.f32 %v427, %v432
        %v434 = vsel %vm425, %v386, -inf
        %v435 = vmax.f32 %v428, %v434
        %v436 = vsel %vm425, %v389, -inf
        %v437 = vmax.f32 %v429, %v436
        %v438 = vsel %vm425, %v394, -inf
        %v439 = vmax.f32 %v431, %v438
        %v440 = vsel %vm425, %v397, -inf
        %v441 = vmax.f32 %v433, %v440
        %v442 = vsel %vm425, %v402, -inf
        %v443 = vmax.f32 %v435, %v442
        %v444 = vsel %vm425, %v405, -inf
        %v445 = vmax.f32 %v437, %v444
        %v446 = vsel %vm425, %v410, -inf
        %v447 = vmax.f32 %v439, %v446
        %v448 = vsel %vm425, %v413, -inf
        %v449 = vmax.f32 %v441, %v448
        %v450 = vsel %vm425, %v418, -inf
        %v451 = vmax.f32 %v443, %v450
        %v452 = vsel %vm425, %v421, -inf
        %v453 = vmax.f32 %v445, %v452
        %v454 = vmax.f32 %v447, %v449
        %v455 = vmax.f32 %v451, %v453
        %v456 = vmax.f32 %v454, %v455
        %v457 = vrot.slane %v456, 4
        %v458 = vmax.f32 %v456, %v457
        %v459 = vrot.slane %v458, 2
        %v460 = vmax.f32 %v458, %v459
        %v461 = vrot.slane %v460, 1
        %v462 = vmax.f32 %v460, %v461
        %v463 = vmax.f32 %v424, %v462
        %v464 = vld [vmem:[%s4] sm:$0x1]
        %v465 = vsub.f32 %v424, %v463
        %v466 = vmul.f32 %v465, 1.442695
        %v467 = vpow.pop %v466
        %v468 = vmul.f32 %v464, %v467
        %v470 = vlaneseq
        %v471 = vshrl.u32 %v470, 7
        %v472 = vsub.s32 0, %v471
        %v473 = vrot.slane %v463, %v472
        %v475 = vsub.f32 %v362, %v473
        %v476 = vsub.f32 %v365, %v473
        %v477 = vsub.f32 %v370, %v473
        %v478 = vsub.f32 %v373, %v473
        %v479 = vsub.f32 %v378, %v473
        %v480 = vsub.f32 %v381, %v473
        %v481 = vsub.f32 %v386, %v473
        %v482 = vsub.f32 %v389, %v473
        %v483 = vsub.f32 %v394, %v473
        %v484 = vsub.f32 %v397, %v473
        %v485 = vsub.f32 %v402, %v473
        %v486 = vsub.f32 %v405, %v473
        %v487 = vsub.f32 %v410, %v473
        %v488 = vsub.f32 %v413, %v473
        %v489 = vsub.f32 %v418, %v473
        %v490 = vsub.f32 %v421, %v473
        %v491 = vmul.f32 %v475, 1.442695
        %v492 = vpow.pop %v491
        %v493 = vmul.f32 %v476, 1.442695
        %v494 = vpow.pop %v493
        %v495 = vmul.f32 %v477, 1.442695
        %v496 = vpow.pop %v495
        %v497 = vmul.f32 %v478, 1.442695
        %v498 = vpow.pop %v497
        %v499 = vmul.f32 %v479, 1.442695
        %v500 = vpow.pop %v499
        %v501 = vmul.f32 %v480, 1.442695
        %v502 = vpow.pop %v501
        %v503 = vmul.f32 %v481, 1.442695
        %v504 = vpow.pop %v503
        %v505 = vmul.f32 %v482, 1.442695
        %v506 = vpow.pop %v505
        %v507 = vmul.f32 %v483, 1.442695
        %v508 = vpow.pop %v507
        %v509 = vmul.f32 %v484, 1.442695
        %v510 = vpow.pop %v509
        %v511 = vmul.f32 %v485, 1.442695
        %v512 = vpow.pop %v511
        %v513 = vmul.f32 %v486, 1.442695
        %v514 = vpow.pop %v513
        %v515 = vmul.f32 %v487, 1.442695
        %v516 = vpow.pop %v515
        %v517 = vmul.f32 %v488, 1.442695
        %v518 = vpow.pop %v517
        %v519 = vmul.f32 %v489, 1.442695
        %v520 = vpow.pop %v519
        %v521 = vmul.f32 %v490, 1.442695
        %v522 = vpow.pop %v521
        %v523 = vsel %vm425, %v492, 0.0
        %v524 = vsel %vm425, %v494, 0.0
        %v525 = vadd.f32 %v523, %v524
        %v526 = vsel %vm425, %v496, 0.0
        %v527 = vadd.f32 %v525, %v526
        %v528 = vsel %vm425, %v498, 0.0
        %v529 = vadd.f32 %v527, %v528
        %v530 = vsel %vm425, %v500, 0.0
        %v531 = vadd.f32 %v529, %v530
        %v532 = vsel %vm425, %v502, 0.0
        %v533 = vadd.f32 %v531, %v532
        %v534 = vsel %vm425, %v504, 0.0
        %v535 = vadd.f32 %v533, %v534
        %v536 = vsel %vm425, %v506, 0.0
        %v537 = vadd.f32 %v535, %v536
        %v538 = vsel %vm425, %v508, 0.0
        %v539 = vadd.f32 %v537, %v538
        %v540 = vsel %vm425, %v510, 0.0
        %v541 = vadd.f32 %v539, %v540
        %v542 = vsel %vm425, %v512, 0.0
        %v543 = vadd.f32 %v541, %v542
        %v544 = vsel %vm425, %v514, 0.0
        %v545 = vadd.f32 %v543, %v544
        %v546 = vsel %vm425, %v516, 0.0
        %v547 = vadd.f32 %v545, %v546
        %v548 = vsel %vm425, %v518, 0.0
        %v549 = vadd.f32 %v547, %v548
        %v550 = vsel %vm425, %v520, 0.0
        %v551 = vadd.f32 %v549, %v550
        %v552 = vsel %vm425, %v522, 0.0
        %v553 = vadd.f32 %v551, %v552
        %v554 = vrot.slane %v553, 4
        %v555 = vadd.f32 %v553, %v554
        %v556 = vrot.slane %v555, 2
        %v557 = vadd.f32 %v555, %v556
        %v558 = vrot.slane %v557, 1
        %v559 = vadd.f32 %v557, %v558
        %v560 = vadd.f32 %v468, %v559
        %vm561 = vcmask 8192
        %562 = vst.msk [vmem:[%s4] sm:$0x1] %vm561, %v560
        %563 = vst.msk [vmem:[%s3] sm:$0x1] %vm561, %v463
        %v564 = vld [vmem:[#allocation2] sm:$0x1]
        %v565 = vld [vmem:[%s222] sm:$0xff]
        %v566 = vld [vmem:[%s222 + $0x8] sm:$0xff]
        %v567 = vld [vmem:[%s222 + $0x10] sm:$0xff]
        %v568 = vld [vmem:[%s222 + $0x18] sm:$0xff]
        %v569 = vld [vmem:[%s222 + $0x20] sm:$0xff]
        %v570 = vld [vmem:[%s222 + $0x28] sm:$0xff]
        %v571 = vld [vmem:[%s222 + $0x30] sm:$0xff]
        %v572 = vld [vmem:[%s222 + $0x38] sm:$0xff]
        %v573 = vld [vmem:[%s222 + $0x40] sm:$0xff]
        %v574 = vld [vmem:[%s222 + $0x48] sm:$0xff]
        %v575 = vld [vmem:[%s222 + $0x50] sm:$0xff]
        %v576 = vld [vmem:[%s222 + $0x58] sm:$0xff]
        %v577 = vld [vmem:[%s222 + $0x60] sm:$0xff]
        %v578 = vld [vmem:[%s222 + $0x68] sm:$0xff]
        %v579 = vld [vmem:[%s222 + $0x70] sm:$0xff]
        %v580 = vld [vmem:[%s222 + $0x78] sm:$0xff]
        %v581 = vadd.f32 %v565, %v566
        %v582 = vadd.f32 %v581, %v567
        %v583 = vadd.f32 %v582, %v568
        %v584 = vadd.f32 %v583, %v569
        %v585 = vadd.f32 %v584, %v570
        %v586 = vadd.f32 %v585, %v571
        %v587 = vadd.f32 %v586, %v572
        %v588 = vadd.f32 %v587, %v573
        %v589 = vadd.f32 %v588, %v574
        %v590 = vadd.f32 %v589, %v575
        %v591 = vadd.f32 %v590, %v576
        %v592 = vadd.f32 %v591, %v577
        %v593 = vadd.f32 %v592, %v578
        %v594 = vadd.f32 %v593, %v579
        %v595 = vadd.f32 %v594, %v580
        %v596 = vrot.slane %v595, 4
        %v597 = vadd.f32 %v595, %v596
        %v598 = vrot.slane %v597, 2
        %v599 = vadd.f32 %v597, %v598
        %v600 = vrot.slane %v599, 1
        %v601 = vadd.f32 %v599, %v600
        %v602 = vadd.f32 %v564, %v601
        %603 = vst [vmem:[#allocation2] sm:$0x1] %v602
        %p604 = scmp.eq.s32.totalorder %s18, 1
        // Predicated region
        $region37: #{gcn2_forward.10} parent=31 // pred_check
          %p605 = pneg %p604
        $region38: #{gcn2_forward.10} parent=31 // pred_check_branch
          %607 = sbr.rel (%p605) target = $region40
        $region39: #{gcn2_forward.10} parent=31 // pred_region
          %v608 = vld [vmem:[#allocation2] sm:$0x1]
          %v609 = vmul.f32 %v608, 0.00390625
          %610 = vst [vmem:[#allocation2] sm:$0x1] %v609
        $region40: #{gcn2_forward.10} parent=31 // pred_fallthru
          _
        // Predicated region
        $region41: #{gcn2_forward.10} parent=31 // pred_check
          %p611 = pneg %p104
        $region42: #{gcn2_forward.10} parent=31 // pred_check_branch
          %613 = sbr.rel (%p611) target = $region44
        $region43: #{gcn2_forward.10} parent=31 // pred_region
          _
        $region44: #{gcn2_forward.10} parent=31 // pred_fallthru
          _
        // Predicated region
        $region45: #{gcn2_forward.10} parent=31 // pred_check
          %p614 = pneg %p125
        $region46: #{gcn2_forward.10} parent=31 // pred_check_branch
          %616 = sbr.rel (%p614) target = $region48
        $region47: #{gcn2_forward.10} parent=31 // pred_region
          _
        $region48: #{gcn2_forward.10} parent=31 // pred_fallthru
          _
        // Predicated region
        $region49: #{gcn2_forward.10} parent=31 // pred_check
          %p617 = pneg %p146
        $region50: #{gcn2_forward.10} parent=31 // pred_check_branch
          %619 = sbr.rel (%p617) target = $region52
        $region51: #{gcn2_forward.10} parent=31 // pred_region
          %s621 = ssub.s32 16, 16
          %622 = vsyncadd [#allocation3], %s621
          %s624 = sshll.u32 [#allocation2], 4
          %s625 = int_to_ptr.vmem [resolvable:$true] %s624
          %627 = dma.vmem_to_hbm [thread:$0]  %s625, 16, %s5, [#allocation3]
        $region52: #{gcn2_forward.10} parent=31 // pred_fallthru
          _
        // Predicated region
        $region53: #{gcn2_forward.10} parent=31 // pred_check
          %p628 = pneg %p104
        $region54: #{gcn2_forward.10} parent=31 // pred_check_branch
          %630 = sbr.rel (%p628) target = $region56
        $region55: #{gcn2_forward.10} parent=31 // pred_region
          _
        $region56: #{gcn2_forward.10} parent=31 // pred_fallthru
          _
        // Predicated region
        $region57: #{gcn2_forward.10} parent=31 // pred_check
          %p631 = pneg %p125
        $region58: #{gcn2_forward.10} parent=31 // pred_check_branch
          %633 = sbr.rel (%p631) target = $region60
        $region59: #{gcn2_forward.10} parent=31 // pred_region
          _
        $region60: #{gcn2_forward.10} parent=31 // pred_fallthru
          _
        // Predicated region
        $region61: #{gcn2_forward.10} parent=31 // pred_check
          %p634 = pneg %p146
        $region62: #{gcn2_forward.10} parent=31 // pred_check_branch
          %636 = sbr.rel (%p634) target = $region64
        $region63: #{gcn2_forward.10} parent=31 // pred_region
          %637 = dma.done [#allocation3], 16
        $region64: #{gcn2_forward.10} parent=31 // pred_fallthru
          _
      $region32: #{gcn2_forward.10} parent=5 // pred_fallthru
        _
      %p638 = scmp.le.s32.totalorder 2, %s13
      // Predicated region
      $region65: #{gcn2_forward.10} parent=5 // pred_check
        %p639 = pneg %p638
      $region66: #{gcn2_forward.10} parent=5 // pred_check_branch
        %641 = sbr.rel (%p639) target = $region68
      $region67: #{gcn2_forward.10} parent=5 // pred_region
        %s642 = ssub.s32 %s13, 2
      $region68: #{gcn2_forward.10} parent=5 // pred_fallthru
        _
    $region6: #{gcn2_forward.10} parent=1 // loop_footer
      %s17 = sadd.s32 1, %s13
    $region7: #{gcn2_forward.10} parent=1 // loop_footer_branch
      %12 = sbr.rel target = $region3
    $region8: #{gcn2_forward.10} parent=1 // loop_exit
      _
    %643 = vsyncpa [#allocation3], 1
    %s644 = scalar_lea.sflag [#allocation3], 1
    %645 = vsyncpa %s644, 1

// kernel: gcn2_forward.11
$region0: #{gcn2_forward.11}
  #allocation0 [shape = 'u32[]', space=smem, size = 0x4, offset = 0x4, fixed_abs, tag = 'smem constant byte address 0x4 - core index']
  #allocation1 [shape = 'u32[144,128]{1,0:T(1,128)}', space=vmem, size = 0x12000, scoped, tag = 'internal scratch']
  %s0 = inlined_call_operand.vmem [shape: f32[256,128], index: 0, kind: input, shape index: {}]
  %s1 = inlined_call_operand.vmem [shape: bf16[128,128], index: 1, kind: input, shape index: {}]
  %s2 = inlined_call_operand.vmem [shape: f32[1,2], index: 2, kind: input, shape index: {}]
  %s3 = inlined_call_operand.vmem [shape: f32[1,2], index: 3, kind: input, shape index: {}]
  %s4 = inlined_call_operand.vmem [shape: bf16[128,256], index: 4, kind: input, shape index: {}]
  %s5 = inlined_call_operand.vmem [shape: bf16[256,128], index: 5, kind: input, shape index: {}]
  %s6 = inlined_call_operand.vmem [shape: bf16[128,256], index: 6, kind: input, shape index: {}]
  %s7 = inlined_call_operand.vmem [shape: f32[1,256], index: 7, kind: input, shape index: {}]
  %s8 = inlined_call_operand.vmem [shape: bf16[256,128], index: 8, kind: input, shape index: {}]
  %s9 = inlined_call_operand.vmem [shape: f32[1,128], index: 9, kind: input, shape index: {}]
  %s10 = inlined_call_operand.vmem [shape: f32[1,128], index: 10, kind: input, shape index: {}]
  %s11 = inlined_call_operand.vmem [shape: f32[1,128], index: 11, kind: input, shape index: {}]
  %s12 = inlined_call_operand.hbm [shape: f32[1,128], index: 12, kind: output, shape index: {}]
  %s13 = sld [smem:[#allocation0]]
  $region85: #{gcn2_forward.11} parent=0
    _
  %s15 = ssub.s32 1, %s13
  %s16 = scalar_select 0, %s15, %s13
  $region1: #{gcn2_forward.11} parent=0
    #allocation2 [shape = 'u8[512]{0}', space=vmem, size = 0x400, scoped, tag = 'output window, operand 0, single buffered']
    #allocation3 [shape = 's32[2]{0}', space=sflag, size = 0x8, scoped, tag = 'scoped memory for gcn2_forward.11']
    %17 = vsyncpa [#allocation3], 0
    loop: start=0, step=1, limit=4
    $region2: #{gcn2_forward.11} parent=1 // loop_pre_header
      _
    $region3: #{gcn2_forward.11} parent=1 // loop_header
      %s19 = sphi 0, %s23
      %p20 = scmp.ge.s32.totalorder %s19, 4
      %s29 = sphi 0, %s31
      %s32 = sphi 0, %s29
      %s33 = sphi 0, %s32
      %s49 = sphi 0, %s33
      %s53 = sphi 0, %s53
      %s55 = sphi 0, %s53
      %s56 = sphi 0, %s55
      %s70 = sphi 0, %s56
      %s74 = sphi 0, %s74
      %s76 = sphi 0, %s74
      %s77 = sphi 0, %s76
      %s91 = sphi 0, %s77
      %s95 = sphi 0, %s95
      %s97 = sphi 0, %s95
      %s98 = sphi 0, %s97
      %s112 = sphi 0, %s98
      %s116 = sphi 0, %s116
      %s118 = sphi 0, %s116
      %s119 = sphi 0, %s118
      %s133 = sphi 0, %s119
      %s137 = sphi 0, %s137
      %s139 = sphi 0, %s137
      %s140 = sphi 0, %s139
      %s154 = sphi 0, %s140
      %s158 = sphi 0, %s158
      %s160 = sphi 0, %s158
      %s161 = sphi 0, %s160
      %s175 = sphi 0, %s161
      %s179 = sphi 0, %s179
      %s181 = sphi 0, %s179
      %s182 = sphi 0, %s181
      %s196 = sphi 0, %s182
      %s200 = sphi 0, %s200
      %s202 = sphi 0, %s200
      %s203 = sphi 0, %s202
      %s217 = sphi 0, %s203
      %s221 = sphi 0, %s221
      %s223 = sphi 0, %s221
      %s224 = sphi 0, %s223
      %s238 = sphi 0, %s224
      %s242 = sphi 0, %s242
      %s244 = sphi 0, %s242
      %s245 = sphi 0, %s244
      %s259 = sphi 0, %s245
      %s263 = sphi 0, %s263
      %s265 = sphi 0, %s263
      %s266 = sphi 0, %s265
      %s280 = sphi 0, %s266
      %s284 = sphi 0, %s284
      %s286 = sphi 0, %s284
      %s287 = sphi 0, %s286
      %s301 = sphi 0, %s287
    $region4: #{gcn2_forward.11} parent=1 // loop_header_branch
      %22 = sbr.rel (%p20) target = $region8
    $region5: #{gcn2_forward.11} parent=1 // loop_body
      %s24 = ssub.s32 %s19, 1
      %s25 = ssub.s32 %s19, 2
      %s26 = sadd.s32 %s19, 1
      %s27 = ssub.s32 %s19, %s26
      %p28 = scmp.eq.s32.totalorder %s27, 0
      %s30 = sadd.s32 %s29, 1
      %s31 = scalar_select %p28, %s29, %s30
      %p34 = pneg %p28
      %p35 = scmp.eq.s32.totalorder %s19, 1
      %p36 = por %p34, %p35
      %p37 = scmp.ne.s32.totalorder %s29, %s32
      %p38 = scmp.eq.s32.totalorder %s19, 0
      %p39 = por %p37, %p38
      %p40 = scmp.ne.s32.totalorder %s29, %s32
      %p41 = scmp.eq.s32.totalorder %s24, 1
      %p42 = por %p40, %p41
      %p43 = scmp.ne.s32.totalorder %s32, %s33
      %p44 = scmp.eq.s32.totalorder %s24, 0
      %p45 = por %p43, %p44
      %p46 = scmp.ne.s32.totalorder %s32, %s33
      %p47 = scmp.eq.s32.totalorder %s25, 1
      %p48 = por %p46, %p47
      %p50 = scmp.ne.s32.totalorder %s33, %s49
      %p51 = scmp.eq.s32.totalorder %s25, 0
      %p52 = por %p50, %p51
      %s54 = sadd.s32 %s53, 1
      %p57 = scmp.eq.s32.totalorder %s19, 1
      %p58 = scmp.ne.s32.totalorder %s53, %s55
      %p59 = scmp.eq.s32.totalorder %s19, 0
      %p60 = por %p58, %p59
      %p61 = scmp.ne.s32.totalorder %s53, %s55
      %p62 = scmp.eq.s32.totalorder %s24, 1
      %p63 = por %p61, %p62
      %p64 = scmp.ne.s32.totalorder %s55, %s56
      %p65 = scmp.eq.s32.totalorder %s24, 0
      %p66 = por %p64, %p65
      %p67 = scmp.ne.s32.totalorder %s55, %s56
      %p68 = scmp.eq.s32.totalorder %s25, 1
      %p69 = por %p67, %p68
      %p71 = scmp.ne.s32.totalorder %s56, %s70
      %p72 = scmp.eq.s32.totalorder %s25, 0
      %p73 = por %p71, %p72
      %s75 = sadd.s32 %s74, 1
      %p78 = scmp.eq.s32.totalorder %s19, 1
      %p79 = scmp.ne.s32.totalorder %s74, %s76
      %p80 = scmp.eq.s32.totalorder %s19, 0
      %p81 = por %p79, %p80
      %p82 = scmp.ne.s32.totalorder %s74, %s76
      %p83 = scmp.eq.s32.totalorder %s24, 1
      %p84 = por %p82, %p83
      %p85 = scmp.ne.s32.totalorder %s76, %s77
      %p86 = scmp.eq.s32.totalorder %s24, 0
      %p87 = por %p85, %p86
      %p88 = scmp.ne.s32.totalorder %s76, %s77
      %p89 = scmp.eq.s32.totalorder %s25, 1
      %p90 = por %p88, %p89
      %p92 = scmp.ne.s32.totalorder %s77, %s91
      %p93 = scmp.eq.s32.totalorder %s25, 0
      %p94 = por %p92, %p93
      %s96 = sadd.s32 %s95, 1
      %p99 = scmp.eq.s32.totalorder %s19, 1
      %p100 = scmp.ne.s32.totalorder %s95, %s97
      %p101 = scmp.eq.s32.totalorder %s19, 0
      %p102 = por %p100, %p101
      %p103 = scmp.ne.s32.totalorder %s95, %s97
      %p104 = scmp.eq.s32.totalorder %s24, 1
      %p105 = por %p103, %p104
      %p106 = scmp.ne.s32.totalorder %s97, %s98
      %p107 = scmp.eq.s32.totalorder %s24, 0
      %p108 = por %p106, %p107
      %p109 = scmp.ne.s32.totalorder %s97, %s98
      %p110 = scmp.eq.s32.totalorder %s25, 1
      %p111 = por %p109, %p110
      %p113 = scmp.ne.s32.totalorder %s98, %s112
      %p114 = scmp.eq.s32.totalorder %s25, 0
      %p115 = por %p113, %p114
      %s117 = sadd.s32 %s116, 1
      %p120 = scmp.eq.s32.totalorder %s19, 1
      %p121 = scmp.ne.s32.totalorder %s116, %s118
      %p122 = scmp.eq.s32.totalorder %s19, 0
      %p123 = por %p121, %p122
      %p124 = scmp.ne.s32.totalorder %s116, %s118
      %p125 = scmp.eq.s32.totalorder %s24, 1
      %p126 = por %p124, %p125
      %p127 = scmp.ne.s32.totalorder %s118, %s119
      %p128 = scmp.eq.s32.totalorder %s24, 0
      %p129 = por %p127, %p128
      %p130 = scmp.ne.s32.totalorder %s118, %s119
      %p131 = scmp.eq.s32.totalorder %s25, 1
      %p132 = por %p130, %p131
      %p134 = scmp.ne.s32.totalorder %s119, %s133
      %p135 = scmp.eq.s32.totalorder %s25, 0
      %p136 = por %p134, %p135
      %s138 = sadd.s32 %s137, 1
      %p141 = scmp.eq.s32.totalorder %s19, 1
      %p142 = scmp.ne.s32.totalorder %s137, %s139
      %p143 = scmp.eq.s32.totalorder %s19, 0
      %p144 = por %p142, %p143
      %p145 = scmp.ne.s32.totalorder %s137, %s139
      %p146 = scmp.eq.s32.totalorder %s24, 1
      %p147 = por %p145, %p146
      %p148 = scmp.ne.s32.totalorder %s139, %s140
      %p149 = scmp.eq.s32.totalorder %s24, 0
      %p150 = por %p148, %p149
      %p151 = scmp.ne.s32.totalorder %s139, %s140
      %p152 = scmp.eq.s32.totalorder %s25, 1
      %p153 = por %p151, %p152
      %p155 = scmp.ne.s32.totalorder %s140, %s154
      %p156 = scmp.eq.s32.totalorder %s25, 0
      %p157 = por %p155, %p156
      %s159 = sadd.s32 %s158, 1
      %p162 = scmp.eq.s32.totalorder %s19, 1
      %p163 = scmp.ne.s32.totalorder %s158, %s160
      %p164 = scmp.eq.s32.totalorder %s19, 0
      %p165 = por %p163, %p164
      %p166 = scmp.ne.s32.totalorder %s158, %s160
      %p167 = scmp.eq.s32.totalorder %s24, 1
      %p168 = por %p166, %p167
      %p169 = scmp.ne.s32.totalorder %s160, %s161
      %p170 = scmp.eq.s32.totalorder %s24, 0
      %p171 = por %p169, %p170
      %p172 = scmp.ne.s32.totalorder %s160, %s161
      %p173 = scmp.eq.s32.totalorder %s25, 1
      %p174 = por %p172, %p173
      %p176 = scmp.ne.s32.totalorder %s161, %s175
      %p177 = scmp.eq.s32.totalorder %s25, 0
      %p178 = por %p176, %p177
      %s180 = sadd.s32 %s179, 1
      %p183 = scmp.eq.s32.totalorder %s19, 1
      %p184 = scmp.ne.s32.totalorder %s179, %s181
      %p185 = scmp.eq.s32.totalorder %s19, 0
      %p186 = por %p184, %p185
      %p187 = scmp.ne.s32.totalorder %s179, %s181
      %p188 = scmp.eq.s32.totalorder %s24, 1
      %p189 = por %p187, %p188
      %p190 = scmp.ne.s32.totalorder %s181, %s182
      %p191 = scmp.eq.s32.totalorder %s24, 0
      %p192 = por %p190, %p191
      %p193 = scmp.ne.s32.totalorder %s181, %s182
      %p194 = scmp.eq.s32.totalorder %s25, 1
      %p195 = por %p193, %p194
      %p197 = scmp.ne.s32.totalorder %s182, %s196
      %p198 = scmp.eq.s32.totalorder %s25, 0
      %p199 = por %p197, %p198
      %s201 = sadd.s32 %s200, 1
      %p204 = scmp.eq.s32.totalorder %s19, 1
      %p205 = scmp.ne.s32.totalorder %s200, %s202
      %p206 = scmp.eq.s32.totalorder %s19, 0
      %p207 = por %p205, %p206
      %p208 = scmp.ne.s32.totalorder %s200, %s202
      %p209 = scmp.eq.s32.totalorder %s24, 1
      %p210 = por %p208, %p209
      %p211 = scmp.ne.s32.totalorder %s202, %s203
      %p212 = scmp.eq.s32.totalorder %s24, 0
      %p213 = por %p211, %p212
      %p214 = scmp.ne.s32.totalorder %s202, %s203
      %p215 = scmp.eq.s32.totalorder %s25, 1
      %p216 = por %p214, %p215
      %p218 = scmp.ne.s32.totalorder %s203, %s217
      %p219 = scmp.eq.s32.totalorder %s25, 0
      %p220 = por %p218, %p219
      %s222 = sadd.s32 %s221, 1
      %p225 = scmp.eq.s32.totalorder %s19, 1
      %p226 = scmp.ne.s32.totalorder %s221, %s223
      %p227 = scmp.eq.s32.totalorder %s19, 0
      %p228 = por %p226, %p227
      %p229 = scmp.ne.s32.totalorder %s221, %s223
      %p230 = scmp.eq.s32.totalorder %s24, 1
      %p231 = por %p229, %p230
      %p232 = scmp.ne.s32.totalorder %s223, %s224
      %p233 = scmp.eq.s32.totalorder %s24, 0
      %p234 = por %p232, %p233
      %p235 = scmp.ne.s32.totalorder %s223, %s224
      %p236 = scmp.eq.s32.totalorder %s25, 1
      %p237 = por %p235, %p236
      %p239 = scmp.ne.s32.totalorder %s224, %s238
      %p240 = scmp.eq.s32.totalorder %s25, 0
      %p241 = por %p239, %p240
      %s243 = sadd.s32 %s242, 1
      %p246 = scmp.eq.s32.totalorder %s19, 1
      %p247 = scmp.ne.s32.totalorder %s242, %s244
      %p248 = scmp.eq.s32.totalorder %s19, 0
      %p249 = por %p247, %p248
      %p250 = scmp.ne.s32.totalorder %s242, %s244
      %p251 = scmp.eq.s32.totalorder %s24, 1
      %p252 = por %p250, %p251
      %p253 = scmp.ne.s32.totalorder %s244, %s245
      %p254 = scmp.eq.s32.totalorder %s24, 0
      %p255 = por %p253, %p254
      %p256 = scmp.ne.s32.totalorder %s244, %s245
      %p257 = scmp.eq.s32.totalorder %s25, 1
      %p258 = por %p256, %p257
      %p260 = scmp.ne.s32.totalorder %s245, %s259
      %p261 = scmp.eq.s32.totalorder %s25, 0
      %p262 = por %p260, %p261
      %s264 = sadd.s32 %s263, 1
      %p267 = scmp.eq.s32.totalorder %s19, 1
      %p268 = scmp.ne.s32.totalorder %s263, %s265
      %p269 = scmp.eq.s32.totalorder %s19, 0
      %p270 = por %p268, %p269
      %p271 = scmp.ne.s32.totalorder %s263, %s265
      %p272 = scmp.eq.s32.totalorder %s24, 1
      %p273 = por %p271, %p272
      %p274 = scmp.ne.s32.totalorder %s265, %s266
      %p275 = scmp.eq.s32.totalorder %s24, 0
      %p276 = por %p274, %p275
      %p277 = scmp.ne.s32.totalorder %s265, %s266
      %p278 = scmp.eq.s32.totalorder %s25, 1
      %p279 = por %p277, %p278
      %p281 = scmp.ne.s32.totalorder %s266, %s280
      %p282 = scmp.eq.s32.totalorder %s25, 0
      %p283 = por %p281, %p282
      %s285 = sadd.s32 %s284, 1
      %p288 = scmp.eq.s32.totalorder %s19, 1
      %p289 = scmp.ne.s32.totalorder %s284, %s286
      %p290 = scmp.eq.s32.totalorder %s19, 0
      %p291 = por %p289, %p290
      %p292 = scmp.ne.s32.totalorder %s284, %s286
      %p293 = scmp.eq.s32.totalorder %s24, 1
      %p294 = por %p292, %p293
      %p295 = scmp.ne.s32.totalorder %s286, %s287
      %p296 = scmp.eq.s32.totalorder %s24, 0
      %p297 = por %p295, %p296
      %p298 = scmp.ne.s32.totalorder %s286, %s287
      %p299 = scmp.eq.s32.totalorder %s25, 1
      %p300 = por %p298, %p299
      %p302 = scmp.ne.s32.totalorder %s287, %s301
      %p303 = scmp.eq.s32.totalorder %s25, 0
      %p304 = por %p302, %p303
      %p305 = scmp.le.s32.totalorder 1, %s19
      %p306 = scmp.lt.s32.totalorder %s19, 3
      %p307 = pnand %p305, %p306
      %p308 = pneg %p307
      // Predicated region
      $region9: #{gcn2_forward.11} parent=5 // pred_check
        _
      $region10: #{gcn2_forward.11} parent=5 // pred_check_branch
        %310 = sbr.rel (%p307) target = $region12
      $region11: #{gcn2_forward.11} parent=5 // pred_region
        %s311 = ssub.s32 %s19, 1
        // Predicated region
        $region13: #{gcn2_forward.11} parent=11 // pred_check
          %p312 = pneg %p66
        $region14: #{gcn2_forward.11} parent=11 // pred_check_branch
          %314 = sbr.rel (%p312) target = $region16
        $region15: #{gcn2_forward.11} parent=11 // pred_region
          _
        $region16: #{gcn2_forward.11} parent=11 // pred_fallthru
          _
        // Predicated region
        $region17: #{gcn2_forward.11} parent=11 // pred_check
          %p315 = pneg %p87
        $region18: #{gcn2_forward.11} parent=11 // pred_check_branch
          %317 = sbr.rel (%p315) target = $region20
        $region19: #{gcn2_forward.11} parent=11 // pred_region
          _
        $region20: #{gcn2_forward.11} parent=11 // pred_fallthru
          _
        // Predicated region
        $region21: #{gcn2_forward.11} parent=11 // pred_check
          %p318 = pneg %p108
        $region22: #{gcn2_forward.11} parent=11 // pred_check_branch
          %320 = sbr.rel (%p318) target = $region24
        $region23: #{gcn2_forward.11} parent=11 // pred_region
          _
        $region24: #{gcn2_forward.11} parent=11 // pred_fallthru
          _
        // Predicated region
        $region25: #{gcn2_forward.11} parent=11 // pred_check
          %p321 = pneg %p129
        $region26: #{gcn2_forward.11} parent=11 // pred_check_branch
          %323 = sbr.rel (%p321) target = $region28
        $region27: #{gcn2_forward.11} parent=11 // pred_region
          _
        $region28: #{gcn2_forward.11} parent=11 // pred_fallthru
          _
        // Predicated region
        $region29: #{gcn2_forward.11} parent=11 // pred_check
          %p324 = pneg %p150
        $region30: #{gcn2_forward.11} parent=11 // pred_check_branch
          %326 = sbr.rel (%p324) target = $region32
        $region31: #{gcn2_forward.11} parent=11 // pred_region
          _
        $region32: #{gcn2_forward.11} parent=11 // pred_fallthru
          _
        // Predicated region
        $region33: #{gcn2_forward.11} parent=11 // pred_check
          %p327 = pneg %p171
        $region34: #{gcn2_forward.11} parent=11 // pred_check_branch
          %329 = sbr.rel (%p327) target = $region36
        $region35: #{gcn2_forward.11} parent=11 // pred_region
          _
        $region36: #{gcn2_forward.11} parent=11 // pred_fallthru
          _
        // Predicated region
        $region37: #{gcn2_forward.11} parent=11 // pred_check
          %p330 = pneg %p192
        $region38: #{gcn2_forward.11} parent=11 // pred_check_branch
          %332 = sbr.rel (%p330) target = $region40
        $region39: #{gcn2_forward.11} parent=11 // pred_region
          _
        $region40: #{gcn2_forward.11} parent=11 // pred_fallthru
          _
        // Predicated region
        $region41: #{gcn2_forward.11} parent=11 // pred_check
          %p333 = pneg %p213
        $region42: #{gcn2_forward.11} parent=11 // pred_check_branch
          %335 = sbr.rel (%p333) target = $region44
        $region43: #{gcn2_forward.11} parent=11 // pred_region
          _
        $region44: #{gcn2_forward.11} parent=11 // pred_fallthru
          _
        // Predicated region
        $region45: #{gcn2_forward.11} parent=11 // pred_check
          %p336 = pneg %p234
        $region46: #{gcn2_forward.11} parent=11 // pred_check_branch
          %338 = sbr.rel (%p336) target = $region48
        $region47: #{gcn2_forward.11} parent=11 // pred_region
          _
        $region48: #{gcn2_forward.11} parent=11 // pred_fallthru
          _
        // Predicated region
        $region49: #{gcn2_forward.11} parent=11 // pred_check
          %p339 = pneg %p255
        $region50: #{gcn2_forward.11} parent=11 // pred_check_branch
          %341 = sbr.rel (%p339) target = $region52
        $region51: #{gcn2_forward.11} parent=11 // pred_region
          _
        $region52: #{gcn2_forward.11} parent=11 // pred_fallthru
          _
        // Predicated region
        $region53: #{gcn2_forward.11} parent=11 // pred_check
          %p342 = pneg %p276
        $region54: #{gcn2_forward.11} parent=11 // pred_check_branch
          %344 = sbr.rel (%p342) target = $region56
        $region55: #{gcn2_forward.11} parent=11 // pred_region
          _
        $region56: #{gcn2_forward.11} parent=11 // pred_fallthru
          _
      $region12: #{gcn2_forward.11} parent=5 // pred_fallthru
        _
      %p345 = scmp.lt.s32.totalorder %s19, 2
      // Predicated region
      $region57: #{gcn2_forward.11} parent=5 // pred_check
        %p346 = pneg %p345
      $region58: #{gcn2_forward.11} parent=5 // pred_check_branch
        %348 = sbr.rel (%p346) target = $region60
      $region59: #{gcn2_forward.11} parent=5 // pred_region
        // Predicated region
        $region61: #{gcn2_forward.11} parent=59 // pred_check
          %p349 = pneg %p39
        $region62: #{gcn2_forward.11} parent=59 // pred_check_branch
          %351 = sbr.rel (%p349) target = $region64
        $region63: #{gcn2_forward.11} parent=59 // pred_region
          %s352 = smul.u32 16, %s19
          %p353 = scmp.lt.s32.totalorder %s352, 31
          %s354 = scalar_select %p353, %s352, 31
          %s355 = smul.addr %s354, 8
          %s356 = scalar_lea.vmem %s0, %s355
          %s357 = smul.u32 16, %s19
        $region64: #{gcn2_forward.11} parent=59 // pred_fallthru
          _
      $region60: #{gcn2_forward.11} parent=5 // pred_fallthru
        _
      %p358 = scmp.le.s32.totalorder 1, %s19
      %p359 = scmp.lt.s32.totalorder %s19, 3
      %p360 = pnand %p358, %p359
      %p361 = pneg %p360
      // Predicated region
      $region65: #{gcn2_forward.11} parent=5 // pred_check
        _
      $region66: #{gcn2_forward.11} parent=5 // pred_check_branch
        %363 = sbr.rel (%p360) target = $region68
      $region67: #{gcn2_forward.11} parent=5 // pred_region
        %s364 = ssub.s32 %s19, 1
        %s365 = smul.u32 16, %s24
        %p366 = scmp.lt.s32.totalorder %s365, 31
        %s367 = scalar_select %p366, %s365, 31
        %s368 = smul.addr %s367, 8
        %s369 = scalar_lea.vmem %s0, %s368
        %p370 = pneg %p45
        %p371 = pneg %p42
        %p372 = pneg %p66
        %p373 = pneg %p63
        %p374 = pneg %p87
        %p375 = pneg %p84
        %p376 = pneg %p108
        %p377 = pneg %p105
        %p378 = pneg %p129
        %p379 = pneg %p126
        %p380 = pneg %p150
        %p381 = pneg %p147
        %p382 = pneg %p171
        %p383 = pneg %p168
        %p384 = pneg %p192
        %p385 = pneg %p189
        %p386 = pneg %p213
        %p387 = pneg %p210
        %p388 = pneg %p234
        %p389 = pneg %p231
        %p390 = pneg %p255
        %p391 = pneg %p252
        %p392 = pneg %p276
        %p393 = pneg %p273
        %p394 = pneg %p297
        %p395 = pneg %p294
        %s396 = smul.u32 16, %s24
        %p397 = scmp.lt.s32.totalorder %s396, 31
        %s398 = scalar_select %p397, %s396, 31
        %s399 = smul.addr %s398, 8
        %s400 = scalar_lea.vmem %s0, %s399
        %s401 = smul.u32 16, %s24
        %p403 = scmp.eq.s32.totalorder %s24, 0
        // Predicated region
        $region69: #{gcn2_forward.11} parent=67 // pred_check
          %p404 = pneg %p403
        $region70: #{gcn2_forward.11} parent=67 // pred_check_branch
          %406 = sbr.rel (%p404) target = $region72
        $region71: #{gcn2_forward.11} parent=67 // pred_region
          %407 = vst [vmem:[#allocation2] sm:$0x1] 0.0
        $region72: #{gcn2_forward.11} parent=67 // pred_fallthru
          _
        %v408 = vld [vmem:[%s400] sm:$0xff]
        %v409 = vld [vmem:[%s400 + $0x8] sm:$0xff]
        %v410 = vld [vmem:[%s400 + $0x10] sm:$0xff]
        %v411 = vld [vmem:[%s400 + $0x18] sm:$0xff]
        %v412 = vld [vmem:[%s400 + $0x20] sm:$0xff]
        %v413 = vld [vmem:[%s400 + $0x28] sm:$0xff]
        %v414 = vld [vmem:[%s400 + $0x30] sm:$0xff]
        %v415 = vld [vmem:[%s400 + $0x38] sm:$0xff]
        %v416 = vld [vmem:[%s400 + $0x40] sm:$0xff]
        %v417 = vld [vmem:[%s400 + $0x48] sm:$0xff]
        %v418 = vld [vmem:[%s400 + $0x50] sm:$0xff]
        %v419 = vld [vmem:[%s400 + $0x58] sm:$0xff]
        %v420 = vld [vmem:[%s400 + $0x60] sm:$0xff]
        %v421 = vld [vmem:[%s400 + $0x68] sm:$0xff]
        %v422 = vld [vmem:[%s400 + $0x70] sm:$0xff]
        %v423 = vld [vmem:[%s400 + $0x78] sm:$0xff]
        %v424 = vpack.c.bf16 %v409, %v408
        %v425 = vpack.c.bf16 %v411, %v410
        %v426 = vpack.c.bf16 %v413, %v412
        %v427 = vpack.c.bf16 %v415, %v414
        %v428 = vpack.c.bf16 %v417, %v416
        %v429 = vpack.c.bf16 %v419, %v418
        %v430 = vpack.c.bf16 %v421, %v420
        %v431 = vpack.c.bf16 %v423, %v422
        %v432 = vld [vmem:[%s1] sm:$0xf]
        %v433 = vld [vmem:[%s1 + $0x4] sm:$0xf]
        %v434 = vld [vmem:[%s1 + $0x8] sm:$0xf]
        %v435 = vld [vmem:[%s1 + $0xc] sm:$0xf]
        %v436 = vld [vmem:[%s1 + $0x10] sm:$0xf]
        %v437 = vld [vmem:[%s1 + $0x14] sm:$0xf]
        %v438 = vld [vmem:[%s1 + $0x18] sm:$0xf]
        %v439 = vld [vmem:[%s1 + $0x1c] sm:$0xf]
        %v440 = vld [vmem:[%s1 + $0x20] sm:$0xf]
        %v441 = vld [vmem:[%s1 + $0x24] sm:$0xf]
        %v442 = vld [vmem:[%s1 + $0x28] sm:$0xf]
        %v443 = vld [vmem:[%s1 + $0x2c] sm:$0xf]
        %v444 = vld [vmem:[%s1 + $0x30] sm:$0xf]
        %v445 = vld [vmem:[%s1 + $0x34] sm:$0xf]
        %v446 = vld [vmem:[%s1 + $0x38] sm:$0xf]
        %v447 = vld [vmem:[%s1 + $0x3c] sm:$0xf]
        %v464 = vunpack.c.l.b16 %v432
        %v465 = vunpack.c.l.b16 %v433
        %v466 = vunpack.c.l.b16 %v434
        %v467 = vunpack.c.l.b16 %v435
        %v468 = vunpack.c.l.b16 %v436
        %v469 = vunpack.c.l.b16 %v437
        %v470 = vunpack.c.l.b16 %v438
        %v471 = vunpack.c.l.b16 %v439
        %v472 = vunpack.c.l.b16 %v440
        %v473 = vunpack.c.l.b16 %v441
        %v474 = vunpack.c.l.b16 %v442
        %v475 = vunpack.c.l.b16 %v443
        %v476 = vunpack.c.l.b16 %v444
        %v477 = vunpack.c.l.b16 %v445
        %v478 = vunpack.c.l.b16 %v446
        %v479 = vunpack.c.l.b16 %v447
        %v480 = vpack.c.b16 %v465, %v464
        %v481 = vpack.c.b16 %v467, %v466
        %v482 = vpack.c.b16 %v469, %v468
        %v483 = vpack.c.b16 %v471, %v470
        %v484 = vpack.c.b16 %v473, %v472
        %v485 = vpack.c.b16 %v475, %v474
        %v486 = vpack.c.b16 %v477, %v476
        %v487 = vpack.c.b16 %v479, %v478
        %496 = vmatprep.subr.bf16.mxu0 0
        %497 = vmatpush1.bf16.msra.mxu0 %v480
        %498 = vmatprep.subr.bf16.mxu0 0
        %499 = vmatpush1.bf16.msra.mxu0 %v481
        %500 = vmatprep.subr.bf16.mxu0 0
        %501 = vmatpush1.bf16.msra.mxu0 %v482
        %502 = vmatprep.subr.bf16.mxu0 0
        %503 = vmatpush1.bf16.msra.mxu0 %v483
        %504 = vmatprep.subr.bf16.mxu0 0
        %505 = vmatpush1.bf16.msra.mxu0 %v484
        %506 = vmatprep.subr.bf16.mxu0 0
        %507 = vmatpush1.bf16.msra.mxu0 %v485
        %508 = vmatprep.subr.bf16.mxu0 0
        %509 = vmatpush1.bf16.msra.mxu0 %v486
        %510 = vmatprep.subr.bf16.mxu0 0
        %511 = vmatpush1.bf16.msra.mxu0 %v487
        %512 = vmatprep.subr.bf16.mxu0 0
        %513 = vmatpush1.bf16.msra.mxu0 0
        %514 = vmatprep.subr.bf16.mxu0 0
        %515 = vmatpush1.bf16.msra.mxu0 0
        %516 = vmatprep.subr.bf16.mxu0 0
        %517 = vmatpush1.bf16.msra.mxu0 0
        %518 = vmatprep.subr.bf16.mxu0 0
        %519 = vmatpush1.bf16.msra.mxu0 0
        %520 = vmatprep.subr.bf16.mxu0 0
        %521 = vmatpush1.bf16.msra.mxu0 0
        %522 = vmatprep.subr.bf16.mxu0 0
        %523 = vmatpush1.bf16.msra.mxu0 0
        %524 = vmatprep.subr.bf16.mxu0 0
        %525 = vmatpush1.bf16.msra.mxu0 0
        %526 = vmatprep.subr.bf16.mxu0 0
        %527 = vmatpush1.bf16.msra.mxu0 0
        %528 = vmatprep.mubr.bf16.mxu0 0
        %529 = vmatmul.mubr.bf16.gmra.mrb[0].mxu0 %v424
        %v530 = vpop.f32.mrb[0].mxu0
        %v531 = vadd.f32 0.0, %v530
        %v532 = vpop.f32.mrb[0].mxu0
        %v533 = vpop.f32.mrb[0].mxu0
        %v534 = vadd.f32 0.0, %v533
        %v535 = vpop.f32.mrb[0].mxu0
        %536 = vmatprep.mubr.bf16.mxu0 0
        %537 = vmatmul.mubr.bf16.gmra.mrb[0].mxu0 %v425
        %v538 = vpop.f32.mrb[0].mxu0
        %v539 = vadd.f32 0.0, %v538
        %v540 = vpop.f32.mrb[0].mxu0
        %v541 = vpop.f32.mrb[0].mxu0
        %v542 = vadd.f32 0.0, %v541
        %v543 = vpop.f32.mrb[0].mxu0
        %544 = vmatprep.mubr.bf16.mxu0 0
        %545 = vmatmul.mubr.bf16.gmra.mrb[0].mxu0 %v426
        %v546 = vpop.f32.mrb[0].mxu0
        %v547 = vadd.f32 0.0, %v546
        %v548 = vpop.f32.mrb[0].mxu0
        %v549 = vpop.f32.mrb[0].mxu0
        %v550 = vadd.f32 0.0, %v549
        %v551 = vpop.f32.mrb[0].mxu0
        %552 = vmatprep.mubr.bf16.mxu0 0
        %553 = vmatmul.mubr.bf16.gmra.mrb[0].mxu0 %v427
        %v554 = vpop.f32.mrb[0].mxu0
        %v555 = vadd.f32 0.0, %v554
        %v556 = vpop.f32.mrb[0].mxu0
        %v557 = vpop.f32.mrb[0].mxu0
        %v558 = vadd.f32 0.0, %v557
        %v559 = vpop.f32.mrb[0].mxu0
        %560 = vmatprep.mubr.bf16.mxu0 0
        %561 = vmatmul.mubr.bf16.gmra.mrb[0].mxu0 %v428
        %v562 = vpop.f32.mrb[0].mxu0
        %v563 = vadd.f32 0.0, %v562
        %v564 = vpop.f32.mrb[0].mxu0
        %v565 = vpop.f32.mrb[0].mxu0
        %v566 = vadd.f32 0.0, %v565
        %v567 = vpop.f32.mrb[0].mxu0
        %568 = vmatprep.mubr.bf16.mxu0 0
        %569 = vmatmul.mubr.bf16.gmra.mrb[0].mxu0 %v429
        %v570 = vpop.f32.mrb[0].mxu0
        %v571 = vadd.f32 0.0, %v570
        %v572 = vpop.f32.mrb[0].mxu0
        %v573 = vpop.f32.mrb[0].mxu0
        %v574 = vadd.f32 0.0, %v573
        %v575 = vpop.f32.mrb[0].mxu0
        %576 = vmatprep.mubr.bf16.mxu0 0
        %577 = vmatmul.mubr.bf16.gmra.mrb[0].mxu0 %v430
        %v578 = vpop.f32.mrb[0].mxu0
        %v579 = vadd.f32 0.0, %v578
        %v580 = vpop.f32.mrb[0].mxu0
        %v581 = vpop.f32.mrb[0].mxu0
        %v582 = vadd.f32 0.0, %v581
        %v583 = vpop.f32.mrb[0].mxu0
        %584 = vmatprep.mubr.bf16.mxu0 0
        %585 = vmatmul.mubr.bf16.gmra.mrb[0].mxu0 %v431
        %v586 = vpop.f32.mrb[0].mxu0
        %v587 = vadd.f32 0.0, %v586
        %v588 = vpop.f32.mrb[0].mxu0
        %v589 = vpop.f32.mrb[0].mxu0
        %v590 = vadd.f32 0.0, %v589
        %v591 = vpop.f32.mrb[0].mxu0
        %592 = vdwg.mxu0
        %v593 = vld [vmem:[%s2] sm:$0x1]
        %v595 = vlaneseq
        %v596 = vshrl.u32 %v595, 7
        %v597 = vsub.s32 0, %v596
        %v598 = vrot.slane %v593, %v597
        %v600 = vsub.f32 %v531, %v598
        %v601 = vsub.f32 %v534, %v598
        %v602 = vsub.f32 %v539, %v598
        %v603 = vsub.f32 %v542, %v598
        %v604 = vsub.f32 %v547, %v598
        %v605 = vsub.f32 %v550, %v598
        %v606 = vsub.f32 %v555, %v598
        %v607 = vsub.f32 %v558, %v598
        %v608 = vsub.f32 %v563, %v598
        %v609 = vsub.f32 %v566, %v598
        %v610 = vsub.f32 %v571, %v598
        %v611 = vsub.f32 %v574, %v598
        %v612 = vsub.f32 %v579, %v598
        %v613 = vsub.f32 %v582, %v598
        %v614 = vsub.f32 %v587, %v598
        %v615 = vsub.f32 %v590, %v598
        %v616 = vmul.f32 %v600, 1.442695
        %v617 = vpow.pop %v616
        %v618 = vmul.f32 %v601, 1.442695
        %v619 = vpow.pop %v618
        %v620 = vmul.f32 %v602, 1.442695
        %v621 = vpow.pop %v620
        %v622 = vmul.f32 %v603, 1.442695
        %v623 = vpow.pop %v622
        %v624 = vmul.f32 %v604, 1.442695
        %v625 = vpow.pop %v624
        %v626 = vmul.f32 %v605, 1.442695
        %v627 = vpow.pop %v626
        %v628 = vmul.f32 %v606, 1.442695
        %v629 = vpow.pop %v628
        %v630 = vmul.f32 %v607, 1.442695
        %v631 = vpow.pop %v630
        %v632 = vmul.f32 %v608, 1.442695
        %v633 = vpow.pop %v632
        %v634 = vmul.f32 %v609, 1.442695
        %v635 = vpow.pop %v634
        %v636 = vmul.f32 %v610, 1.442695
        %v637 = vpow.pop %v636
        %v638 = vmul.f32 %v611, 1.442695
        %v639 = vpow.pop %v638
        %v640 = vmul.f32 %v612, 1.442695
        %v641 = vpow.pop %v640
        %v642 = vmul.f32 %v613, 1.442695
        %v643 = vpow.pop %v642
        %v644 = vmul.f32 %v614, 1.442695
        %v645 = vpow.pop %v644
        %v646 = vmul.f32 %v615, 1.442695
        %v647 = vpow.pop %v646
        %v648 = vld [vmem:[%s3] sm:$0x1]
        %v649 = vrcp.pop %v648
        %v651 = vlaneseq
        %v652 = vshrl.u32 %v651, 7
        %v653 = vsub.s32 0, %v652
        %v654 = vrot.slane %v649, %v653
        %v656 = vmul.f32 %v617, %v654
        %v657 = vmul.f32 %v619, %v654
        %v658 = vmul.f32 %v621, %v654
        %v659 = vmul.f32 %v623, %v654
        %v660 = vmul.f32 %v625, %v654
        %v661 = vmul.f32 %v627, %v654
        %v662 = vmul.f32 %v629, %v654
        %v663 = vmul.f32 %v631, %v654
        %v664 = vmul.f32 %v633, %v654
        %v665 = vmul.f32 %v635, %v654
        %v666 = vmul.f32 %v637, %v654
        %v667 = vmul.f32 %v639, %v654
        %v668 = vmul.f32 %v641, %v654
        %v669 = vmul.f32 %v643, %v654
        %v670 = vmul.f32 %v645, %v654
        %v671 = vmul.f32 %v647, %v654
        %v672 = vld [vmem:[%s4] sm:$0xff]
        %v673 = vld [vmem:[%s4 + $0x8] sm:$0xff]
        %v674 = vld [vmem:[%s4 + $0x10] sm:$0xff]
        %v675 = vld [vmem:[%s4 + $0x18] sm:$0xff]
        %v676 = vld [vmem:[%s4 + $0x20] sm:$0xff]
        %v677 = vld [vmem:[%s4 + $0x28] sm:$0xff]
        %v678 = vld [vmem:[%s4 + $0x30] sm:$0xff]
        %v679 = vld [vmem:[%s4 + $0x38] sm:$0xff]
        %v680 = vld [vmem:[%s4 + $0x40] sm:$0xff]
        %v681 = vld [vmem:[%s4 + $0x48] sm:$0xff]
        %v682 = vld [vmem:[%s4 + $0x50] sm:$0xff]
        %v683 = vld [vmem:[%s4 + $0x58] sm:$0xff]
        %v684 = vld [vmem:[%s4 + $0x60] sm:$0xff]
        %v685 = vld [vmem:[%s4 + $0x68] sm:$0xff]
        %v686 = vld [vmem:[%s4 + $0x70] sm:$0xff]
        %v687 = vld [vmem:[%s4 + $0x78] sm:$0xff]
        %v704 = vunpack.c.l.b16 %v672
        %v705 = vunpack.c.h.b16 %v672
        %v706 = vunpack.c.l.b16 %v673
        %v707 = vunpack.c.h.b16 %v673
        %v708 = vunpack.c.l.b16 %v674
        %v709 = vunpack.c.h.b16 %v674
        %v710 = vunpack.c.l.b16 %v675
        %v711 = vunpack.c.h.b16 %v675
        %v712 = vunpack.c.l.b16 %v676
        %v713 = vunpack.c.h.b16 %v676
        %v714 = vunpack.c.l.b16 %v677
        %v715 = vunpack.c.h.b16 %v677
        %v716 = vunpack.c.l.b16 %v678
        %v717 = vunpack.c.h.b16 %v678
        %v718 = vunpack.c.l.b16 %v679
        %v719 = vunpack.c.h.b16 %v679
        %v720 = vunpack.c.l.b16 %v680
        %v721 = vunpack.c.h.b16 %v680
        %v722 = vunpack.c.l.b16 %v681
        %v723 = vunpack.c.h.b16 %v681
        %v724 = vunpack.c.l.b16 %v682
        %v725 = vunpack.c.h.b16 %v682
        %v726 = vunpack.c.l.b16 %v683
        %v727 = vunpack.c.h.b16 %v683
        %v728 = vunpack.c.l.b16 %v684
        %v729 = vunpack.c.h.b16 %v684
        %v730 = vunpack.c.l.b16 %v685
        %v731 = vunpack.c.h.b16 %v685
        %v732 = vunpack.c.l.b16 %v686
        %v733 = vunpack.c.h.b16 %v686
        %v734 = vunpack.c.l.b16 %v687
        %v735 = vunpack.c.h.b16 %v687
        %v736 = vpack.c.b16 %v706, %v704
        %v737 = vpack.c.b16 %v707, %v705
        %v738 = vpack.c.b16 %v710, %v708
        %v739 = vpack.c.b16 %v711, %v709
        %v740 = vpack.c.b16 %v714, %v712
        %v741 = vpack.c.b16 %v715, %v713
        %v742 = vpack.c.b16 %v718, %v716
        %v743 = vpack.c.b16 %v719, %v717
        %v744 = vpack.c.b16 %v722, %v720
        %v745 = vpack.c.b16 %v723, %v721
        %v746 = vpack.c.b16 %v726, %v724
        %v747 = vpack.c.b16 %v727, %v725
        %v748 = vpack.c.b16 %v730, %v728
        %v749 = vpack.c.b16 %v731, %v729
        %v750 = vpack.c.b16 %v734, %v732
        %v751 = vpack.c.b16 %v735, %v733
        %768 = vmatprep.subr.bf16.mxu0 %v737
        %769 = vmatpush1.bf16.msra.mxu0 %v736
        %770 = vmatprep.subr.bf16.mxu0 %v739
        %771 = vmatpush1.bf16.msra.mxu0 %v738
        %772 = vmatprep.subr.bf16.mxu0 %v741
        %773 = vmatpush1.bf16.msra.mxu0 %v740
        %774 = vmatprep.subr.bf16.mxu0 %v743
        %775 = vmatpush1.bf16.msra.mxu0 %v742
        %776 = vmatprep.subr.bf16.mxu0 %v745
        %777 = vmatpush1.bf16.msra.mxu0 %v744
        %778 = vmatprep.subr.bf16.mxu0 %v747
        %779 = vmatpush1.bf16.msra.mxu0 %v746
        %780 = vmatprep.subr.bf16.mxu0 %v749
        %781 = vmatpush1.bf16.msra.mxu0 %v748
        %782 = vmatprep.subr.bf16.mxu0 %v751
        %783 = vmatpush1.bf16.msra.mxu0 %v750
        %784 = vmatprep.subr.bf16.mxu0 0
        %785 = vmatpush1.bf16.msra.mxu0 0
        %786 = vmatprep.subr.bf16.mxu0 0
        %787 = vmatpush1.bf16.msra.mxu0 0
        %788 = vmatprep.subr.bf16.mxu0 0
        %789 = vmatpush1.bf16.msra.mxu0 0
        %790 = vmatprep.subr.bf16.mxu0 0
        %791 = vmatpush1.bf16.msra.mxu0 0
        %792 = vmatprep.subr.bf16.mxu0 0
        %793 = vmatpush1.bf16.msra.mxu0 0
        %794 = vmatprep.subr.bf16.mxu0 0
        %795 = vmatpush1.bf16.msra.mxu0 0
        %796 = vmatprep.subr.bf16.mxu0 0
        %797 = vmatpush1.bf16.msra.mxu0 0
        %798 = vmatprep.subr.bf16.mxu0 0
        %799 = vmatpush1.bf16.msra.mxu0 0
        %800 = vmatprep.mubr.bf16.mxu0 0
        %801 = vmatmul.mubr.bf16.gmra.mrb[0].mxu0 %v424
        %v802 = vpop.f32.mrb[0].mxu0
        %v803 = vadd.f32 0.0, %v802
        %v804 = vpop.f32.mrb[0].mxu0
        %v805 = vadd.f32 0.0, %v804
        %v806 = vpop.f32.mrb[0].mxu0
        %v807 = vadd.f32 0.0, %v806
        %v808 = vpop.f32.mrb[0].mxu0
        %v809 = vadd.f32 0.0, %v808
        %810 = vmatprep.mubr.bf16.mxu0 0
        %811 = vmatmul.mubr.bf16.gmra.mrb[0].mxu0 %v425
        %v812 = vpop.f32.mrb[0].mxu0
        %v813 = vadd.f32 0.0, %v812
        %v814 = vpop.f32.mrb[0].mxu0
        %v815 = vadd.f32 0.0, %v814
        %v816 = vpop.f32.mrb[0].mxu0
        %v817 = vadd.f32 0.0, %v816
        %v818 = vpop.f32.mrb[0].mxu0
        %v819 = vadd.f32 0.0, %v818
        %820 = vmatprep.mubr.bf16.mxu0 0
        %821 = vmatmul.mubr.bf16.gmra.mrb[0].mxu0 %v426
        %v822 = vpop.f32.mrb[0].mxu0
        %v823 = vadd.f32 0.0, %v822
        %v824 = vpop.f32.mrb[0].mxu0
        %v825 = vadd.f32 0.0, %v824
        %v826 = vpop.f32.mrb[0].mxu0
        %v827 = vadd.f32 0.0, %v826
        %v828 = vpop.f32.mrb[0].mxu0
        %v829 = vadd.f32 0.0, %v828
        %830 = vmatprep.mubr.bf16.mxu0 0
        %831 = vmatmul.mubr.bf16.gmra.mrb[0].mxu0 %v427
        %v832 = vpop.f32.mrb[0].mxu0
        %v833 = vadd.f32 0.0, %v832
        %v834 = vpop.f32.mrb[0].mxu0
        %v835 = vadd.f32 0.0, %v834
        %v836 = vpop.f32.mrb[0].mxu0
        %v837 = vadd.f32 0.0, %v836
        %v838 = vpop.f32.mrb[0].mxu0
        %v839 = vadd.f32 0.0, %v838
        %840 = vmatprep.mubr.bf16.mxu0 0
        %841 = vmatmul.mubr.bf16.gmra.mrb[0].mxu0 %v428
        %v842 = vpop.f32.mrb[0].mxu0
        %v843 = vadd.f32 0.0, %v842
        %v844 = vpop.f32.mrb[0].mxu0
        %v845 = vadd.f32 0.0, %v844
        %v846 = vpop.f32.mrb[0].mxu0
        %v847 = vadd.f32 0.0, %v846
        %v848 = vpop.f32.mrb[0].mxu0
        %v849 = vadd.f32 0.0, %v848
        %850 = vmatprep.mubr.bf16.mxu0 0
        %851 = vmatmul.mubr.bf16.gmra.mrb[0].mxu0 %v429
        %v852 = vpop.f32.mrb[0].mxu0
        %v853 = vadd.f32 0.0, %v852
        %v854 = vpop.f32.mrb[0].mxu0
        %v855 = vadd.f32 0.0, %v854
        %v856 = vpop.f32.mrb[0].mxu0
        %v857 = vadd.f32 0.0, %v856
        %v858 = vpop.f32.mrb[0].mxu0
        %v859 = vadd.f32 0.0, %v858
        %860 = vmatprep.mubr.bf16.mxu0 0
        %861 = vmatmul.mubr.bf16.gmra.mrb[0].mxu0 %v430
        %v862 = vpop.f32.mrb[0].mxu0
        %v863 = vadd.f32 0.0, %v862
        %v864 = vpop.f32.mrb[0].mxu0
        %v865 = vadd.f32 0.0, %v864
        %v866 = vpop.f32.mrb[0].mxu0
        %v867 = vadd.f32 0.0, %v866
        %v868 = vpop.f32.mrb[0].mxu0
        %v869 = vadd.f32 0.0, %v868
        %870 = vmatprep.mubr.bf16.mxu0 0
        %871 = vmatmul.mubr.bf16.gmra.mrb[0].mxu0 %v431
        %v872 = vpop.f32.mrb[0].mxu0
        %v873 = vadd.f32 0.0, %v872
        %v874 = vpop.f32.mrb[0].mxu0
        %v875 = vadd.f32 0.0, %v874
        %v876 = vpop.f32.mrb[0].mxu0
        %v877 = vadd.f32 0.0, %v876
        %v878 = vpop.f32.mrb[0].mxu0
        %v879 = vadd.f32 0.0, %v878
        %880 = vdwg.mxu0
        %882 = vset.pattern.permute.xlu0 0
        %883 = vperm.xlu0 %882, %v656
        %v884 = vpop.permute.xlu0 %883
        %887 = vset.pattern.permute.xlu0 0
        %888 = vperm.xlu0 %887, %v657
        %v889 = vpop.permute.xlu0 %888
        %892 = vset.pattern.permute.xlu0 0
        %893 = vperm.xlu0 %892, %v658
        %v894 = vpop.permute.xlu0 %893
        %897 = vset.pattern.permute.xlu0 0
        %898 = vperm.xlu0 %897, %v659
        %v899 = vpop.permute.xlu0 %898
        %902 = vset.pattern.permute.xlu0 0
        %903 = vperm.xlu0 %902, %v660
        %v904 = vpop.permute.xlu0 %903
        %907 = vset.pattern.permute.xlu0 0
        %908 = vperm.xlu0 %907, %v661
        %v909 = vpop.permute.xlu0 %908
        %912 = vset.pattern.permute.xlu0 0
        %913 = vperm.xlu0 %912, %v662
        %v914 = vpop.permute.xlu0 %913
        %917 = vset.pattern.permute.xlu0 0
        %918 = vperm.xlu0 %917, %v663
        %v919 = vpop.permute.xlu0 %918
        %922 = vset.pattern.permute.xlu0 0
        %923 = vperm.xlu0 %922, %v664
        %v924 = vpop.permute.xlu0 %923
        %927 = vset.pattern.permute.xlu0 0
        %928 = vperm.xlu0 %927, %v665
        %v929 = vpop.permute.xlu0 %928
        %932 = vset.pattern.permute.xlu0 0
        %933 = vperm.xlu0 %932, %v666
        %v934 = vpop.permute.xlu0 %933
        %937 = vset.pattern.permute.xlu0 0
        %938 = vperm.xlu0 %937, %v667
        %v939 = vpop.permute.xlu0 %938
        %942 = vset.pattern.permute.xlu0 0
        %943 = vperm.xlu0 %942, %v668
        %v944 = vpop.permute.xlu0 %943
        %947 = vset.pattern.permute.xlu0 0
        %948 = vperm.xlu0 %947, %v669
        %v949 = vpop.permute.xlu0 %948
        %952 = vset.pattern.permute.xlu0 0
        %953 = vperm.xlu0 %952, %v670
        %v954 = vpop.permute.xlu0 %953
        %957 = vset.pattern.permute.xlu0 0
        %958 = vperm.xlu0 %957, %v671
        %v959 = vpop.permute.xlu0 %958
        %v961 = vmul.f32 %v803, %v884
        %v962 = vmul.f32 %v807, %v889
        %v963 = vmul.f32 %v813, %v894
        %v964 = vmul.f32 %v817, %v899
        %v965 = vmul.f32 %v823, %v904
        %v966 = vmul.f32 %v827, %v909
        %v967 = vmul.f32 %v833, %v914
        %v968 = vmul.f32 %v837, %v919
        %v969 = vmul.f32 %v843, %v924
        %v970 = vmul.f32 %v847, %v929
        %v971 = vmul.f32 %v853, %v934
        %v972 = vmul.f32 %v857, %v939
        %v973 = vmul.f32 %v863, %v944
        %v974 = vmul.f32 %v867, %v949
        %v975 = vmul.f32 %v873, %v954
        %v976 = vmul.f32 %v877, %v959
        %977 = vset.pattern.permute.xlu0 1
        %978 = vperm.xlu0 %977, %v656
        %v979 = vpop.permute.xlu0 %978
        %981 = vset.pattern.permute.xlu0 1
        %982 = vperm.xlu0 %981, %v657
        %v983 = vpop.permute.xlu0 %982
        %985 = vset.pattern.permute.xlu0 1
        %986 = vperm.xlu0 %985, %v658
        %v987 = vpop.permute.xlu0 %986
        %989 = vset.pattern.permute.xlu0 1
        %990 = vperm.xlu0 %989, %v659
        %v991 = vpop.permute.xlu0 %990
        %993 = vset.pattern.permute.xlu0 1
        %994 = vperm.xlu0 %993, %v660
        %v995 = vpop.permute.xlu0 %994
        %997 = vset.pattern.permute.xlu0 1
        %998 = vperm.xlu0 %997, %v661
        %v999 = vpop.permute.xlu0 %998
        %1001 = vset.pattern.permute.xlu0 1
        %1002 = vperm.xlu0 %1001, %v662
        %v1003 = vpop.permute.xlu0 %1002
        %1005 = vset.pattern.permute.xlu0 1
        %1006 = vperm.xlu0 %1005, %v663
        %v1007 = vpop.permute.xlu0 %1006
        %1009 = vset.pattern.permute.xlu0 1
        %1010 = vperm.xlu0 %1009, %v664
        %v1011 = vpop.permute.xlu0 %1010
        %1013 = vset.pattern.permute.xlu0 1
        %1014 = vperm.xlu0 %1013, %v665
        %v1015 = vpop.permute.xlu0 %1014
        %1017 = vset.pattern.permute.xlu0 1
        %1018 = vperm.xlu0 %1017, %v666
        %v1019 = vpop.permute.xlu0 %1018
        %1021 = vset.pattern.permute.xlu0 1
        %1022 = vperm.xlu0 %1021, %v667
        %v1023 = vpop.permute.xlu0 %1022
        %1025 = vset.pattern.permute.xlu0 1
        %1026 = vperm.xlu0 %1025, %v668
        %v1027 = vpop.permute.xlu0 %1026
        %1029 = vset.pattern.permute.xlu0 1
        %1030 = vperm.xlu0 %1029, %v669
        %v1031 = vpop.permute.xlu0 %1030
        %1033 = vset.pattern.permute.xlu0 1
        %1034 = vperm.xlu0 %1033, %v670
        %v1035 = vpop.permute.xlu0 %1034
        %1037 = vset.pattern.permute.xlu0 1
        %1038 = vperm.xlu0 %1037, %v671
        %v1039 = vpop.permute.xlu0 %1038
        %v1041 = vmul.f32 %v805, %v979
        %v1042 = vmul.f32 %v809, %v983
        %v1043 = vmul.f32 %v815, %v987
        %v1044 = vmul.f32 %v819, %v991
        %v1045 = vmul.f32 %v825, %v995
        %v1046 = vmul.f32 %v829, %v999
        %v1047 = vmul.f32 %v835, %v1003
        %v1048 = vmul.f32 %v839, %v1007
        %v1049 = vmul.f32 %v845, %v1011
        %v1050 = vmul.f32 %v849, %v1015
        %v1051 = vmul.f32 %v855, %v1019
        %v1052 = vmul.f32 %v859, %v1023
        %v1053 = vmul.f32 %v865, %v1027
        %v1054 = vmul.f32 %v869, %v1031
        %v1055 = vmul.f32 %v875, %v1035
        %v1056 = vmul.f32 %v879, %v1039
        %v1057 = vpack.c.bf16 %v962, %v961
        %v1058 = vpack.c.bf16 %v1042, %v1041
        %v1059 = vpack.c.bf16 %v964, %v963
        %v1060 = vpack.c.bf16 %v1044, %v1043
        %v1061 = vpack.c.bf16 %v966, %v965
        %v1062 = vpack.c.bf16 %v1046, %v1045
        %v1063 = vpack.c.bf16 %v968, %v967
        %v1064 = vpack.c.bf16 %v1048, %v1047
        %v1065 = vpack.c.bf16 %v970, %v969
        %v1066 = vpack.c.bf16 %v1050, %v1049
        %v1067 = vpack.c.bf16 %v972, %v971
        %v1068 = vpack.c.bf16 %v1052, %v1051
        %v1069 = vpack.c.bf16 %v974, %v973
        %v1070 = vpack.c.bf16 %v1054, %v1053
        %v1071 = vpack.c.bf16 %v976, %v975
        %v1072 = vpack.c.bf16 %v1056, %v1055
        %v1073 = vld [vmem:[%s5] sm:$0xf]
        %v1074 = vld [vmem:[%s5 + $0x4] sm:$0xf]
        %v1075 = vld [vmem:[%s5 + $0x8] sm:$0xf]
        %v1076 = vld [vmem:[%s5 + $0xc] sm:$0xf]
        %v1077 = vld [vmem:[%s5 + $0x10] sm:$0xf]
        %v1078 = vld [vmem:[%s5 + $0x14] sm:$0xf]
        %v1079 = vld [vmem:[%s5 + $0x18] sm:$0xf]
        %v1080 = vld [vmem:[%s5 + $0x1c] sm:$0xf]
        %v1081 = vld [vmem:[%s5 + $0x20] sm:$0xf]
        %v1082 = vld [vmem:[%s5 + $0x24] sm:$0xf]
        %v1083 = vld [vmem:[%s5 + $0x28] sm:$0xf]
        %v1084 = vld [vmem:[%s5 + $0x2c] sm:$0xf]
        %v1085 = vld [vmem:[%s5 + $0x30] sm:$0xf]
        %v1086 = vld [vmem:[%s5 + $0x34] sm:$0xf]
        %v1087 = vld [vmem:[%s5 + $0x38] sm:$0xf]
        %v1088 = vld [vmem:[%s5 + $0x3c] sm:$0xf]
        %v1089 = vld [vmem:[%s5 + $0x40] sm:$0xf]
        %v1090 = vld [vmem:[%s5 + $0x44] sm:$0xf]
        %v1091 = vld [vmem:[%s5 + $0x48] sm:$0xf]
        %v1092 = vld [vmem:[%s5 + $0x4c] sm:$0xf]
        %v1093 = vld [vmem:[%s5 + $0x50] sm:$0xf]
        %v1094 = vld [vmem:[%s5 + $0x54] sm:$0xf]
        %v1095 = vld [vmem:[%s5 + $0x58] sm:$0xf]
        %v1096 = vld [vmem:[%s5 + $0x5c] sm:$0xf]
        %v1097 = vld [vmem:[%s5 + $0x60] sm:$0xf]
        %v1098 = vld [vmem:[%s5 + $0x64] sm:$0xf]
        %v1099 = vld [vmem:[%s5 + $0x68] sm:$0xf]
        %v1100 = vld [vmem:[%s5 + $0x6c] sm:$0xf]
        %v1101 = vld [vmem:[%s5 + $0x70] sm:$0xf]
        %v1102 = vld [vmem:[%s5 + $0x74] sm:$0xf]
        %v1103 = vld [vmem:[%s5 + $0x78] sm:$0xf]
        %v1104 = vld [vmem:[%s5 + $0x7c] sm:$0xf]
        %v1105 = vld [vmem:[%s10] sm:$0x1]
        %v1106 = vld [vmem:[%s11] sm:$0x1]
        %v1139 = vunpack.c.l.b16 %v1073
        %v1140 = vunpack.c.l.b16 %v1074
        %v1141 = vunpack.c.l.b16 %v1075
        %v1142 = vunpack.c.l.b16 %v1076
        %v1143 = vunpack.c.l.b16 %v1077
        %v1144 = vunpack.c.l.b16 %v1078
        %v1145 = vunpack.c.l.b16 %v1079
        %v1146 = vunpack.c.l.b16 %v1080
        %v1147 = vunpack.c.l.b16 %v1081
        %v1148 = vunpack.c.l.b16 %v1082
        %v1149 = vunpack.c.l.b16 %v1083
        %v1150 = vunpack.c.l.b16 %v1084
        %v1151 = vunpack.c.l.b16 %v1085
        %v1152 = vunpack.c.l.b16 %v1086
        %v1153 = vunpack.c.l.b16 %v1087
        %v1154 = vunpack.c.l.b16 %v1088
        %v1155 = vunpack.c.l.b16 %v1089
        %v1156 = vunpack.c.l.b16 %v1090
        %v1157 = vunpack.c.l.b16 %v1091
        %v1158 = vunpack.c.l.b16 %v1092
        %v1159 = vunpack.c.l.b16 %v1093
        %v1160 = vunpack.c.l.b16 %v1094
        %v1161 = vunpack.c.l.b16 %v1095
        %v1162 = vunpack.c.l.b16 %v1096
        %v1163 = vunpack.c.l.b16 %v1097
        %v1164 = vunpack.c.l.b16 %v1098
        %v1165 = vunpack.c.l.b16 %v1099
        %v1166 = vunpack.c.l.b16 %v1100
        %v1167 = vunpack.c.l.b16 %v1101
        %v1168 = vunpack.c.l.b16 %v1102
        %v1169 = vunpack.c.l.b16 %v1103
        %v1170 = vunpack.c.l.b16 %v1104
        %v1171 = vpack.c.b16 %v1140, %v1139
        %v1172 = vpack.c.b16 %v1142, %v1141
        %v1173 = vpack.c.b16 %v1144, %v1143
        %v1174 = vpack.c.b16 %v1146, %v1145
        %v1175 = vpack.c.b16 %v1148, %v1147
        %v1176 = vpack.c.b16 %v1150, %v1149
        %v1177 = vpack.c.b16 %v1152, %v1151
        %v1178 = vpack.c.b16 %v1154, %v1153
        %v1179 = vpack.c.b16 %v1156, %v1155
        %v1180 = vpack.c.b16 %v1158, %v1157
        %v1181 = vpack.c.b16 %v1160, %v1159
        %v1182 = vpack.c.b16 %v1162, %v1161
        %v1183 = vpack.c.b16 %v1164, %v1163
        %v1184 = vpack.c.b16 %v1166, %v1165
        %v1185 = vpack.c.b16 %v1168, %v1167
        %v1186 = vpack.c.b16 %v1170, %v1169
        %1203 = vmatprep.subr.bf16.mxu0 0
        %1204 = vmatpush1.bf16.msra.mxu0 %v1171
        %1205 = vmatprep.subr.bf16.mxu0 0
        %1206 = vmatpush1.bf16.msra.mxu0 %v1172
        %1207 = vmatprep.subr.bf16.mxu0 0
        %1208 = vmatpush1.bf16.msra.mxu0 %v1173
        %1209 = vmatprep.subr.bf16.mxu0 0
        %1210 = vmatpush1.bf16.msra.mxu0 %v1174
        %1211 = vmatprep.subr.bf16.mxu0 0
        %1212 = vmatpush1.bf16.msra.mxu0 %v1175
        %1213 = vmatprep.subr.bf16.mxu0 0
        %1214 = vmatpush1.bf16.msra.mxu0 %v1176
        %1215 = vmatprep.subr.bf16.mxu0 0
        %1216 = vmatpush1.bf16.msra.mxu0 %v1177
        %1217 = vmatprep.subr.bf16.mxu0 0
        %1218 = vmatpush1.bf16.msra.mxu0 %v1178
        %1219 = vmatprep.subr.bf16.mxu0 0
        %1220 = vmatpush1.bf16.msra.mxu0 %v1179
        %1221 = vmatprep.subr.bf16.mxu0 0
        %1222 = vmatpush1.bf16.msra.mxu0 %v1180
        %1223 = vmatprep.subr.bf16.mxu0 0
        %1224 = vmatpush1.bf16.msra.mxu0 %v1181
        %1225 = vmatprep.subr.bf16.mxu0 0
        %1226 = vmatpush1.bf16.msra.mxu0 %v1182
        %1227 = vmatprep.subr.bf16.mxu0 0
        %1228 = vmatpush1.bf16.msra.mxu0 %v1183
        %1229 = vmatprep.subr.bf16.mxu0 0
        %1230 = vmatpush1.bf16.msra.mxu0 %v1184
        %1231 = vmatprep.subr.bf16.mxu0 0
        %1232 = vmatpush1.bf16.msra.mxu0 %v1185
        %1233 = vmatprep.subr.bf16.mxu0 0
        %1234 = vmatpush1.bf16.msra.mxu0 %v1186
        %1235 = vmatprep.mubr.bf16.mxu0 %v1058
        %1236 = vmatmul.mubr.bf16.gmra.mrb[0].mxu0 %v1057
        %v1237 = vpop.f32.mrb[0].mxu0
        %v1238 = vadd.f32 %v408, %v1237
        %v1239 = vpop.f32.mrb[0].mxu0
        %v1240 = vpop.f32.mrb[0].mxu0
        %v1241 = vadd.f32 %v409, %v1240
        %v1242 = vpop.f32.mrb[0].mxu0
        %1243 = vmatprep.mubr.bf16.mxu0 %v1060
        %1244 = vmatmul.mubr.bf16.gmra.mrb[0].mxu0 %v1059
        %v1245 = vpop.f32.mrb[0].mxu0
        %v1246 = vadd.f32 %v410, %v1245
        %v1247 = vpop.f32.mrb[0].mxu0
        %v1248 = vpop.f32.mrb[0].mxu0
        %v1249 = vadd.f32 %v411, %v1248
        %v1250 = vpop.f32.mrb[0].mxu0
        %1251 = vmatprep.mubr.bf16.mxu0 %v1062
        %1252 = vmatmul.mubr.bf16.gmra.mrb[0].mxu0 %v1061
        %v1253 = vpop.f32.mrb[0].mxu0
        %v1254 = vadd.f32 %v412, %v1253
        %v1255 = vpop.f32.mrb[0].mxu0
        %v1256 = vpop.f32.mrb[0].mxu0
        %v1257 = vadd.f32 %v413, %v1256
        %v1258 = vpop.f32.mrb[0].mxu0
        %1259 = vmatprep.mubr.bf16.mxu0 %v1064
        %1260 = vmatmul.mubr.bf16.gmra.mrb[0].mxu0 %v1063
        %v1261 = vpop.f32.mrb[0].mxu0
        %v1262 = vadd.f32 %v414, %v1261
        %v1263 = vpop.f32.mrb[0].mxu0
        %v1264 = vpop.f32.mrb[0].mxu0
        %v1265 = vadd.f32 %v415, %v1264
        %v1266 = vpop.f32.mrb[0].mxu0
        %1267 = vmatprep.mubr.bf16.mxu0 %v1066
        %1268 = vmatmul.mubr.bf16.gmra.mrb[0].mxu0 %v1065
        %v1269 = vpop.f32.mrb[0].mxu0
        %v1270 = vadd.f32 %v416, %v1269
        %v1271 = vpop.f32.mrb[0].mxu0
        %v1272 = vpop.f32.mrb[0].mxu0
        %v1273 = vadd.f32 %v417, %v1272
        %v1274 = vpop.f32.mrb[0].mxu0
        %1275 = vmatprep.mubr.bf16.mxu0 %v1068
        %1276 = vmatmul.mubr.bf16.gmra.mrb[0].mxu0 %v1067
        %v1277 = vpop.f32.mrb[0].mxu0
        %v1278 = vadd.f32 %v418, %v1277
        %v1279 = vpop.f32.mrb[0].mxu0
        %v1280 = vpop.f32.mrb[0].mxu0
        %v1281 = vadd.f32 %v419, %v1280
        %v1282 = vpop.f32.mrb[0].mxu0
        %1283 = vmatprep.mubr.bf16.mxu0 %v1070
        %1284 = vmatmul.mubr.bf16.gmra.mrb[0].mxu0 %v1069
        %v1285 = vpop.f32.mrb[0].mxu0
        %v1286 = vadd.f32 %v420, %v1285
        %v1287 = vpop.f32.mrb[0].mxu0
        %v1288 = vpop.f32.mrb[0].mxu0
        %v1289 = vadd.f32 %v421, %v1288
        %v1290 = vpop.f32.mrb[0].mxu0
        %1291 = vmatprep.mubr.bf16.mxu0 %v1072
        %1292 = vmatmul.mubr.bf16.gmra.mrb[0].mxu0 %v1071
        %v1293 = vpop.f32.mrb[0].mxu0
        %v1294 = vadd.f32 %v422, %v1293
        %v1295 = vpop.f32.mrb[0].mxu0
        %v1296 = vpop.f32.mrb[0].mxu0
        %v1297 = vadd.f32 %v423, %v1296
        %v1298 = vpop.f32.mrb[0].mxu0
        %1299 = vdwg.mxu0
        %1300 = vadd.xlane.f32.xlu0 %v1238
        %v1301 = vpop.xlane.xlu0 %1300
        %1302 = vadd.xlane.f32.xlu0 %v1241
        %v1303 = vpop.xlane.xlu0 %1302
        %1304 = vadd.xlane.f32.xlu0 %v1246
        %v1305 = vpop.xlane.xlu0 %1304
        %1306 = vadd.xlane.f32.xlu0 %v1249
        %v1307 = vpop.xlane.xlu0 %1306
        %1308 = vadd.xlane.f32.xlu0 %v1254
        %v1309 = vpop.xlane.xlu0 %1308
        %1310 = vadd.xlane.f32.xlu0 %v1257
        %v1311 = vpop.xlane.xlu0 %1310
        %1312 = vadd.xlane.f32.xlu0 %v1262
        %v1313 = vpop.xlane.xlu0 %1312
        %1314 = vadd.xlane.f32.xlu0 %v1265
        %v1315 = vpop.xlane.xlu0 %1314
        %1316 = vadd.xlane.f32.xlu0 %v1270
        %v1317 = vpop.xlane.xlu0 %1316
        %1318 = vadd.xlane.f32.xlu0 %v1273
        %v1319 = vpop.xlane.xlu0 %1318
        %1320 = vadd.xlane.f32.xlu0 %v1278
        %v1321 = vpop.xlane.xlu0 %1320
        %1322 = vadd.xlane.f32.xlu0 %v1281
        %v1323 = vpop.xlane.xlu0 %1322
        %1324 = vadd.xlane.f32.xlu0 %v1286
        %v1325 = vpop.xlane.xlu0 %1324
        %1326 = vadd.xlane.f32.xlu0 %v1289
        %v1327 = vpop.xlane.xlu0 %1326
        %1328 = vadd.xlane.f32.xlu0 %v1294
        %v1329 = vpop.xlane.xlu0 %1328
        %1330 = vadd.xlane.f32.xlu0 %v1297
        %v1331 = vpop.xlane.xlu0 %1330
        %v1332 = vrcp.pop 128.0
        %v1333 = vmul.f32 %v1301, %v1332
        %v1334 = vmul.f32 %v1303, %v1332
        %v1335 = vmul.f32 %v1305, %v1332
        %v1336 = vmul.f32 %v1307, %v1332
        %v1337 = vmul.f32 %v1309, %v1332
        %v1338 = vmul.f32 %v1311, %v1332
        %v1339 = vmul.f32 %v1313, %v1332
        %v1340 = vmul.f32 %v1315, %v1332
        %v1341 = vmul.f32 %v1317, %v1332
        %v1342 = vmul.f32 %v1319, %v1332
        %v1343 = vmul.f32 %v1321, %v1332
        %v1344 = vmul.f32 %v1323, %v1332
        %v1345 = vmul.f32 %v1325, %v1332
        %v1346 = vmul.f32 %v1327, %v1332
        %v1347 = vmul.f32 %v1329, %v1332
        %v1348 = vmul.f32 %v1331, %v1332
        %v1349 = vsub.f32 %v1238, %v1333
        %v1350 = vsub.f32 %v1241, %v1334
        %v1351 = vsub.f32 %v1246, %v1335
        %v1352 = vsub.f32 %v1249, %v1336
        %v1353 = vsub.f32 %v1254, %v1337
        %v1354 = vsub.f32 %v1257, %v1338
        %v1355 = vsub.f32 %v1262, %v1339
        %v1356 = vsub.f32 %v1265, %v1340
        %v1357 = vsub.f32 %v1270, %v1341
        %v1358 = vsub.f32 %v1273, %v1342
        %v1359 = vsub.f32 %v1278, %v1343
        %v1360 = vsub.f32 %v1281, %v1344
        %v1361 = vsub.f32 %v1286, %v1345
        %v1362 = vsub.f32 %v1289, %v1346
        %v1363 = vsub.f32 %v1294, %v1347
        %v1364 = vsub.f32 %v1297, %v1348
        %v1365 = vmul.f32 %v1349, %v1349
        %v1366 = vmul.f32 %v1350, %v1350
        %v1367 = vmul.f32 %v1351, %v1351
        %v1368 = vmul.f32 %v1352, %v1352
        %v1369 = vmul.f32 %v1353, %v1353
        %v1370 = vmul.f32 %v1354, %v1354
        %v1371 = vmul.f32 %v1355, %v1355
        %v1372 = vmul.f32 %v1356, %v1356
        %v1373 = vmul.f32 %v1357, %v1357
        %v1374 = vmul.f32 %v1358, %v1358
        %v1375 = vmul.f32 %v1359, %v1359
        %v1376 = vmul.f32 %v1360, %v1360
        %v1377 = vmul.f32 %v1361, %v1361
        %v1378 = vmul.f32 %v1362, %v1362
        %v1379 = vmul.f32 %v1363, %v1363
        %v1380 = vmul.f32 %v1364, %v1364
        %1381 = vadd.xlane.f32.xlu0 %v1365
        %v1382 = vpop.xlane.xlu0 %1381
        %1383 = vadd.xlane.f32.xlu0 %v1366
        %v1384 = vpop.xlane.xlu0 %1383
        %1385 = vadd.xlane.f32.xlu0 %v1367
        %v1386 = vpop.xlane.xlu0 %1385
        %1387 = vadd.xlane.f32.xlu0 %v1368
        %v1388 = vpop.xlane.xlu0 %1387
        %1389 = vadd.xlane.f32.xlu0 %v1369
        %v1390 = vpop.xlane.xlu0 %1389
        %1391 = vadd.xlane.f32.xlu0 %v1370
        %v1392 = vpop.xlane.xlu0 %1391
        %1393 = vadd.xlane.f32.xlu0 %v1371
        %v1394 = vpop.xlane.xlu0 %1393
        %1395 = vadd.xlane.f32.xlu0 %v1372
        %v1396 = vpop.xlane.xlu0 %1395
        %1397 = vadd.xlane.f32.xlu0 %v1373
        %v1398 = vpop.xlane.xlu0 %1397
        %1399 = vadd.xlane.f32.xlu0 %v1374
        %v1400 = vpop.xlane.xlu0 %1399
        %1401 = vadd.xlane.f32.xlu0 %v1375
        %v1402 = vpop.xlane.xlu0 %1401
        %1403 = vadd.xlane.f32.xlu0 %v1376
        %v1404 = vpop.xlane.xlu0 %1403
        %1405 = vadd.xlane.f32.xlu0 %v1377
        %v1406 = vpop.xlane.xlu0 %1405
        %1407 = vadd.xlane.f32.xlu0 %v1378
        %v1408 = vpop.xlane.xlu0 %1407
        %1409 = vadd.xlane.f32.xlu0 %v1379
        %v1410 = vpop.xlane.xlu0 %1409
        %1411 = vadd.xlane.f32.xlu0 %v1380
        %v1412 = vpop.xlane.xlu0 %1411
        %v1413 = vmul.f32 %v1382, %v1332
        %v1414 = vmul.f32 %v1384, %v1332
        %v1415 = vmul.f32 %v1386, %v1332
        %v1416 = vmul.f32 %v1388, %v1332
        %v1417 = vmul.f32 %v1390, %v1332
        %v1418 = vmul.f32 %v1392, %v1332
        %v1419 = vmul.f32 %v1394, %v1332
        %v1420 = vmul.f32 %v1396, %v1332
        %v1421 = vmul.f32 %v1398, %v1332
        %v1422 = vmul.f32 %v1400, %v1332
        %v1423 = vmul.f32 %v1402, %v1332
        %v1424 = vmul.f32 %v1404, %v1332
        %v1425 = vmul.f32 %v1406, %v1332
        %v1426 = vmul.f32 %v1408, %v1332
        %v1427 = vmul.f32 %v1410, %v1332
        %v1428 = vmul.f32 %v1412, %v1332
        %v1429 = vadd.f32 %v1413, 1e-05
        %v1430 = vadd.f32 %v1414, 1e-05
        %v1431 = vadd.f32 %v1415, 1e-05
        %v1432 = vadd.f32 %v1416, 1e-05
        %v1433 = vadd.f32 %v1417, 1e-05
        %v1434 = vadd.f32 %v1418, 1e-05
        %v1435 = vadd.f32 %v1419, 1e-05
        %v1436 = vadd.f32 %v1420, 1e-05
        %v1437 = vadd.f32 %v1421, 1e-05
        %v1438 = vadd.f32 %v1422, 1e-05
        %v1439 = vadd.f32 %v1423, 1e-05
        %v1440 = vadd.f32 %v1424, 1e-05
        %v1441 = vadd.f32 %v1425, 1e-05
        %v1442 = vadd.f32 %v1426, 1e-05
        %v1443 = vadd.f32 %v1427, 1e-05
        %v1444 = vadd.f32 %v1428, 1e-05
        %v1445 = vrsqrt.pop %v1429
        %v1446 = vrsqrt.pop %v1430
        %v1447 = vrsqrt.pop %v1431
        %v1448 = vrsqrt.pop %v1432
        %v1449 = vrsqrt.pop %v1433
        %v1450 = vrsqrt.pop %v1434
        %v1451 = vrsqrt.pop %v1435
        %v1452 = vrsqrt.pop %v1436
        %v1453 = vrsqrt.pop %v1437
        %v1454 = vrsqrt.pop %v1438
        %v1455 = vrsqrt.pop %v1439
        %v1456 = vrsqrt.pop %v1440
        %v1457 = vrsqrt.pop %v1441
        %v1458 = vrsqrt.pop %v1442
        %v1459 = vrsqrt.pop %v1443
        %v1460 = vrsqrt.pop %v1444
        %v1461 = vmul.f32 %v1349, %v1445
        %v1462 = vmul.f32 %v1350, %v1446
        %v1463 = vmul.f32 %v1351, %v1447
        %v1464 = vmul.f32 %v1352, %v1448
        %v1465 = vmul.f32 %v1353, %v1449
        %v1466 = vmul.f32 %v1354, %v1450
        %v1467 = vmul.f32 %v1355, %v1451
        %v1468 = vmul.f32 %v1356, %v1452
        %v1469 = vmul.f32 %v1357, %v1453
        %v1470 = vmul.f32 %v1358, %v1454
        %v1471 = vmul.f32 %v1359, %v1455
        %v1472 = vmul.f32 %v1360, %v1456
        %v1473 = vmul.f32 %v1361, %v1457
        %v1474 = vmul.f32 %v1362, %v1458
        %v1475 = vmul.f32 %v1363, %v1459
        %v1476 = vmul.f32 %v1364, %v1460
        %v1478 = vlaneseq
        %v1479 = vshrl.u32 %v1478, 7
        %v1480 = vsub.s32 0, %v1479
        %v1481 = vrot.slane %v1105, %v1480
        %v1483 = vmul.f32 %v1461, %v1481
        %v1484 = vmul.f32 %v1462, %v1481
        %v1485 = vmul.f32 %v1463, %v1481
        %v1486 = vmul.f32 %v1464, %v1481
        %v1487 = vmul.f32 %v1465, %v1481
        %v1488 = vmul.f32 %v1466, %v1481
        %v1489 = vmul.f32 %v1467, %v1481
        %v1490 = vmul.f32 %v1468, %v1481
        %v1491 = vmul.f32 %v1469, %v1481
        %v1492 = vmul.f32 %v1470, %v1481
        %v1493 = vmul.f32 %v1471, %v1481
        %v1494 = vmul.f32 %v1472, %v1481
        %v1495 = vmul.f32 %v1473, %v1481
        %v1496 = vmul.f32 %v1474, %v1481
        %v1497 = vmul.f32 %v1475, %v1481
        %v1498 = vmul.f32 %v1476, %v1481
        %v1500 = vlaneseq
        %v1501 = vshrl.u32 %v1500, 7
        %v1502 = vsub.s32 0, %v1501
        %v1503 = vrot.slane %v1106, %v1502
        %v1505 = vadd.f32 %v1483, %v1503
        %v1506 = vadd.f32 %v1484, %v1503
        %v1507 = vadd.f32 %v1485, %v1503
        %v1508 = vadd.f32 %v1486, %v1503
        %v1509 = vadd.f32 %v1487, %v1503
        %v1510 = vadd.f32 %v1488, %v1503
        %v1511 = vadd.f32 %v1489, %v1503
        %v1512 = vadd.f32 %v1490, %v1503
        %v1513 = vadd.f32 %v1491, %v1503
        %v1514 = vadd.f32 %v1492, %v1503
        %v1515 = vadd.f32 %v1493, %v1503
        %v1516 = vadd.f32 %v1494, %v1503
        %v1517 = vadd.f32 %v1495, %v1503
        %v1518 = vadd.f32 %v1496, %v1503
        %v1519 = vadd.f32 %v1497, %v1503
        %v1520 = vadd.f32 %v1498, %v1503
        %v1521 = vpack.c.bf16 %v1506, %v1505
        %v1522 = vpack.c.bf16 %v1508, %v1507
        %v1523 = vpack.c.bf16 %v1510, %v1509
        %v1524 = vpack.c.bf16 %v1512, %v1511
        %v1525 = vpack.c.bf16 %v1514, %v1513
        %v1526 = vpack.c.bf16 %v1516, %v1515
        %v1527 = vpack.c.bf16 %v1518, %v1517
        %v1528 = vpack.c.bf16 %v1520, %v1519
        %v1529 = vld [vmem:[%s6] sm:$0xff]
        %v1530 = vld [vmem:[%s6 + $0x8] sm:$0xff]
        %v1531 = vld [vmem:[%s6 + $0x10] sm:$0xff]
        %v1532 = vld [vmem:[%s6 + $0x18] sm:$0xff]
        %v1533 = vld [vmem:[%s6 + $0x20] sm:$0xff]
        %v1534 = vld [vmem:[%s6 + $0x28] sm:$0xff]
        %v1535 = vld [vmem:[%s6 + $0x30] sm:$0xff]
        %v1536 = vld [vmem:[%s6 + $0x38] sm:$0xff]
        %v1537 = vld [vmem:[%s6 + $0x40] sm:$0xff]
        %v1538 = vld [vmem:[%s6 + $0x48] sm:$0xff]
        %v1539 = vld [vmem:[%s6 + $0x50] sm:$0xff]
        %v1540 = vld [vmem:[%s6 + $0x58] sm:$0xff]
        %v1541 = vld [vmem:[%s6 + $0x60] sm:$0xff]
        %v1542 = vld [vmem:[%s6 + $0x68] sm:$0xff]
        %v1543 = vld [vmem:[%s6 + $0x70] sm:$0xff]
        %v1544 = vld [vmem:[%s6 + $0x78] sm:$0xff]
        %v1545 = vld [vmem:[%s7] sm:$0x3]
        %v1547 = vlaneseq
        %v1548 = vshrl.u32 %v1547, 7
        %v1549 = vsub.s32 0, %v1548
        %v1550 = vrot.slane %v1545, %v1549
        %v1551 = vlaneseq
        %v1552 = vshrl.u32 %v1551, 7
        %v1553 = vsub.s32 1, %v1552
        %v1554 = vrot.slane %v1545, %v1553
        %v1573 = vunpack.c.l.b16 %v1529
        %v1574 = vunpack.c.h.b16 %v1529
        %v1575 = vunpack.c.l.b16 %v1530
        %v1576 = vunpack.c.h.b16 %v1530
        %v1577 = vunpack.c.l.b16 %v1531
        %v1578 = vunpack.c.h.b16 %v1531
        %v1579 = vunpack.c.l.b16 %v1532
        %v1580 = vunpack.c.h.b16 %v1532
        %v1581 = vunpack.c.l.b16 %v1533
        %v1582 = vunpack.c.h.b16 %v1533
        %v1583 = vunpack.c.l.b16 %v1534
        %v1584 = vunpack.c.h.b16 %v1534
        %v1585 = vunpack.c.l.b16 %v1535
        %v1586 = vunpack.c.h.b16 %v1535
        %v1587 = vunpack.c.l.b16 %v1536
        %v1588 = vunpack.c.h.b16 %v1536
        %v1589 = vunpack.c.l.b16 %v1537
        %v1590 = vunpack.c.h.b16 %v1537
        %v1591 = vunpack.c.l.b16 %v1538
        %v1592 = vunpack.c.h.b16 %v1538
        %v1593 = vunpack.c.l.b16 %v1539
        %v1594 = vunpack.c.h.b16 %v1539
        %v1595 = vunpack.c.l.b16 %v1540
        %v1596 = vunpack.c.h.b16 %v1540
        %v1597 = vunpack.c.l.b16 %v1541
        %v1598 = vunpack.c.h.b16 %v1541
        %v1599 = vunpack.c.l.b16 %v1542
        %v1600 = vunpack.c.h.b16 %v1542
        %v1601 = vunpack.c.l.b16 %v1543
        %v1602 = vunpack.c.h.b16 %v1543
        %v1603 = vunpack.c.l.b16 %v1544
        %v1604 = vunpack.c.h.b16 %v1544
        %v1605 = vpack.c.b16 %v1575, %v1573
        %v1606 = vpack.c.b16 %v1576, %v1574
        %v1607 = vpack.c.b16 %v1579, %v1577
        %v1608 = vpack.c.b16 %v1580, %v1578
        %v1609 = vpack.c.b16 %v1583, %v1581
        %v1610 = vpack.c.b16 %v1584, %v1582
        %v1611 = vpack.c.b16 %v1587, %v1585
        %v1612 = vpack.c.b16 %v1588, %v1586
        %v1613 = vpack.c.b16 %v1591, %v1589
        %v1614 = vpack.c.b16 %v1592, %v1590
        %v1615 = vpack.c.b16 %v1595, %v1593
        %v1616 = vpack.c.b16 %v1596, %v1594
        %v1617 = vpack.c.b16 %v1599, %v1597
        %v1618 = vpack.c.b16 %v1600, %v1598
        %v1619 = vpack.c.b16 %v1603, %v1601
        %v1620 = vpack.c.b16 %v1604, %v1602
        %1637 = vmatprep.subr.bf16.mxu0 %v1606
        %1638 = vmatpush1.bf16.msra.mxu0 %v1605
        %1639 = vmatprep.subr.bf16.mxu0 %v1608
        %1640 = vmatpush1.bf16.msra.mxu0 %v1607
        %1641 = vmatprep.subr.bf16.mxu0 %v1610
        %1642 = vmatpush1.bf16.msra.mxu0 %v1609
        %1643 = vmatprep.subr.bf16.mxu0 %v1612
        %1644 = vmatpush1.bf16.msra.mxu0 %v1611
        %1645 = vmatprep.subr.bf16.mxu0 %v1614
        %1646 = vmatpush1.bf16.msra.mxu0 %v1613
        %1647 = vmatprep.subr.bf16.mxu0 %v1616
        %1648 = vmatpush1.bf16.msra.mxu0 %v1615
        %1649 = vmatprep.subr.bf16.mxu0 %v1618
        %1650 = vmatpush1.bf16.msra.mxu0 %v1617
        %1651 = vmatprep.subr.bf16.mxu0 %v1620
        %1652 = vmatpush1.bf16.msra.mxu0 %v1619
        %1653 = vmatprep.subr.bf16.mxu0 0
        %1654 = vmatpush1.bf16.msra.mxu0 0
        %1655 = vmatprep.subr.bf16.mxu0 0
        %1656 = vmatpush1.bf16.msra.mxu0 0
        %1657 = vmatprep.subr.bf16.mxu0 0
        %1658 = vmatpush1.bf16.msra.mxu0 0
        %1659 = vmatprep.subr.bf16.mxu0 0
        %1660 = vmatpush1.bf16.msra.mxu0 0
        %1661 = vmatprep.subr.bf16.mxu0 0
        %1662 = vmatpush1.bf16.msra.mxu0 0
        %1663 = vmatprep.subr.bf16.mxu0 0
        %1664 = vmatpush1.bf16.msra.mxu0 0
        %1665 = vmatprep.subr.bf16.mxu0 0
        %1666 = vmatpush1.bf16.msra.mxu0 0
        %1667 = vmatprep.subr.bf16.mxu0 0
        %1668 = vmatpush1.bf16.msra.mxu0 0
        %1669 = vmatprep.mubr.bf16.mxu0 0
        %1670 = vmatmul.mubr.bf16.gmra.mrb[0].mxu0 %v1521
        %v1671 = vpop.f32.mrb[0].mxu0
        %v1672 = vadd.f32 %v1550, %v1671
        %v1673 = vpop.f32.mrb[0].mxu0
        %v1674 = vadd.f32 %v1554, %v1673
        %v1675 = vpop.f32.mrb[0].mxu0
        %v1676 = vadd.f32 %v1550, %v1675
        %v1677 = vpop.f32.mrb[0].mxu0
        %v1678 = vadd.f32 %v1554, %v1677
        %1679 = vmatprep.mubr.bf16.mxu0 0
        %1680 = vmatmul.mubr.bf16.gmra.mrb[0].mxu0 %v1522
        %v1681 = vpop.f32.mrb[0].mxu0
        %v1682 = vadd.f32 %v1550, %v1681
        %v1683 = vpop.f32.mrb[0].mxu0
        %v1684 = vadd.f32 %v1554, %v1683
        %v1685 = vpop.f32.mrb[0].mxu0
        %v1686 = vadd.f32 %v1550, %v1685
        %v1687 = vpop.f32.mrb[0].mxu0
        %v1688 = vadd.f32 %v1554, %v1687
        %1689 = vmatprep.mubr.bf16.mxu0 0
        %1690 = vmatmul.mubr.bf16.gmra.mrb[0].mxu0 %v1523
        %v1691 = vpop.f32.mrb[0].mxu0
        %v1692 = vadd.f32 %v1550, %v1691
        %v1693 = vpop.f32.mrb[0].mxu0
        %v1694 = vadd.f32 %v1554, %v1693
        %v1695 = vpop.f32.mrb[0].mxu0
        %v1696 = vadd.f32 %v1550, %v1695
        %v1697 = vpop.f32.mrb[0].mxu0
        %v1698 = vadd.f32 %v1554, %v1697
        %1699 = vmatprep.mubr.bf16.mxu0 0
        %1700 = vmatmul.mubr.bf16.gmra.mrb[0].mxu0 %v1524
        %v1701 = vpop.f32.mrb[0].mxu0
        %v1702 = vadd.f32 %v1550, %v1701
        %v1703 = vpop.f32.mrb[0].mxu0
        %v1704 = vadd.f32 %v1554, %v1703
        %v1705 = vpop.f32.mrb[0].mxu0
        %v1706 = vadd.f32 %v1550, %v1705
        %v1707 = vpop.f32.mrb[0].mxu0
        %v1708 = vadd.f32 %v1554, %v1707
        %1709 = vmatprep.mubr.bf16.mxu0 0
        %1710 = vmatmul.mubr.bf16.gmra.mrb[0].mxu0 %v1525
        %v1711 = vpop.f32.mrb[0].mxu0
        %v1712 = vadd.f32 %v1550, %v1711
        %v1713 = vpop.f32.mrb[0].mxu0
        %v1714 = vadd.f32 %v1554, %v1713
        %v1715 = vpop.f32.mrb[0].mxu0
        %v1716 = vadd.f32 %v1550, %v1715
        %v1717 = vpop.f32.mrb[0].mxu0
        %v1718 = vadd.f32 %v1554, %v1717
        %1719 = vmatprep.mubr.bf16.mxu0 0
        %1720 = vmatmul.mubr.bf16.gmra.mrb[0].mxu0 %v1526
        %v1721 = vpop.f32.mrb[0].mxu0
        %v1722 = vadd.f32 %v1550, %v1721
        %v1723 = vpop.f32.mrb[0].mxu0
        %v1724 = vadd.f32 %v1554, %v1723
        %v1725 = vpop.f32.mrb[0].mxu0
        %v1726 = vadd.f32 %v1550, %v1725
        %v1727 = vpop.f32.mrb[0].mxu0
        %v1728 = vadd.f32 %v1554, %v1727
        %1729 = vmatprep.mubr.bf16.mxu0 0
        %1730 = vmatmul.mubr.bf16.gmra.mrb[0].mxu0 %v1527
        %v1731 = vpop.f32.mrb[0].mxu0
        %v1732 = vadd.f32 %v1550, %v1731
        %v1733 = vpop.f32.mrb[0].mxu0
        %v1734 = vadd.f32 %v1554, %v1733
        %v1735 = vpop.f32.mrb[0].mxu0
        %v1736 = vadd.f32 %v1550, %v1735
        %v1737 = vpop.f32.mrb[0].mxu0
        %v1738 = vadd.f32 %v1554, %v1737
        %1739 = vmatprep.mubr.bf16.mxu0 0
        %1740 = vmatmul.mubr.bf16.gmra.mrb[0].mxu0 %v1528
        %v1741 = vpop.f32.mrb[0].mxu0
        %v1742 = vadd.f32 %v1550, %v1741
        %v1743 = vpop.f32.mrb[0].mxu0
        %v1744 = vadd.f32 %v1554, %v1743
        %v1745 = vpop.f32.mrb[0].mxu0
        %v1746 = vadd.f32 %v1550, %v1745
        %v1747 = vpop.f32.mrb[0].mxu0
        %v1748 = vadd.f32 %v1554, %v1747
        %1749 = vdwg.mxu0
        %v1750 = vmax.f32 %v1672, 0.0
        %v1751 = vmax.f32 %v1674, 0.0
        %v1752 = vmax.f32 %v1676, 0.0
        %v1753 = vmax.f32 %v1678, 0.0
        %v1754 = vmax.f32 %v1682, 0.0
        %v1755 = vmax.f32 %v1684, 0.0
        %v1756 = vmax.f32 %v1686, 0.0
        %v1757 = vmax.f32 %v1688, 0.0
        %v1758 = vmax.f32 %v1692, 0.0
        %v1759 = vmax.f32 %v1694, 0.0
        %v1760 = vmax.f32 %v1696, 0.0
        %v1761 = vmax.f32 %v1698, 0.0
        %v1762 = vmax.f32 %v1702, 0.0
        %v1763 = vmax.f32 %v1704, 0.0
        %v1764 = vmax.f32 %v1706, 0.0
        %v1765 = vmax.f32 %v1708, 0.0
        %v1766 = vmax.f32 %v1712, 0.0
        %v1767 = vmax.f32 %v1714, 0.0
        %v1768 = vmax.f32 %v1716, 0.0
        %v1769 = vmax.f32 %v1718, 0.0
        %v1770 = vmax.f32 %v1722, 0.0
        %v1771 = vmax.f32 %v1724, 0.0
        %v1772 = vmax.f32 %v1726, 0.0
        %v1773 = vmax.f32 %v1728, 0.0
        %v1774 = vmax.f32 %v1732, 0.0
        %v1775 = vmax.f32 %v1734, 0.0
        %v1776 = vmax.f32 %v1736, 0.0
        %v1777 = vmax.f32 %v1738, 0.0
        %v1778 = vmax.f32 %v1742, 0.0
        %v1779 = vmax.f32 %v1744, 0.0
        %v1780 = vmax.f32 %v1746, 0.0
        %v1781 = vmax.f32 %v1748, 0.0
        %v1782 = vpack.c.bf16 %v1752, %v1750
        %v1783 = vpack.c.bf16 %v1753, %v1751
        %v1784 = vpack.c.bf16 %v1756, %v1754
        %v1785 = vpack.c.bf16 %v1757, %v1755
        %v1786 = vpack.c.bf16 %v1760, %v1758
        %v1787 = vpack.c.bf16 %v1761, %v1759
        %v1788 = vpack.c.bf16 %v1764, %v1762
        %v1789 = vpack.c.bf16 %v1765, %v1763
        %v1790 = vpack.c.bf16 %v1768, %v1766
        %v1791 = vpack.c.bf16 %v1769, %v1767
        %v1792 = vpack.c.bf16 %v1772, %v1770
        %v1793 = vpack.c.bf16 %v1773, %v1771
        %v1794 = vpack.c.bf16 %v1776, %v1774
        %v1795 = vpack.c.bf16 %v1777, %v1775
        %v1796 = vpack.c.bf16 %v1780, %v1778
        %v1797 = vpack.c.bf16 %v1781, %v1779
        %v1798 = vld [vmem:[%s8] sm:$0xf]
        %v1799 = vld [vmem:[%s8 + $0x4] sm:$0xf]
        %v1800 = vld [vmem:[%s8 + $0x8] sm:$0xf]
        %v1801 = vld [vmem:[%s8 + $0xc] sm:$0xf]
        %v1802 = vld [vmem:[%s8 + $0x10] sm:$0xf]
        %v1803 = vld [vmem:[%s8 + $0x14] sm:$0xf]
        %v1804 = vld [vmem:[%s8 + $0x18] sm:$0xf]
        %v1805 = vld [vmem:[%s8 + $0x1c] sm:$0xf]
        %v1806 = vld [vmem:[%s8 + $0x20] sm:$0xf]
        %v1807 = vld [vmem:[%s8 + $0x24] sm:$0xf]
        %v1808 = vld [vmem:[%s8 + $0x28] sm:$0xf]
        %v1809 = vld [vmem:[%s8 + $0x2c] sm:$0xf]
        %v1810 = vld [vmem:[%s8 + $0x30] sm:$0xf]
        %v1811 = vld [vmem:[%s8 + $0x34] sm:$0xf]
        %v1812 = vld [vmem:[%s8 + $0x38] sm:$0xf]
        %v1813 = vld [vmem:[%s8 + $0x3c] sm:$0xf]
        %v1814 = vld [vmem:[%s8 + $0x40] sm:$0xf]
        %v1815 = vld [vmem:[%s8 + $0x44] sm:$0xf]
        %v1816 = vld [vmem:[%s8 + $0x48] sm:$0xf]
        %v1817 = vld [vmem:[%s8 + $0x4c] sm:$0xf]
        %v1818 = vld [vmem:[%s8 + $0x50] sm:$0xf]
        %v1819 = vld [vmem:[%s8 + $0x54] sm:$0xf]
        %v1820 = vld [vmem:[%s8 + $0x58] sm:$0xf]
        %v1821 = vld [vmem:[%s8 + $0x5c] sm:$0xf]
        %v1822 = vld [vmem:[%s8 + $0x60] sm:$0xf]
        %v1823 = vld [vmem:[%s8 + $0x64] sm:$0xf]
        %v1824 = vld [vmem:[%s8 + $0x68] sm:$0xf]
        %v1825 = vld [vmem:[%s8 + $0x6c] sm:$0xf]
        %v1826 = vld [vmem:[%s8 + $0x70] sm:$0xf]
        %v1827 = vld [vmem:[%s8 + $0x74] sm:$0xf]
        %v1828 = vld [vmem:[%s8 + $0x78] sm:$0xf]
        %v1829 = vld [vmem:[%s8 + $0x7c] sm:$0xf]
        %v1830 = vld [vmem:[%s9] sm:$0x1]
        %v1832 = vlaneseq
        %v1833 = vshrl.u32 %v1832, 7
        %v1834 = vsub.s32 0, %v1833
        %v1835 = vrot.slane %v1830, %v1834
        %v1869 = vunpack.c.l.b16 %v1798
        %v1870 = vunpack.c.l.b16 %v1799
        %v1871 = vunpack.c.l.b16 %v1800
        %v1872 = vunpack.c.l.b16 %v1801
        %v1873 = vunpack.c.l.b16 %v1802
        %v1874 = vunpack.c.l.b16 %v1803
        %v1875 = vunpack.c.l.b16 %v1804
        %v1876 = vunpack.c.l.b16 %v1805
        %v1877 = vunpack.c.l.b16 %v1806
        %v1878 = vunpack.c.l.b16 %v1807
        %v1879 = vunpack.c.l.b16 %v1808
        %v1880 = vunpack.c.l.b16 %v1809
        %v1881 = vunpack.c.l.b16 %v1810
        %v1882 = vunpack.c.l.b16 %v1811
        %v1883 = vunpack.c.l.b16 %v1812
        %v1884 = vunpack.c.l.b16 %v1813
        %v1885 = vunpack.c.l.b16 %v1814
        %v1886 = vunpack.c.l.b16 %v1815
        %v1887 = vunpack.c.l.b16 %v1816
        %v1888 = vunpack.c.l.b16 %v1817
        %v1889 = vunpack.c.l.b16 %v1818
        %v1890 = vunpack.c.l.b16 %v1819
        %v1891 = vunpack.c.l.b16 %v1820
        %v1892 = vunpack.c.l.b16 %v1821
        %v1893 = vunpack.c.l.b16 %v1822
        %v1894 = vunpack.c.l.b16 %v1823
        %v1895 = vunpack.c.l.b16 %v1824
        %v1896 = vunpack.c.l.b16 %v1825
        %v1897 = vunpack.c.l.b16 %v1826
        %v1898 = vunpack.c.l.b16 %v1827
        %v1899 = vunpack.c.l.b16 %v1828
        %v1900 = vunpack.c.l.b16 %v1829
        %v1901 = vpack.c.b16 %v1870, %v1869
        %v1902 = vpack.c.b16 %v1872, %v1871
        %v1903 = vpack.c.b16 %v1874, %v1873
        %v1904 = vpack.c.b16 %v1876, %v1875
        %v1905 = vpack.c.b16 %v1878, %v1877
        %v1906 = vpack.c.b16 %v1880, %v1879
        %v1907 = vpack.c.b16 %v1882, %v1881
        %v1908 = vpack.c.b16 %v1884, %v1883
        %v1909 = vpack.c.b16 %v1886, %v1885
        %v1910 = vpack.c.b16 %v1888, %v1887
        %v1911 = vpack.c.b16 %v1890, %v1889
        %v1912 = vpack.c.b16 %v1892, %v1891
        %v1913 = vpack.c.b16 %v1894, %v1893
        %v1914 = vpack.c.b16 %v1896, %v1895
        %v1915 = vpack.c.b16 %v1898, %v1897
        %v1916 = vpack.c.b16 %v1900, %v1899
        %1933 = vmatprep.subr.bf16.mxu0 0
        %1934 = vmatpush1.bf16.msra.mxu0 %v1901
        %1935 = vmatprep.subr.bf16.mxu0 0
        %1936 = vmatpush1.bf16.msra.mxu0 %v1902
        %1937 = vmatprep.subr.bf16.mxu0 0
        %1938 = vmatpush1.bf16.msra.mxu0 %v1903
        %1939 = vmatprep.subr.bf16.mxu0 0
        %1940 = vmatpush1.bf16.msra.mxu0 %v1904
        %1941 = vmatprep.subr.bf16.mxu0 0
        %1942 = vmatpush1.bf16.msra.mxu0 %v1905
        %1943 = vmatprep.subr.bf16.mxu0 0
        %1944 = vmatpush1.bf16.msra.mxu0 %v1906
        %1945 = vmatprep.subr.bf16.mxu0 0
        %1946 = vmatpush1.bf16.msra.mxu0 %v1907
        %1947 = vmatprep.subr.bf16.mxu0 0
        %1948 = vmatpush1.bf16.msra.mxu0 %v1908
        %1949 = vmatprep.subr.bf16.mxu0 0
        %1950 = vmatpush1.bf16.msra.mxu0 %v1909
        %1951 = vmatprep.subr.bf16.mxu0 0
        %1952 = vmatpush1.bf16.msra.mxu0 %v1910
        %1953 = vmatprep.subr.bf16.mxu0 0
        %1954 = vmatpush1.bf16.msra.mxu0 %v1911
        %1955 = vmatprep.subr.bf16.mxu0 0
        %1956 = vmatpush1.bf16.msra.mxu0 %v1912
        %1957 = vmatprep.subr.bf16.mxu0 0
        %1958 = vmatpush1.bf16.msra.mxu0 %v1913
        %1959 = vmatprep.subr.bf16.mxu0 0
        %1960 = vmatpush1.bf16.msra.mxu0 %v1914
        %1961 = vmatprep.subr.bf16.mxu0 0
        %1962 = vmatpush1.bf16.msra.mxu0 %v1915
        %1963 = vmatprep.subr.bf16.mxu0 0
        %1964 = vmatpush1.bf16.msra.mxu0 %v1916
        %1965 = vmatprep.mubr.bf16.mxu0 %v1783
        %1966 = vmatmul.mubr.bf16.gmra.mrb[0].mxu0 %v1782
        %v1967 = vpop.f32.mrb[0].mxu0
        %v1968 = vadd.f32 %v1835, %v1967
        %v1969 = vpop.f32.mrb[0].mxu0
        %v1970 = vpop.f32.mrb[0].mxu0
        %v1971 = vadd.f32 %v1835, %v1970
        %v1972 = vpop.f32.mrb[0].mxu0
        %1973 = vmatprep.mubr.bf16.mxu0 %v1785
        %1974 = vmatmul.mubr.bf16.gmra.mrb[0].mxu0 %v1784
        %v1975 = vpop.f32.mrb[0].mxu0
        %v1976 = vadd.f32 %v1835, %v1975
        %v1977 = vpop.f32.mrb[0].mxu0
        %v1978 = vpop.f32.mrb[0].mxu0
        %v1979 = vadd.f32 %v1835, %v1978
        %v1980 = vpop.f32.mrb[0].mxu0
        %1981 = vmatprep.mubr.bf16.mxu0 %v1787
        %1982 = vmatmul.mubr.bf16.gmra.mrb[0].mxu0 %v1786
        %v1983 = vpop.f32.mrb[0].mxu0
        %v1984 = vadd.f32 %v1835, %v1983
        %v1985 = vpop.f32.mrb[0].mxu0
        %v1986 = vpop.f32.mrb[0].mxu0
        %v1987 = vadd.f32 %v1835, %v1986
        %v1988 = vpop.f32.mrb[0].mxu0
        %1989 = vmatprep.mubr.bf16.mxu0 %v1789
        %1990 = vmatmul.mubr.bf16.gmra.mrb[0].mxu0 %v1788
        %v1991 = vpop.f32.mrb[0].mxu0
        %v1992 = vadd.f32 %v1835, %v1991
        %v1993 = vpop.f32.mrb[0].mxu0
        %v1994 = vpop.f32.mrb[0].mxu0
        %v1995 = vadd.f32 %v1835, %v1994
        %v1996 = vpop.f32.mrb[0].mxu0
        %1997 = vmatprep.mubr.bf16.mxu0 %v1791
        %1998 = vmatmul.mubr.bf16.gmra.mrb[0].mxu0 %v1790
        %v1999 = vpop.f32.mrb[0].mxu0
        %v2000 = vadd.f32 %v1835, %v1999
        %v2001 = vpop.f32.mrb[0].mxu0
        %v2002 = vpop.f32.mrb[0].mxu0
        %v2003 = vadd.f32 %v1835, %v2002
        %v2004 = vpop.f32.mrb[0].mxu0
        %2005 = vmatprep.mubr.bf16.mxu0 %v1793
        %2006 = vmatmul.mubr.bf16.gmra.mrb[0].mxu0 %v1792
        %v2007 = vpop.f32.mrb[0].mxu0
        %v2008 = vadd.f32 %v1835, %v2007
        %v2009 = vpop.f32.mrb[0].mxu0
        %v2010 = vpop.f32.mrb[0].mxu0
        %v2011 = vadd.f32 %v1835, %v2010
        %v2012 = vpop.f32.mrb[0].mxu0
        %2013 = vmatprep.mubr.bf16.mxu0 %v1795
        %2014 = vmatmul.mubr.bf16.gmra.mrb[0].mxu0 %v1794
        %v2015 = vpop.f32.mrb[0].mxu0
        %v2016 = vadd.f32 %v1835, %v2015
        %v2017 = vpop.f32.mrb[0].mxu0
        %v2018 = vpop.f32.mrb[0].mxu0
        %v2019 = vadd.f32 %v1835, %v2018
        %v2020 = vpop.f32.mrb[0].mxu0
        %2021 = vmatprep.mubr.bf16.mxu0 %v1797
        %2022 = vmatmul.mubr.bf16.gmra.mrb[0].mxu0 %v1796
        %v2023 = vpop.f32.mrb[0].mxu0
        %v2024 = vadd.f32 %v1835, %v2023
        %v2025 = vpop.f32.mrb[0].mxu0
        %v2026 = vpop.f32.mrb[0].mxu0
        %v2027 = vadd.f32 %v1835, %v2026
        %v2028 = vpop.f32.mrb[0].mxu0
        %2029 = vdwg.mxu0
        %v2030 = vadd.f32 %v1968, %v1505
        %v2031 = vadd.f32 %v1971, %v1506
        %v2032 = vadd.f32 %v1976, %v1507
        %v2033 = vadd.f32 %v1979, %v1508
        %v2034 = vadd.f32 %v1984, %v1509
        %v2035 = vadd.f32 %v1987, %v1510
        %v2036 = vadd.f32 %v1992, %v1511
        %v2037 = vadd.f32 %v1995, %v1512
        %v2038 = vadd.f32 %v2000, %v1513
        %v2039 = vadd.f32 %v2003, %v1514
        %v2040 = vadd.f32 %v2008, %v1515
        %v2041 = vadd.f32 %v2011, %v1516
        %v2042 = vadd.f32 %v2016, %v1517
        %v2043 = vadd.f32 %v2019, %v1518
        %v2044 = vadd.f32 %v2024, %v1519
        %v2045 = vadd.f32 %v2027, %v1520
        %2046 = vadd.xlane.f32.xlu0 %v2030
        %v2047 = vpop.xlane.xlu0 %2046
        %2048 = vadd.xlane.f32.xlu0 %v2031
        %v2049 = vpop.xlane.xlu0 %2048
        %2050 = vadd.xlane.f32.xlu0 %v2032
        %v2051 = vpop.xlane.xlu0 %2050
        %2052 = vadd.xlane.f32.xlu0 %v2033
        %v2053 = vpop.xlane.xlu0 %2052
        %2054 = vadd.xlane.f32.xlu0 %v2034
        %v2055 = vpop.xlane.xlu0 %2054
        %2056 = vadd.xlane.f32.xlu0 %v2035
        %v2057 = vpop.xlane.xlu0 %2056
        %2058 = vadd.xlane.f32.xlu0 %v2036
        %v2059 = vpop.xlane.xlu0 %2058
        %2060 = vadd.xlane.f32.xlu0 %v2037
        %v2061 = vpop.xlane.xlu0 %2060
        %2062 = vadd.xlane.f32.xlu0 %v2038
        %v2063 = vpop.xlane.xlu0 %2062
        %2064 = vadd.xlane.f32.xlu0 %v2039
        %v2065 = vpop.xlane.xlu0 %2064
        %2066 = vadd.xlane.f32.xlu0 %v2040
        %v2067 = vpop.xlane.xlu0 %2066
        %2068 = vadd.xlane.f32.xlu0 %v2041
        %v2069 = vpop.xlane.xlu0 %2068
        %2070 = vadd.xlane.f32.xlu0 %v2042
        %v2071 = vpop.xlane.xlu0 %2070
        %2072 = vadd.xlane.f32.xlu0 %v2043
        %v2073 = vpop.xlane.xlu0 %2072
        %2074 = vadd.xlane.f32.xlu0 %v2044
        %v2075 = vpop.xlane.xlu0 %2074
        %2076 = vadd.xlane.f32.xlu0 %v2045
        %v2077 = vpop.xlane.xlu0 %2076
        %v2078 = vmul.f32 %v2047, %v1332
        %v2079 = vmul.f32 %v2049, %v1332
        %v2080 = vmul.f32 %v2051, %v1332
        %v2081 = vmul.f32 %v2053, %v1332
        %v2082 = vmul.f32 %v2055, %v1332
        %v2083 = vmul.f32 %v2057, %v1332
        %v2084 = vmul.f32 %v2059, %v1332
        %v2085 = vmul.f32 %v2061, %v1332
        %v2086 = vmul.f32 %v2063, %v1332
        %v2087 = vmul.f32 %v2065, %v1332
        %v2088 = vmul.f32 %v2067, %v1332
        %v2089 = vmul.f32 %v2069, %v1332
        %v2090 = vmul.f32 %v2071, %v1332
        %v2091 = vmul.f32 %v2073, %v1332
        %v2092 = vmul.f32 %v2075, %v1332
        %v2093 = vmul.f32 %v2077, %v1332
        %v2094 = vsub.f32 %v2030, %v2078
        %v2095 = vsub.f32 %v2031, %v2079
        %v2096 = vsub.f32 %v2032, %v2080
        %v2097 = vsub.f32 %v2033, %v2081
        %v2098 = vsub.f32 %v2034, %v2082
        %v2099 = vsub.f32 %v2035, %v2083
        %v2100 = vsub.f32 %v2036, %v2084
        %v2101 = vsub.f32 %v2037, %v2085
        %v2102 = vsub.f32 %v2038, %v2086
        %v2103 = vsub.f32 %v2039, %v2087
        %v2104 = vsub.f32 %v2040, %v2088
        %v2105 = vsub.f32 %v2041, %v2089
        %v2106 = vsub.f32 %v2042, %v2090
        %v2107 = vsub.f32 %v2043, %v2091
        %v2108 = vsub.f32 %v2044, %v2092
        %v2109 = vsub.f32 %v2045, %v2093
        %v2110 = vmul.f32 %v2094, %v2094
        %v2111 = vmul.f32 %v2095, %v2095
        %v2112 = vmul.f32 %v2096, %v2096
        %v2113 = vmul.f32 %v2097, %v2097
        %v2114 = vmul.f32 %v2098, %v2098
        %v2115 = vmul.f32 %v2099, %v2099
        %v2116 = vmul.f32 %v2100, %v2100
        %v2117 = vmul.f32 %v2101, %v2101
        %v2118 = vmul.f32 %v2102, %v2102
        %v2119 = vmul.f32 %v2103, %v2103
        %v2120 = vmul.f32 %v2104, %v2104
        %v2121 = vmul.f32 %v2105, %v2105
        %v2122 = vmul.f32 %v2106, %v2106
        %v2123 = vmul.f32 %v2107, %v2107
        %v2124 = vmul.f32 %v2108, %v2108
        %v2125 = vmul.f32 %v2109, %v2109
        %2126 = vadd.xlane.f32.xlu0 %v2110
        %v2127 = vpop.xlane.xlu0 %2126
        %2128 = vadd.xlane.f32.xlu0 %v2111
        %v2129 = vpop.xlane.xlu0 %2128
        %2130 = vadd.xlane.f32.xlu0 %v2112
        %v2131 = vpop.xlane.xlu0 %2130
        %2132 = vadd.xlane.f32.xlu0 %v2113
        %v2133 = vpop.xlane.xlu0 %2132
        %2134 = vadd.xlane.f32.xlu0 %v2114
        %v2135 = vpop.xlane.xlu0 %2134
        %2136 = vadd.xlane.f32.xlu0 %v2115
        %v2137 = vpop.xlane.xlu0 %2136
        %2138 = vadd.xlane.f32.xlu0 %v2116
        %v2139 = vpop.xlane.xlu0 %2138
        %2140 = vadd.xlane.f32.xlu0 %v2117
        %v2141 = vpop.xlane.xlu0 %2140
        %2142 = vadd.xlane.f32.xlu0 %v2118
        %v2143 = vpop.xlane.xlu0 %2142
        %2144 = vadd.xlane.f32.xlu0 %v2119
        %v2145 = vpop.xlane.xlu0 %2144
        %2146 = vadd.xlane.f32.xlu0 %v2120
        %v2147 = vpop.xlane.xlu0 %2146
        %2148 = vadd.xlane.f32.xlu0 %v2121
        %v2149 = vpop.xlane.xlu0 %2148
        %2150 = vadd.xlane.f32.xlu0 %v2122
        %v2151 = vpop.xlane.xlu0 %2150
        %2152 = vadd.xlane.f32.xlu0 %v2123
        %v2153 = vpop.xlane.xlu0 %2152
        %2154 = vadd.xlane.f32.xlu0 %v2124
        %v2155 = vpop.xlane.xlu0 %2154
        %2156 = vadd.xlane.f32.xlu0 %v2125
        %v2157 = vpop.xlane.xlu0 %2156
        %v2158 = vmul.f32 %v2127, %v1332
        %v2159 = vmul.f32 %v2129, %v1332
        %v2160 = vmul.f32 %v2131, %v1332
        %v2161 = vmul.f32 %v2133, %v1332
        %v2162 = vmul.f32 %v2135, %v1332
        %v2163 = vmul.f32 %v2137, %v1332
        %v2164 = vmul.f32 %v2139, %v1332
        %v2165 = vmul.f32 %v2141, %v1332
        %v2166 = vmul.f32 %v2143, %v1332
        %v2167 = vmul.f32 %v2145, %v1332
        %v2168 = vmul.f32 %v2147, %v1332
        %v2169 = vmul.f32 %v2149, %v1332
        %v2170 = vmul.f32 %v2151, %v1332
        %v2171 = vmul.f32 %v2153, %v1332
        %v2172 = vmul.f32 %v2155, %v1332
        %v2173 = vmul.f32 %v2157, %v1332
        %v2174 = vadd.f32 %v2158, 1e-05
        %v2175 = vadd.f32 %v2159, 1e-05
        %v2176 = vadd.f32 %v2160, 1e-05
        %v2177 = vadd.f32 %v2161, 1e-05
        %v2178 = vadd.f32 %v2162, 1e-05
        %v2179 = vadd.f32 %v2163, 1e-05
        %v2180 = vadd.f32 %v2164, 1e-05
        %v2181 = vadd.f32 %v2165, 1e-05
        %v2182 = vadd.f32 %v2166, 1e-05
        %v2183 = vadd.f32 %v2167, 1e-05
        %v2184 = vadd.f32 %v2168, 1e-05
        %v2185 = vadd.f32 %v2169, 1e-05
        %v2186 = vadd.f32 %v2170, 1e-05
        %v2187 = vadd.f32 %v2171, 1e-05
        %v2188 = vadd.f32 %v2172, 1e-05
        %v2189 = vadd.f32 %v2173, 1e-05
        %v2190 = vrsqrt.pop %v2174
        %v2191 = vrsqrt.pop %v2175
        %v2192 = vrsqrt.pop %v2176
        %v2193 = vrsqrt.pop %v2177
        %v2194 = vrsqrt.pop %v2178
        %v2195 = vrsqrt.pop %v2179
        %v2196 = vrsqrt.pop %v2180
        %v2197 = vrsqrt.pop %v2181
        %v2198 = vrsqrt.pop %v2182
        %v2199 = vrsqrt.pop %v2183
        %v2200 = vrsqrt.pop %v2184
        %v2201 = vrsqrt.pop %v2185
        %v2202 = vrsqrt.pop %v2186
        %v2203 = vrsqrt.pop %v2187
        %v2204 = vrsqrt.pop %v2188
        %v2205 = vrsqrt.pop %v2189
        %v2206 = vmul.f32 %v2094, %v2190
        %v2207 = vmul.f32 %v2095, %v2191
        %v2208 = vmul.f32 %v2096, %v2192
        %v2209 = vmul.f32 %v2097, %v2193
        %v2210 = vmul.f32 %v2098, %v2194
        %v2211 = vmul.f32 %v2099, %v2195
        %v2212 = vmul.f32 %v2100, %v2196
        %v2213 = vmul.f32 %v2101, %v2197
        %v2214 = vmul.f32 %v2102, %v2198
        %v2215 = vmul.f32 %v2103, %v2199
        %v2216 = vmul.f32 %v2104, %v2200
        %v2217 = vmul.f32 %v2105, %v2201
        %v2218 = vmul.f32 %v2106, %v2202
        %v2219 = vmul.f32 %v2107, %v2203
        %v2220 = vmul.f32 %v2108, %v2204
        %v2221 = vmul.f32 %v2109, %v2205
        %v2222 = vmul.f32 %v2206, %v1481
        %v2223 = vmul.f32 %v2207, %v1481
        %v2224 = vmul.f32 %v2208, %v1481
        %v2225 = vmul.f32 %v2209, %v1481
        %v2226 = vmul.f32 %v2210, %v1481
        %v2227 = vmul.f32 %v2211, %v1481
        %v2228 = vmul.f32 %v2212, %v1481
        %v2229 = vmul.f32 %v2213, %v1481
        %v2230 = vmul.f32 %v2214, %v1481
        %v2231 = vmul.f32 %v2215, %v1481
        %v2232 = vmul.f32 %v2216, %v1481
        %v2233 = vmul.f32 %v2217, %v1481
        %v2234 = vmul.f32 %v2218, %v1481
        %v2235 = vmul.f32 %v2219, %v1481
        %v2236 = vmul.f32 %v2220, %v1481
        %v2237 = vmul.f32 %v2221, %v1481
        %v2238 = vadd.f32 %v2222, %v1503
        %v2239 = vadd.f32 %v2223, %v1503
        %v2240 = vadd.f32 %v2224, %v1503
        %v2241 = vadd.f32 %v2225, %v1503
        %v2242 = vadd.f32 %v2226, %v1503
        %v2243 = vadd.f32 %v2227, %v1503
        %v2244 = vadd.f32 %v2228, %v1503
        %v2245 = vadd.f32 %v2229, %v1503
        %v2246 = vadd.f32 %v2230, %v1503
        %v2247 = vadd.f32 %v2231, %v1503
        %v2248 = vadd.f32 %v2232, %v1503
        %v2249 = vadd.f32 %v2233, %v1503
        %v2250 = vadd.f32 %v2234, %v1503
        %v2251 = vadd.f32 %v2235, %v1503
        %v2252 = vadd.f32 %v2236, %v1503
        %v2253 = vadd.f32 %v2237, %v1503
        %v2254 = vld [vmem:[#allocation2] sm:$0x1]
        %v2255 = vadd.f32 %v2238, %v2239
        %v2256 = vadd.f32 %v2255, %v2240
        %v2257 = vadd.f32 %v2256, %v2241
        %v2258 = vadd.f32 %v2257, %v2242
        %v2259 = vadd.f32 %v2258, %v2243
        %v2260 = vadd.f32 %v2259, %v2244
        %v2261 = vadd.f32 %v2260, %v2245
        %v2262 = vadd.f32 %v2261, %v2246
        %v2263 = vadd.f32 %v2262, %v2247
        %v2264 = vadd.f32 %v2263, %v2248
        %v2265 = vadd.f32 %v2264, %v2249
        %v2266 = vadd.f32 %v2265, %v2250
        %v2267 = vadd.f32 %v2266, %v2251
        %v2268 = vadd.f32 %v2267, %v2252
        %v2269 = vadd.f32 %v2268, %v2253
        %v2270 = vrot.slane %v2269, 4
        %v2271 = vadd.f32 %v2269, %v2270
        %v2272 = vrot.slane %v2271, 2
        %v2273 = vadd.f32 %v2271, %v2272
        %v2274 = vrot.slane %v2273, 1
        %v2275 = vadd.f32 %v2273, %v2274
        %v2276 = vadd.f32 %v2254, %v2275
        %2277 = vst [vmem:[#allocation2] sm:$0x1] %v2276
        // Predicated region
        $region73: #{gcn2_forward.11} parent=67 // pred_check
          %p2278 = pneg %p294
        $region74: #{gcn2_forward.11} parent=67 // pred_check_branch
          %2280 = sbr.rel (%p2278) target = $region76
        $region75: #{gcn2_forward.11} parent=67 // pred_region
          %s2282 = ssub.s32 16, 16
          %2283 = vsyncadd [#allocation3], %s2282
          %s2285 = sshll.u32 [#allocation2], 4
          %s2286 = int_to_ptr.vmem [resolvable:$true] %s2285
          %2288 = dma.vmem_to_hbm [thread:$0]  %s2286, 16, %s12, [#allocation3]
        $region76: #{gcn2_forward.11} parent=67 // pred_fallthru
          _
        // Predicated region
        $region77: #{gcn2_forward.11} parent=67 // pred_check
          %p2289 = pneg %p294
        $region78: #{gcn2_forward.11} parent=67 // pred_check_branch
          %2291 = sbr.rel (%p2289) target = $region80
        $region79: #{gcn2_forward.11} parent=67 // pred_region
          %2292 = dma.done [#allocation3], 16
        $region80: #{gcn2_forward.11} parent=67 // pred_fallthru
          _
      $region68: #{gcn2_forward.11} parent=5 // pred_fallthru
        _
      %p2293 = scmp.le.s32.totalorder 2, %s19
      // Predicated region
      $region81: #{gcn2_forward.11} parent=5 // pred_check
        %p2294 = pneg %p2293
      $region82: #{gcn2_forward.11} parent=5 // pred_check_branch
        %2296 = sbr.rel (%p2294) target = $region84
      $region83: #{gcn2_forward.11} parent=5 // pred_region
        %s2297 = ssub.s32 %s19, 2
      $region84: #{gcn2_forward.11} parent=5 // pred_fallthru
        _
    $region6: #{gcn2_forward.11} parent=1 // loop_footer
      %s23 = sadd.s32 1, %s19
    $region7: #{gcn2_forward.11} parent=1 // loop_footer_branch
      %18 = sbr.rel target = $region3
    $region8: #{gcn2_forward.11} parent=1 // loop_exit
      _
    %2298 = vsyncpa [#allocation3], 1
    %s2299 = scalar_lea.sflag [#allocation3], 1
    %2300 = vsyncpa %s2299, 1

</llo_original>
